<compile_context>
chip_gen: v5e
topology: v5e:2x2
jax: 0.10.0
libtpu: 0.0.40
codegen_flags: <defaults>
</compile_context>

<pallas_src>
import jax
import jax.numpy as jnp
from jax import lax
from jax.experimental import pallas as pl
from jax.experimental.pallas import tpu as pltpu


def _round_up(x, m):
    return (x + m - 1) // m * m


def _tpu_vmem_capacity_bytes():
    """Per-TensorCore VMEM capacity; conservative 64 MiB (v7x) if unknown."""
    try:
        info = pltpu.get_tpu_info()
        cap = getattr(info, "vmem_capacity_bytes", None)
        if cap:
            return int(cap)
    except Exception:
        pass
    return 64 * 1024 * 1024


def decode_psp_kernel(x_ref, w3_ref, scale_ref, shift_ref, wc_ref, bc_ref,
                      o_ref, acc_ref):
    # x_ref    : (1, 1, TH+2, WP, Ck)    bf16 zero-padded halo tile, one Cin chunk
    # w3_ref   : (3, 3, Ck, Cmid)        bf16 3x3 conv weights (HWIO), one chunk
    # scale_ref: (1, Cmid)   f32 folded BN scale = gamma / sqrt(var + eps)
    # shift_ref: (1, Cmid)   f32 folded BN shift = beta - mean * scale
    # wc_ref   : (Cmid, NCLS_PAD)        bf16 1x1 classification weights (lane-padded)
    # bc_ref   : (1, NCLS_PAD)           f32 classification bias (lane-padded)
    # o_ref    : (1, 1, TH, W, NCLS_PAD) bf16 output tile
    # acc_ref  : (TH, W, Cmid)           f32 accumulator, persists across k steps
    k = pl.program_id(2)
    th = o_ref.shape[2]
    w = o_ref.shape[3]
    wp = x_ref.shape[3]
    ck = x_ref.shape[4]
    cmid = w3_ref.shape[3]
    ncls_pad = wc_ref.shape[1]

    @pl.when(k == 0)
    def _init():
        acc_ref[...] = jnp.zeros_like(acc_ref)

    # 3x3 conv over this Cin chunk.  For each kx (output-column alignment) the
    # three ky taps are summed as ONE chained dot expression, then a single
    # shifted accumulator read-modify-write is performed: 3 acc RMWs per
    # k-step instead of 9 (the vst slot was the binding resource), and the
    # chained same-alignment dots can accumulate in-place in the MRB on v7x.
    # The kx shift is applied to the narrow Cmid-wide result, never the wide
    # Cin tile.  WP is a multiple of 8, so the row reshapes are layout-free.
    rows = [x_ref[0, 0, ky:ky + th, :, :].reshape(th * wp, ck)
            for ky in range(3)]
    for kx in range(3):
        part = (jnp.dot(rows[0], w3_ref[0, kx],
                        preferred_element_type=jnp.float32)
                + jnp.dot(rows[1], w3_ref[1, kx],
                          preferred_element_type=jnp.float32)
                + jnp.dot(rows[2], w3_ref[2, kx],
                          preferred_element_type=jnp.float32))
        part = part.reshape(th, wp, cmid)
        acc_ref[...] += part[:, kx:kx + w, :]

    @pl.when(k == pl.num_programs(2) - 1)
    def _finalize():
        # Folded BatchNorm (inference) + ReLU.
        y = jnp.maximum(acc_ref[...] * scale_ref[...] + shift_ref[...], 0.0)
        # Dropout2d(p=0.1) is identity in eval mode.
        # TODO(synk): training-mode channel dropout (pltpu.prng_*) not implemented.
        # 1x1 classification conv (lane-padded n_classes) + bias.
        # NOTE: the (th,w,cmid)->(th*w,cmid) flatten is layout-free when
        # w % 8 == 0 (true for the demo W=16).
        # TODO(synk): for W not a multiple of 8 (production W=60), a rank-3
        # dot_general contracting the channel axis would avoid the relayout
        # copy here once Mosaic supports free-leading-dim dot_general.
        yb = y.astype(jnp.bfloat16).reshape(th * w, cmid)
        logits = jnp.dot(yb, wc_ref[...],
                         preferred_element_type=jnp.float32) + bc_ref[...]
        o_ref[...] = logits.reshape(1, 1, th, w, ncls_pad).astype(o_ref.dtype)


def decode_psp_feature(x_nchw, w3_oihw, bn_gamma, bn_beta, bn_mean, bn_var,
                       wc_oihw, bc, eps=1e-5, *, tile_h=None, ck=None):
    """NCHW in / NCHW out, matching the PyTorch module (eval mode)."""
    B, Cin, H, W = x_nchw.shape
    Cmid = w3_oihw.shape[0]
    ncls = wc_oihw.shape[0]

    # ---- generation-dependent tuning ---------------------------------------
    vmem_cap = _tpu_vmem_capacity_bytes()
    if vmem_cap >= 96 * 1024 * 1024:       # v5e / v6e: 128 MiB VMEM per TC
        ck_cap = 1024
        vmem_limit = 100 * 1024 * 1024
    else:                                  # v7x: 64 MiB VMEM per TC
        ck_cap = 512
        vmem_limit = 56 * 1024 * 1024
    vmem_limit = min(vmem_limit,
                     max(vmem_cap - 8 * 1024 * 1024, 32 * 1024 * 1024))

    # ---- tiling parameters --------------------------------------------------
    if tile_h is None:
        tile_h = H
        # v7x has 2 TensorCores per chip: keep >= 2 independent "parallel"
        # grid steps (B*nt >= 2).  vmem_cap < 96 MiB is used as a v7x proxy.
        if B == 1 and vmem_cap < 96 * 1024 * 1024 and H % 2 == 0:
            tile_h = H // 2
    tile_h = min(tile_h, H)
    assert H % tile_h == 0, "tile_h must divide H"
    nt = H // tile_h
    if ck is None:
        ck = min(Cin, ck_cap)
    if Cin % ck != 0 or (ck != Cin and ck % 128 != 0):
        ck = Cin                                     # fall back to no K-tiling
    kt = Cin // ck
    wp = _round_up(W + 2, 8)                         # sublane-friendly padded width
    ncls_pad = _round_up(max(ncls, 128), 128)        # lane-dense output channels

    # ---- parameter / layout prep (plain JAX glue) ---------------------------
    x_nhwc = jnp.transpose(x_nchw, (0, 2, 3, 1)).astype(jnp.bfloat16)
    xpad = jnp.pad(x_nhwc, ((0, 0), (1, 1), (1, wp - W - 1), (0, 0)))
    if nt == 1:
        # Default path: no halo-tile materialization, just a free reshape that
        # adds the (size-1) tile axis.
        x_tiles = xpad.reshape(B, 1, H + 2, wp, Cin)
    else:
        # TODO(synk): replace this halo materialization with manual overlapping
        # DMA (memory_space=pl.ANY + make_async_copy); it costs an extra HBM
        # round trip of the input.  Only taken when tile_h < H is requested.
        x_tiles = jnp.stack([xpad[:, t * tile_h:t * tile_h + tile_h + 2]
                             for t in range(nt)], axis=1)

    w3_hwio = jnp.transpose(w3_oihw, (2, 3, 1, 0)).astype(jnp.bfloat16)
    scale = (bn_gamma / jnp.sqrt(bn_var + eps)).astype(jnp.float32)
    shift = (bn_beta - bn_mean * scale).astype(jnp.float32)
    scale = scale.reshape(1, Cmid)
    shift = shift.reshape(1, Cmid)
    wc = jnp.transpose(wc_oihw[:, :, 0, 0], (1, 0))       # (Cmid, ncls)
    wc = jnp.pad(wc, ((0, 0), (0, ncls_pad - ncls))).astype(jnp.bfloat16)
    bcr = jnp.pad(bc.astype(jnp.float32),
                  (0, ncls_pad - ncls)).reshape(1, ncls_pad)

    flops = 2 * B * H * W * (9 * Cin * Cmid + Cmid * ncls_pad)
    bytes_accessed = (B * nt * (tile_h + 2) * wp * Cin * 2   # x tiles (bf16)
                      + B * nt * 9 * Cin * Cmid * 2          # w3 re-reads (bf16)
                      + B * H * W * ncls_pad * 2)            # output (bf16)

    out_tiles = pl.pallas_call(
        decode_psp_kernel,
        out_shape=jax.ShapeDtypeStruct((B, nt, tile_h, W, ncls_pad),
                                       jnp.bfloat16),
        grid_spec=pltpu.PrefetchScalarGridSpec(
            num_scalar_prefetch=0,
            grid=(B, nt, kt),
            in_specs=[
                pl.BlockSpec((1, 1, tile_h + 2, wp, ck),
                             lambda b, t, k: (b, t, 0, 0, k)),
                pl.BlockSpec((3, 3, ck, Cmid), lambda b, t, k: (0, 0, k, 0)),
                pl.BlockSpec((1, Cmid), lambda b, t, k: (0, 0)),
                pl.BlockSpec((1, Cmid), lambda b, t, k: (0, 0)),
                pl.BlockSpec((Cmid, ncls_pad), lambda b, t, k: (0, 0)),
                pl.BlockSpec((1, ncls_pad), lambda b, t, k: (0, 0)),
            ],
            out_specs=pl.BlockSpec((1, 1, tile_h, W, ncls_pad),
                                   lambda b, t, k: (b, t, 0, 0, 0)),
            scratch_shapes=[pltpu.VMEM((tile_h, W, Cmid), jnp.float32)],
        ),
        compiler_params=pltpu.CompilerParams(
            dimension_semantics=("parallel", "parallel", "arbitrary"),
            vmem_limit_bytes=int(vmem_limit)),
        cost_estimate=pl.CostEstimate(flops=int(flops), transcendentals=0,
                                      bytes_accessed=int(bytes_accessed)),
    )(x_tiles, w3_hwio, scale, shift, wc, bcr)

    out_nhwc = out_tiles.reshape(B, H, W, ncls_pad)[:, :, :, :ncls]
    return jnp.transpose(out_nhwc, (0, 3, 1, 2)).astype(x_nchw.dtype)


def reference_decode_psp(x, w3, gamma, beta, mean, var, wc, bc, eps=1e-5):
    """Pure-JAX f32 reference (NCHW, same as PyTorch)."""
    y = lax.conv_general_dilated(
        x, w3, window_strides=(1, 1), padding=((1, 1), (1, 1)),
        dimension_numbers=("NCHW", "OIHW", "NCHW"))
    scale = gamma / jnp.sqrt(var + eps)
    shift = beta - mean * scale
    y = y * scale[None, :, None, None] + shift[None, :, None, None]
    y = jnp.maximum(y, 0.0)
    out = lax.conv_general_dilated(
        y, wc, window_strides=(1, 1), padding=((0, 0), (0, 0)),
        dimension_numbers=("NCHW", "OIHW", "NCHW"))
    return out + bc[None, :, None, None]


if __name__ == "__main__":
    # Small shapes consistent with the forward (real module: Cin=4096, Cmid=512),
    # chosen so the Cin-chunk (kt=2) grid axis is exercised while keeping the
    # default, stack-free tile_h=H path; B=2 gives two "parallel" grid steps.
    B, Cin, H, W = 2, 256, 16, 16
    Cmid, n_classes = 128, 8

    key = jax.random.PRNGKey(0)
    ks = jax.random.split(key, 8)
    x = jax.random.normal(ks[0], (B, Cin, H, W), dtype=jnp.float32)

    # conv2DBatchNormRelu params: 3x3 conv (no bias) + BatchNorm2d.
    w3 = jax.random.normal(ks[1], (Cmid, Cin, 3, 3), dtype=jnp.float32) * 0.05
    bn_gamma = 1.0 + 0.1 * jax.random.normal(ks[2], (Cmid,), dtype=jnp.float32)
    bn_beta = 0.1 * jax.random.normal(ks[3], (Cmid,), dtype=jnp.float32)
    bn_mean = 0.1 * jax.random.normal(ks[4], (Cmid,), dtype=jnp.float32)
    bn_var = 0.5 + jnp.abs(jax.random.normal(ks[5], (Cmid,),
                                             dtype=jnp.float32)) * 0.1

    # classification: 1x1 conv with bias.
    wc = jax.random.normal(ks[6], (n_classes, Cmid, 1, 1),
                           dtype=jnp.float32) * 0.1
    bc = 0.1 * jax.random.normal(ks[7], (n_classes,), dtype=jnp.float32)

    out = decode_psp_feature(x, w3, bn_gamma, bn_beta, bn_mean, bn_var, wc, bc,
                             ck=128)
    out = jax.block_until_ready(out)

    ref = reference_decode_psp(x, w3, bn_gamma, bn_beta, bn_mean, bn_var, wc, bc)
    ref = jax.block_until_ready(ref)

    assert out.shape == (B, n_classes, H, W), out.shape
    # bf16 matmul inputs + bf16 output store (f32 accumulation) => relative bound.
    err = float(jnp.max(jnp.abs(out - ref)))
    mag = float(jnp.max(jnp.abs(ref))) + 1e-6
    assert err <= 5e-2 * mag, (err, mag)

    print("KERNEL_OK")
</pallas_src>

<mosaic_0001>
module attributes {stable_mosaic.version = 11 : i64} {
  func.func @decode_psp_kernel(%arg0: i32, %arg1: i32, %arg2: i32, %arg3: memref<1x1x18x24x128xbf16, #tpu.memory_space<vmem>>, %arg4: memref<3x3x128x128xbf16, #tpu.memory_space<vmem>>, %arg5: memref<1x128xf32, #tpu.memory_space<vmem>>, %arg6: memref<1x128xf32, #tpu.memory_space<vmem>>, %arg7: memref<128x128xbf16, #tpu.memory_space<vmem>>, %arg8: memref<1x128xf32, #tpu.memory_space<vmem>>, %arg9: memref<1x1x16x16x128xbf16, #tpu.memory_space<vmem>>, %arg10: memref<16x16x128xf32, #tpu.memory_space<vmem>>) attributes {dimension_semantics = [#tpu.dimension_semantics<parallel>, #tpu.dimension_semantics<parallel>, #tpu.dimension_semantics<arbitrary>], iteration_bounds = array<i64: 2, 1, 2>, scalar_prefetch = 0 : i64, scratch_operands = 1 : i64, tpu.core_type = #tpu.core_type<tc>, window_params = [{transform_indices = @transform_0, window_bounds = array<i64: 1, 1, 18, 24, 128>}, {transform_indices = @transform_1, window_bounds = array<i64: 3, 3, 128, 128>}, {pipeline_mode = #tpu.pipeline_mode<synchronous>, transform_indices = @transform_2, window_bounds = array<i64: 1, 128>}, {pipeline_mode = #tpu.pipeline_mode<synchronous>, transform_indices = @transform_3, window_bounds = array<i64: 1, 128>}, {pipeline_mode = #tpu.pipeline_mode<synchronous>, transform_indices = @transform_4, window_bounds = array<i64: 128, 128>}, {pipeline_mode = #tpu.pipeline_mode<synchronous>, transform_indices = @transform_5, window_bounds = array<i64: 1, 128>}, {transform_indices = @transform_6, window_bounds = array<i64: 1, 1, 16, 16, 128>}]} {
    %c0_i32 = arith.constant 0 : i32
    %0 = arith.cmpi eq, %arg2, %c0_i32 : i32
    %1 = arith.extui %0 : i1 to i32
    %c0_i32_0 = arith.constant 0 : i32
    %2 = arith.cmpi ne, %1, %c0_i32_0 : i32
    scf.if %2 {
      %cst_76 = arith.constant 0.000000e+00 : f32
      %63 = vector.broadcast %cst_76 : f32 to vector<16x16x128xf32>
      %c0_77 = arith.constant 0 : index
      %c0_78 = arith.constant 0 : index
      %c0_79 = arith.constant 0 : index
      %64 = vector.load %arg10[%c0_77, %c0_78, %c0_79] : memref<16x16x128xf32, #tpu.memory_space<vmem>>, vector<16x16x128xf32>
      tpu.vector_store %arg10[%c0_77, %c0_78, %c0_79], %63 {strides = array<i32>} : memref<16x16x128xf32, #tpu.memory_space<vmem>>, vector<16x16x128xf32>,
    } else {
    }
    %c0 = arith.constant 0 : index
    %c0_1 = arith.constant 0 : index
    %c0_2 = arith.constant 0 : index
    %c0_3 = arith.constant 0 : index
    %c0_4 = arith.constant 0 : index
    %3 = vector.load %arg3[%c0, %c0_1, %c0_2, %c0_3, %c0_4] : memref<1x1x18x24x128xbf16, #tpu.memory_space<vmem>>, vector<1x1x16x24x128xbf16>
    %4 = vector.shape_cast %3 : vector<1x1x16x24x128xbf16> to vector<16x24x128xbf16>
    %5 = vector.shape_cast %4 : vector<16x24x128xbf16> to vector<384x128xbf16>
    %c0_5 = arith.constant 0 : index
    %c0_6 = arith.constant 0 : index
    %c1 = arith.constant 1 : index
    %c0_7 = arith.constant 0 : index
    %c0_8 = arith.constant 0 : index
    %6 = vector.load %arg3[%c0_5, %c0_6, %c1, %c0_7, %c0_8] : memref<1x1x18x24x128xbf16, #tpu.memory_space<vmem>>, vector<1x1x16x24x128xbf16>
    %7 = vector.shape_cast %6 : vector<1x1x16x24x128xbf16> to vector<16x24x128xbf16>
    %8 = vector.shape_cast %7 : vector<16x24x128xbf16> to vector<384x128xbf16>
    %c0_9 = arith.constant 0 : index
    %c0_10 = arith.constant 0 : index
    %c2 = arith.constant 2 : index
    %c0_11 = arith.constant 0 : index
    %c0_12 = arith.constant 0 : index
    %9 = vector.load %arg3[%c0_9, %c0_10, %c2, %c0_11, %c0_12] : memref<1x1x18x24x128xbf16, #tpu.memory_space<vmem>>, vector<1x1x16x24x128xbf16>
    %10 = vector.shape_cast %9 : vector<1x1x16x24x128xbf16> to vector<16x24x128xbf16>
    %11 = vector.shape_cast %10 : vector<16x24x128xbf16> to vector<384x128xbf16>
    %c0_13 = arith.constant 0 : index
    %c0_14 = arith.constant 0 : index
    %c0_15 = arith.constant 0 : index
    %c0_16 = arith.constant 0 : index
    %12 = vector.load %arg4[%c0_13, %c0_14, %c0_15, %c0_16] : memref<3x3x128x128xbf16, #tpu.memory_space<vmem>>, vector<1x1x128x128xbf16>
    %13 = vector.shape_cast %12 : vector<1x1x128x128xbf16> to vector<128x128xbf16>
    %cst = arith.constant dense<0.000000e+00> : vector<384x128xf32>
    %14 = tpu.matmul %5, %13, %cst {dimension_numbers = #tpu.dot_dimension_numbers<[1], [0], [0], [1], [0, 0, 1, 1], [], []>} : vector<384x128xbf16>, vector<128x128xbf16>, vector<384x128xf32> -> vector<384x128xf32>
    %c1_17 = arith.constant 1 : index
    %c0_18 = arith.constant 0 : index
    %c0_19 = arith.constant 0 : index
    %c0_20 = arith.constant 0 : index
    %15 = vector.load %arg4[%c1_17, %c0_18, %c0_19, %c0_20] : memref<3x3x128x128xbf16, #tpu.memory_space<vmem>>, vector<1x1x128x128xbf16>
    %16 = vector.shape_cast %15 : vector<1x1x128x128xbf16> to vector<128x128xbf16>
    %cst_21 = arith.constant dense<0.000000e+00> : vector<384x128xf32>
    %17 = tpu.matmul %8, %16, %cst_21 {dimension_numbers = #tpu.dot_dimension_numbers<[1], [0], [0], [1], [0, 0, 1, 1], [], []>} : vector<384x128xbf16>, vector<128x128xbf16>, vector<384x128xf32> -> vector<384x128xf32>
    %18 = arith.addf %14, %17 : vector<384x128xf32>
    %c2_22 = arith.constant 2 : index
    %c0_23 = arith.constant 0 : index
    %c0_24 = arith.constant 0 : index
    %c0_25 = arith.constant 0 : index
    %19 = vector.load %arg4[%c2_22, %c0_23, %c0_24, %c0_25] : memref<3x3x128x128xbf16, #tpu.memory_space<vmem>>, vector<1x1x128x128xbf16>
    %20 = vector.shape_cast %19 : vector<1x1x128x128xbf16> to vector<128x128xbf16>
    %cst_26 = arith.constant dense<0.000000e+00> : vector<384x128xf32>
    %21 = tpu.matmul %11, %20, %cst_26 {dimension_numbers = #tpu.dot_dimension_numbers<[1], [0], [0], [1], [0, 0, 1, 1], [], []>} : vector<384x128xbf16>, vector<128x128xbf16>, vector<384x128xf32> -> vector<384x128xf32>
    %22 = arith.addf %18, %21 : vector<384x128xf32>
    %23 = vector.shape_cast %22 : vector<384x128xf32> to vector<16x24x128xf32>
    %c0_27 = arith.constant 0 : index
    %c0_28 = arith.constant 0 : index
    %c0_29 = arith.constant 0 : index
    %24 = vector.load %arg10[%c0_27, %c0_28, %c0_29] : memref<16x16x128xf32, #tpu.memory_space<vmem>>, vector<16x16x128xf32>
    %25 = vector.extract_strided_slice %23 {offsets = [0, 0, 0], sizes = [16, 16, 128], strides = [1, 1, 1]} : vector<16x24x128xf32> to vector<16x16x128xf32>
    %26 = arith.addf %24, %25 : vector<16x16x128xf32>
    %c0_30 = arith.constant 0 : index
    %c0_31 = arith.constant 0 : index
    %c0_32 = arith.constant 0 : index
    %27 = vector.load %arg10[%c0_30, %c0_31, %c0_32] : memref<16x16x128xf32, #tpu.memory_space<vmem>>, vector<16x16x128xf32>
    tpu.vector_store %arg10[%c0_30, %c0_31, %c0_32], %26 {strides = array<i32>} : memref<16x16x128xf32, #tpu.memory_space<vmem>>, vector<16x16x128xf32>,
    %c0_33 = arith.constant 0 : index
    %c1_34 = arith.constant 1 : index
    %c0_35 = arith.constant 0 : index
    %c0_36 = arith.constant 0 : index
    %28 = vector.load %arg4[%c0_33, %c1_34, %c0_35, %c0_36] : memref<3x3x128x128xbf16, #tpu.memory_space<vmem>>, vector<1x1x128x128xbf16>
    %29 = vector.shape_cast %28 : vector<1x1x128x128xbf16> to vector<128x128xbf16>
    %cst_37 = arith.constant dense<0.000000e+00> : vector<384x128xf32>
    %30 = tpu.matmul %5, %29, %cst_37 {dimension_numbers = #tpu.dot_dimension_numbers<[1], [0], [0], [1], [0, 0, 1, 1], [], []>} : vector<384x128xbf16>, vector<128x128xbf16>, vector<384x128xf32> -> vector<384x128xf32>
    %c1_38 = arith.constant 1 : index
    %c1_39 = arith.constant 1 : index
    %c0_40 = arith.constant 0 : index
    %c0_41 = arith.constant 0 : index
    %31 = vector.load %arg4[%c1_38, %c1_39, %c0_40, %c0_41] : memref<3x3x128x128xbf16, #tpu.memory_space<vmem>>, vector<1x1x128x128xbf16>
    %32 = vector.shape_cast %31 : vector<1x1x128x128xbf16> to vector<128x128xbf16>
    %cst_42 = arith.constant dense<0.000000e+00> : vector<384x128xf32>
    %33 = tpu.matmul %8, %32, %cst_42 {dimension_numbers = #tpu.dot_dimension_numbers<[1], [0], [0], [1], [0, 0, 1, 1], [], []>} : vector<384x128xbf16>, vector<128x128xbf16>, vector<384x128xf32> -> vector<384x128xf32>
    %34 = arith.addf %30, %33 : vector<384x128xf32>
    %c2_43 = arith.constant 2 : index
    %c1_44 = arith.constant 1 : index
    %c0_45 = arith.constant 0 : index
    %c0_46 = arith.constant 0 : index
    %35 = vector.load %arg4[%c2_43, %c1_44, %c0_45, %c0_46] : memref<3x3x128x128xbf16, #tpu.memory_space<vmem>>, vector<1x1x128x128xbf16>
    %36 = vector.shape_cast %35 : vector<1x1x128x128xbf16> to vector<128x128xbf16>
    %cst_47 = arith.constant dense<0.000000e+00> : vector<384x128xf32>
    %37 = tpu.matmul %11, %36, %cst_47 {dimension_numbers = #tpu.dot_dimension_numbers<[1], [0], [0], [1], [0, 0, 1, 1], [], []>} : vector<384x128xbf16>, vector<128x128xbf16>, vector<384x128xf32> -> vector<384x128xf32>
    %38 = arith.addf %34, %37 : vector<384x128xf32>
    %39 = vector.shape_cast %38 : vector<384x128xf32> to vector<16x24x128xf32>
    %c0_48 = arith.constant 0 : index
    %c0_49 = arith.constant 0 : index
    %c0_50 = arith.constant 0 : index
    %40 = vector.load %arg10[%c0_48, %c0_49, %c0_50] : memref<16x16x128xf32, #tpu.memory_space<vmem>>, vector<16x16x128xf32>
    %41 = vector.extract_strided_slice %39 {offsets = [0, 1, 0], sizes = [16, 16, 128], strides = [1, 1, 1]} : vector<16x24x128xf32> to vector<16x16x128xf32>
    %42 = arith.addf %40, %41 : vector<16x16x128xf32>
    %c0_51 = arith.constant 0 : index
    %c0_52 = arith.constant 0 : index
    %c0_53 = arith.constant 0 : index
    %43 = vector.load %arg10[%c0_51, %c0_52, %c0_53] : memref<16x16x128xf32, #tpu.memory_space<vmem>>, vector<16x16x128xf32>
    tpu.vector_store %arg10[%c0_51, %c0_52, %c0_53], %42 {strides = array<i32>} : memref<16x16x128xf32, #tpu.memory_space<vmem>>, vector<16x16x128xf32>,
    %c0_54 = arith.constant 0 : index
    %c2_55 = arith.constant 2 : index
    %c0_56 = arith.constant 0 : index
    %c0_57 = arith.constant 0 : index
    %44 = vector.load %arg4[%c0_54, %c2_55, %c0_56, %c0_57] : memref<3x3x128x128xbf16, #tpu.memory_space<vmem>>, vector<1x1x128x128xbf16>
    %45 = vector.shape_cast %44 : vector<1x1x128x128xbf16> to vector<128x128xbf16>
    %cst_58 = arith.constant dense<0.000000e+00> : vector<384x128xf32>
    %46 = tpu.matmul %5, %45, %cst_58 {dimension_numbers = #tpu.dot_dimension_numbers<[1], [0], [0], [1], [0, 0, 1, 1], [], []>} : vector<384x128xbf16>, vector<128x128xbf16>, vector<384x128xf32> -> vector<384x128xf32>
    %c1_59 = arith.constant 1 : index
    %c2_60 = arith.constant 2 : index
    %c0_61 = arith.constant 0 : index
    %c0_62 = arith.constant 0 : index
    %47 = vector.load %arg4[%c1_59, %c2_60, %c0_61, %c0_62] : memref<3x3x128x128xbf16, #tpu.memory_space<vmem>>, vector<1x1x128x128xbf16>
    %48 = vector.shape_cast %47 : vector<1x1x128x128xbf16> to vector<128x128xbf16>
    %cst_63 = arith.constant dense<0.000000e+00> : vector<384x128xf32>
    %49 = tpu.matmul %8, %48, %cst_63 {dimension_numbers = #tpu.dot_dimension_numbers<[1], [0], [0], [1], [0, 0, 1, 1], [], []>} : vector<384x128xbf16>, vector<128x128xbf16>, vector<384x128xf32> -> vector<384x128xf32>
    %50 = arith.addf %46, %49 : vector<384x128xf32>
    %c2_64 = arith.constant 2 : index
    %c2_65 = arith.constant 2 : index
    %c0_66 = arith.constant 0 : index
    %c0_67 = arith.constant 0 : index
    %51 = vector.load %arg4[%c2_64, %c2_65, %c0_66, %c0_67] : memref<3x3x128x128xbf16, #tpu.memory_space<vmem>>, vector<1x1x128x128xbf16>
    %52 = vector.shape_cast %51 : vector<1x1x128x128xbf16> to vector<128x128xbf16>
    %cst_68 = arith.constant dense<0.000000e+00> : vector<384x128xf32>
    %53 = tpu.matmul %11, %52, %cst_68 {dimension_numbers = #tpu.dot_dimension_numbers<[1], [0], [0], [1], [0, 0, 1, 1], [], []>} : vector<384x128xbf16>, vector<128x128xbf16>, vector<384x128xf32> -> vector<384x128xf32>
    %54 = arith.addf %50, %53 : vector<384x128xf32>
    %55 = vector.shape_cast %54 : vector<384x128xf32> to vector<16x24x128xf32>
    %c0_69 = arith.constant 0 : index
    %c0_70 = arith.constant 0 : index
    %c0_71 = arith.constant 0 : index
    %56 = vector.load %arg10[%c0_69, %c0_70, %c0_71] : memref<16x16x128xf32, #tpu.memory_space<vmem>>, vector<16x16x128xf32>
    %57 = vector.extract_strided_slice %55 {offsets = [0, 2, 0], sizes = [16, 16, 128], strides = [1, 1, 1]} : vector<16x24x128xf32> to vector<16x16x128xf32>
    %58 = arith.addf %56, %57 : vector<16x16x128xf32>
    %c0_72 = arith.constant 0 : index
    %c0_73 = arith.constant 0 : index
    %c0_74 = arith.constant 0 : index
    %59 = vector.load %arg10[%c0_72, %c0_73, %c0_74] : memref<16x16x128xf32, #tpu.memory_space<vmem>>, vector<16x16x128xf32>
    tpu.vector_store %arg10[%c0_72, %c0_73, %c0_74], %58 {strides = array<i32>} : memref<16x16x128xf32, #tpu.memory_space<vmem>>, vector<16x16x128xf32>,
    %c1_i32 = arith.constant 1 : i32
    %60 = arith.cmpi eq, %arg2, %c1_i32 : i32
    %61 = arith.extui %60 : i1 to i32
    %c0_i32_75 = arith.constant 0 : i32
    %62 = arith.cmpi ne, %61, %c0_i32_75 : i32
    scf.if %62 {
      %c0_76 = arith.constant 0 : index
      %c0_77 = arith.constant 0 : index
      %c0_78 = arith.constant 0 : index
      %63 = vector.load %arg10[%c0_76, %c0_77, %c0_78] : memref<16x16x128xf32, #tpu.memory_space<vmem>>, vector<16x16x128xf32>
      %c0_79 = arith.constant 0 : index
      %c0_80 = arith.constant 0 : index
      %64 = vector.load %arg5[%c0_79, %c0_80] : memref<1x128xf32, #tpu.memory_space<vmem>>, vector<1x128xf32>
      %65 = vector.shape_cast %64 : vector<1x128xf32> to vector<1x1x128xf32>
      %66 = vector.broadcast %65 : vector<1x1x128xf32> to vector<16x16x128xf32>
      %67 = arith.mulf %63, %66 : vector<16x16x128xf32>
      %c0_81 = arith.constant 0 : index
      %c0_82 = arith.constant 0 : index
      %68 = vector.load %arg6[%c0_81, %c0_82] : memref<1x128xf32, #tpu.memory_space<vmem>>, vector<1x128xf32>
      %69 = vector.shape_cast %68 : vector<1x128xf32> to vector<1x1x128xf32>
      %70 = vector.broadcast %69 : vector<1x1x128xf32> to vector<16x16x128xf32>
      %71 = arith.addf %67, %70 : vector<16x16x128xf32>
      %cst_83 = arith.constant 0.000000e+00 : f32
      %72 = vector.broadcast %cst_83 : f32 to vector<16x16x128xf32>
      %73 = arith.maximumf %71, %72 : vector<16x16x128xf32>
      %74 = arith.truncf %73 : vector<16x16x128xf32> to vector<16x16x128xbf16>
      %75 = vector.shape_cast %74 : vector<16x16x128xbf16> to vector<256x128xbf16>
      %c0_84 = arith.constant 0 : index
      %c0_85 = arith.constant 0 : index
      %76 = vector.load %arg7[%c0_84, %c0_85] : memref<128x128xbf16, #tpu.memory_space<vmem>>, vector<128x128xbf16>
      %cst_86 = arith.constant dense<0.000000e+00> : vector<256x128xf32>
      %77 = tpu.matmul %75, %76, %cst_86 {dimension_numbers = #tpu.dot_dimension_numbers<[1], [0], [0], [1], [0, 0, 1, 1], [], []>} : vector<256x128xbf16>, vector<128x128xbf16>, vector<256x128xf32> -> vector<256x128xf32>
      %c0_87 = arith.constant 0 : index
      %c0_88 = arith.constant 0 : index
      %78 = vector.load %arg8[%c0_87, %c0_88] : memref<1x128xf32, #tpu.memory_space<vmem>>, vector<1x128xf32>
      %79 = vector.broadcast %78 : vector<1x128xf32> to vector<256x128xf32>
      %80 = arith.addf %77, %79 : vector<256x128xf32>
      %81 = vector.shape_cast %80 : vector<256x128xf32> to vector<1x1x16x16x128xf32>
      %82 = arith.truncf %81 : vector<1x1x16x16x128xf32> to vector<1x1x16x16x128xbf16>
      %c0_89 = arith.constant 0 : index
      %c0_90 = arith.constant 0 : index
      %c0_91 = arith.constant 0 : index
      %c0_92 = arith.constant 0 : index
      %c0_93 = arith.constant 0 : index
      %83 = vector.load %arg9[%c0_89, %c0_90, %c0_91, %c0_92, %c0_93] : memref<1x1x16x16x128xbf16, #tpu.memory_space<vmem>>, vector<1x1x16x16x128xbf16>
      tpu.vector_store %arg9[%c0_89, %c0_90, %c0_91, %c0_92, %c0_93], %82 {strides = array<i32>} : memref<1x1x16x16x128xbf16, #tpu.memory_space<vmem>>, vector<1x1x16x16x128xbf16>,
    } else {
    }
    return
  }
  func.func @transform_0(%arg0: i32, %arg1: i32, %arg2: i32) -> (i32, i32, i32, i32, i32) {
    %c0_i32 = arith.constant 0 : i32
    %c0_i32_0 = arith.constant 0 : i32
    %c0_i32_1 = arith.constant 0 : i32
    return %arg0, %arg1, %c0_i32, %c0_i32_0, %arg2 : i32, i32, i32, i32, i32
  }
  func.func @transform_1(%arg0: i32, %arg1: i32, %arg2: i32) -> (i32, i32, i32, i32) {
    %c0_i32 = arith.constant 0 : i32
    %c0_i32_0 = arith.constant 0 : i32
    %c0_i32_1 = arith.constant 0 : i32
    %c0_i32_2 = arith.constant 0 : i32
    return %c0_i32, %c0_i32_0, %arg2, %c0_i32_1 : i32, i32, i32, i32
  }
  func.func @transform_2(%arg0: i32, %arg1: i32, %arg2: i32) -> (i32, i32) {
    %c0_i32 = arith.constant 0 : i32
    %c0_i32_0 = arith.constant 0 : i32
    %c0_i32_1 = arith.constant 0 : i32
    return %c0_i32, %c0_i32_0 : i32, i32
  }
  func.func @transform_3(%arg0: i32, %arg1: i32, %arg2: i32) -> (i32, i32) {
    %c0_i32 = arith.constant 0 : i32
    %c0_i32_0 = arith.constant 0 : i32
    %c0_i32_1 = arith.constant 0 : i32
    return %c0_i32, %c0_i32_0 : i32, i32
  }
  func.func @transform_4(%arg0: i32, %arg1: i32, %arg2: i32) -> (i32, i32) {
    %c0_i32 = arith.constant 0 : i32
    %c0_i32_0 = arith.constant 0 : i32
    %c0_i32_1 = arith.constant 0 : i32
    return %c0_i32, %c0_i32_0 : i32, i32
  }
  func.func @transform_5(%arg0: i32, %arg1: i32, %arg2: i32) -> (i32, i32) {
    %c0_i32 = arith.constant 0 : i32
    %c0_i32_0 = arith.constant 0 : i32
    %c0_i32_1 = arith.constant 0 : i32
    return %c0_i32, %c0_i32_0 : i32, i32
  }
  func.func @transform_6(%arg0: i32, %arg1: i32, %arg2: i32) -> (i32, i32, i32, i32, i32) {
    %c0_i32 = arith.constant 0 : i32
    %c0_i32_0 = arith.constant 0 : i32
    %c0_i32_1 = arith.constant 0 : i32
    %c0_i32_2 = arith.constant 0 : i32
    return %arg0, %arg1, %c0_i32, %c0_i32_0, %c0_i32_1 : i32, i32, i32, i32, i32
  }
}

</mosaic_0001>

<llo_original>
// kernel: tpu_custom_call.1
$region0: #{tpu_custom_call.1}
  #allocation0 [shape = 'u32[]', space=smem, size = 0x4, offset = 0x4, fixed_abs, tag = 'smem constant byte address 0x4 - core index']
  #allocation1 [shape = 'u32[72,128]{1,0:T(1,128)}', space=vmem, size = 0x9000, scoped, tag = 'internal scratch']
  #allocation2 [shape = 'f32[16,16,128]{2,1,0:T(8,128)}', space=vmem, size = 0x20000, scoped, tag = 'scratch operand']
  #allocation10 [shape = 's32[]', space=sflag, size = 0x4, offset = 0, fixed_abs, tag = 'sflag constant byte address 0x0 - dummy sync flag']
  %s0 = inlined_call_operand.hbm [shape: bf16[2,1,18,24,256], index: 0, kind: input, shape index: {}]
  %s1 = inlined_call_operand.hbm [shape: bf16[3,3,256,128], index: 1, kind: input, shape index: {}]
  %s2 = inlined_call_operand.vmem [shape: f32[1,128], index: 2, kind: input, shape index: {}]
  %s3 = inlined_call_operand.vmem [shape: f32[1,128], index: 3, kind: input, shape index: {}]
  %s4 = inlined_call_operand.hbm [shape: bf16[128,128], index: 4, kind: input, shape index: {}]
  %s5 = inlined_call_operand.vmem [shape: f32[1,128], index: 5, kind: input, shape index: {}]
  %s6 = inlined_call_operand.hbm [shape: bf16[2,1,16,16,128], index: 6, kind: output, shape index: {}]
  %s7 = sld [smem:[#allocation0]]
  $region77: #{tpu_custom_call.1} parent=0
    _
  %s9 = ssub.s32 1, %s7
  %s10 = scalar_select 0, %s9, %s7
  $region1: #{tpu_custom_call.1} parent=0
    #allocation3 [shape = 'u8[221184]{0}', space=vmem, size = 0x36000, scoped, tag = 'input window, operand 0']
    #allocation4 [shape = 's32[2]{0}', space=sflag, size = 0x8, scoped, tag = 'scoped memory for tpu_custom_call.1']
    #allocation5 [shape = 's32[2]{0}', space=sflag, size = 0x8, scoped, tag = 'scoped memory for tpu_custom_call.1']
    #allocation6 [shape = 'u8[589824]{0}', space=vmem, size = 0x90000, scoped, tag = 'input window, operand 1']
    #allocation7 [shape = 's32[2]{0}', space=sflag, size = 0x8, scoped, tag = 'scoped memory for tpu_custom_call.1']
    #allocation8 [shape = 'u8[32768]{0}', space=vmem, size = 0x8000, scoped, tag = 'input window, operand 4, single buffered']
    #allocation9 [shape = 'u8[131072]{0}', space=vmem, size = 0x20000, scoped, tag = 'output window, operand 0']
    %11 = vsyncpa [#allocation4], 0
    %s12 = scalar_lea.sflag [#allocation4], 1
    %13 = vsyncpa %s12, 0
    %14 = vsyncpa [#allocation7], 0
    %s15 = scalar_lea.sflag [#allocation7], 1
    %16 = vsyncpa %s15, 0
    %17 = vsyncpa [#allocation5], 0
    %s18 = scalar_lea.sflag [#allocation5], 1
    %19 = vsyncpa %s18, 0
    loop: start=0, step=1, limit=6
    $region2: #{tpu_custom_call.1} parent=1 // loop_pre_header
      _
    $region3: #{tpu_custom_call.1} parent=1 // loop_header
      %s21 = sphi 0, %s25
      %p22 = scmp.ge.s32.totalorder %s21, 6
      %s28 = sphi 0, %s47
      %s29 = sphi 0, %s43
      %s30 = sphi 0, %s39
      %s31 = sphi 0, %s28
      %s32 = sphi 0, %s29
      %s33 = sphi 0, %s30
      %s34 = sphi 0, %s31
      %s35 = sphi 0, %s32
      %s36 = sphi 0, %s33
      %s54 = sphi 0, %s56
      %s57 = sphi 0, %s54
      %s58 = sphi 0, %s57
      %s74 = sphi 0, %s58
      %s80 = sphi 0, %s82
      %s83 = sphi 0, %s80
      %s84 = sphi 0, %s83
      %s100 = sphi 0, %s84
      %s104 = sphi 0, %s104
      %s106 = sphi 0, %s104
      %s107 = sphi 0, %s106
      %s121 = sphi 0, %s107
      %s125 = sphi 0, %s125
      %s127 = sphi 0, %s125
      %s128 = sphi 0, %s127
      %s142 = sphi 0, %s128
      %s146 = sphi 0, %s146
      %s148 = sphi 0, %s146
      %s149 = sphi 0, %s148
      %s163 = sphi 0, %s149
      %s167 = sphi 0, %s167
      %s169 = sphi 0, %s167
      %s170 = sphi 0, %s169
      %s184 = sphi 0, %s170
      %s192 = sphi 0, %s194
      %s195 = sphi 0, %s192
      %s196 = sphi 0, %s195
      %s212 = sphi 0, %s196
    $region4: #{tpu_custom_call.1} parent=1 // loop_header_branch
      %24 = sbr.rel (%p22) target = $region8
    $region5: #{tpu_custom_call.1} parent=1 // loop_body
      %s26 = ssub.s32 %s21, 1
      %s27 = ssub.s32 %s21, 2
      %s37 = sadd.s32 1, %s30
      %p38 = scmp.ge.s32.totalorder %s37, 2
      %s39 = scalar_select %p38, 0, %s37
      %s40 = sadd.s32 1, %s29
      %s41 = scalar_select %p38, %s40, %s29
      %p42 = scmp.ge.s32.totalorder %s41, 1
      %s43 = scalar_select %p42, 0, %s41
      %s44 = sadd.s32 1, %s28
      %s45 = scalar_select %p42, %s44, %s28
      %p46 = scmp.ge.s32.totalorder %s45, 2
      %s47 = scalar_select %p46, 0, %s45
      %s48 = ssub.s32 %s28, %s47
      %s49 = ssub.s32 %s29, %s43
      %s50 = sor.u32 %s48, %s49
      %s51 = ssub.s32 %s30, %s39
      %s52 = sor.u32 %s50, %s51
      %p53 = scmp.eq.s32.totalorder %s52, 0
      %s55 = sadd.s32 %s54, 1
      %s56 = scalar_select %p53, %s54, %s55
      %p59 = pneg %p53
      %p60 = scmp.eq.s32.totalorder %s21, 3
      %p61 = por %p59, %p60
      %p62 = scmp.ne.s32.totalorder %s54, %s57
      %p63 = scmp.eq.s32.totalorder %s21, 0
      %p64 = por %p62, %p63
      %p65 = scmp.ne.s32.totalorder %s54, %s57
      %p66 = scmp.eq.s32.totalorder %s26, 3
      %p67 = por %p65, %p66
      %p68 = scmp.ne.s32.totalorder %s57, %s58
      %p69 = scmp.eq.s32.totalorder %s26, 0
      %p70 = por %p68, %p69
      %p71 = scmp.ne.s32.totalorder %s57, %s58
      %p72 = scmp.eq.s32.totalorder %s27, 3
      %p73 = por %p71, %p72
      %p75 = scmp.ne.s32.totalorder %s58, %s74
      %p76 = scmp.eq.s32.totalorder %s27, 0
      %p77 = por %p75, %p76
      %s78 = ssub.s32 %s30, %s39
      %p79 = scmp.eq.s32.totalorder %s78, 0
      %s81 = sadd.s32 %s80, 1
      %s82 = scalar_select %p79, %s80, %s81
      %p85 = pneg %p79
      %p86 = scmp.eq.s32.totalorder %s21, 3
      %p87 = por %p85, %p86
      %p88 = scmp.ne.s32.totalorder %s80, %s83
      %p89 = scmp.eq.s32.totalorder %s21, 0
      %p90 = por %p88, %p89
      %p91 = scmp.ne.s32.totalorder %s80, %s83
      %p92 = scmp.eq.s32.totalorder %s26, 3
      %p93 = por %p91, %p92
      %p94 = scmp.ne.s32.totalorder %s83, %s84
      %p95 = scmp.eq.s32.totalorder %s26, 0
      %p96 = por %p94, %p95
      %p97 = scmp.ne.s32.totalorder %s83, %s84
      %p98 = scmp.eq.s32.totalorder %s27, 3
      %p99 = por %p97, %p98
      %p101 = scmp.ne.s32.totalorder %s84, %s100
      %p102 = scmp.eq.s32.totalorder %s27, 0
      %p103 = por %p101, %p102
      %s105 = sadd.s32 %s104, 1
      %p108 = scmp.eq.s32.totalorder %s21, 3
      %p109 = scmp.ne.s32.totalorder %s104, %s106
      %p110 = scmp.eq.s32.totalorder %s21, 0
      %p111 = por %p109, %p110
      %p112 = scmp.ne.s32.totalorder %s104, %s106
      %p113 = scmp.eq.s32.totalorder %s26, 3
      %p114 = por %p112, %p113
      %p115 = scmp.ne.s32.totalorder %s106, %s107
      %p116 = scmp.eq.s32.totalorder %s26, 0
      %p117 = por %p115, %p116
      %p118 = scmp.ne.s32.totalorder %s106, %s107
      %p119 = scmp.eq.s32.totalorder %s27, 3
      %p120 = por %p118, %p119
      %p122 = scmp.ne.s32.totalorder %s107, %s121
      %p123 = scmp.eq.s32.totalorder %s27, 0
      %p124 = por %p122, %p123
      %s126 = sadd.s32 %s125, 1
      %p129 = scmp.eq.s32.totalorder %s21, 3
      %p130 = scmp.ne.s32.totalorder %s125, %s127
      %p131 = scmp.eq.s32.totalorder %s21, 0
      %p132 = por %p130, %p131
      %p133 = scmp.ne.s32.totalorder %s125, %s127
      %p134 = scmp.eq.s32.totalorder %s26, 3
      %p135 = por %p133, %p134
      %p136 = scmp.ne.s32.totalorder %s127, %s128
      %p137 = scmp.eq.s32.totalorder %s26, 0
      %p138 = por %p136, %p137
      %p139 = scmp.ne.s32.totalorder %s127, %s128
      %p140 = scmp.eq.s32.totalorder %s27, 3
      %p141 = por %p139, %p140
      %p143 = scmp.ne.s32.totalorder %s128, %s142
      %p144 = scmp.eq.s32.totalorder %s27, 0
      %p145 = por %p143, %p144
      %s147 = sadd.s32 %s146, 1
      %p150 = scmp.eq.s32.totalorder %s21, 3
      %p151 = scmp.ne.s32.totalorder %s146, %s148
      %p152 = scmp.eq.s32.totalorder %s21, 0
      %p153 = por %p151, %p152
      %p154 = scmp.ne.s32.totalorder %s146, %s148
      %p155 = scmp.eq.s32.totalorder %s26, 3
      %p156 = por %p154, %p155
      %p157 = scmp.ne.s32.totalorder %s148, %s149
      %p158 = scmp.eq.s32.totalorder %s26, 0
      %p159 = por %p157, %p158
      %p160 = scmp.ne.s32.totalorder %s148, %s149
      %p161 = scmp.eq.s32.totalorder %s27, 3
      %p162 = por %p160, %p161
      %p164 = scmp.ne.s32.totalorder %s149, %s163
      %p165 = scmp.eq.s32.totalorder %s27, 0
      %p166 = por %p164, %p165
      %s168 = sadd.s32 %s167, 1
      %p171 = scmp.eq.s32.totalorder %s21, 3
      %p172 = scmp.ne.s32.totalorder %s167, %s169
      %p173 = scmp.eq.s32.totalorder %s21, 0
      %p174 = por %p172, %p173
      %p175 = scmp.ne.s32.totalorder %s167, %s169
      %p176 = scmp.eq.s32.totalorder %s26, 3
      %p177 = por %p175, %p176
      %p178 = scmp.ne.s32.totalorder %s169, %s170
      %p179 = scmp.eq.s32.totalorder %s26, 0
      %p180 = por %p178, %p179
      %p181 = scmp.ne.s32.totalorder %s169, %s170
      %p182 = scmp.eq.s32.totalorder %s27, 3
      %p183 = por %p181, %p182
      %p185 = scmp.ne.s32.totalorder %s170, %s184
      %p186 = scmp.eq.s32.totalorder %s27, 0
      %p187 = por %p185, %p186
      %s188 = ssub.s32 %s28, %s47
      %s189 = ssub.s32 %s29, %s43
      %s190 = sor.u32 %s188, %s189
      %p191 = scmp.eq.s32.totalorder %s190, 0
      %s193 = sadd.s32 %s192, 1
      %s194 = scalar_select %p191, %s192, %s193
      %p197 = pneg %p191
      %p198 = scmp.eq.s32.totalorder %s21, 3
      %p199 = por %p197, %p198
      %p200 = scmp.ne.s32.totalorder %s192, %s195
      %p201 = scmp.eq.s32.totalorder %s21, 0
      %p202 = por %p200, %p201
      %p203 = scmp.ne.s32.totalorder %s192, %s195
      %p204 = scmp.eq.s32.totalorder %s26, 3
      %p205 = por %p203, %p204
      %p206 = scmp.ne.s32.totalorder %s195, %s196
      %p207 = scmp.eq.s32.totalorder %s26, 0
      %p208 = por %p206, %p207
      %p209 = scmp.ne.s32.totalorder %s195, %s196
      %p210 = scmp.eq.s32.totalorder %s27, 3
      %p211 = por %p209, %p210
      %p213 = scmp.ne.s32.totalorder %s196, %s212
      %p214 = scmp.eq.s32.totalorder %s27, 0
      %p215 = por %p213, %p214
      %p216 = scmp.le.s32.totalorder 1, %s21
      %p217 = scmp.lt.s32.totalorder %s21, 5
      %p218 = pnand %p216, %p217
      %p219 = pneg %p218
      // Predicated region
      $region9: #{tpu_custom_call.1} parent=5 // pred_check
        _
      $region10: #{tpu_custom_call.1} parent=5 // pred_check_branch
        %221 = sbr.rel (%p218) target = $region12
      $region11: #{tpu_custom_call.1} parent=5 // pred_region
        %s222 = ssub.s32 %s21, 1
        // Predicated region
        $region13: #{tpu_custom_call.1} parent=11 // pred_check
          %p223 = pneg %p117
        $region14: #{tpu_custom_call.1} parent=11 // pred_check_branch
          %225 = sbr.rel (%p223) target = $region16
        $region15: #{tpu_custom_call.1} parent=11 // pred_region
          _
        $region16: #{tpu_custom_call.1} parent=11 // pred_fallthru
          _
        // Predicated region
        $region17: #{tpu_custom_call.1} parent=11 // pred_check
          %p226 = pneg %p138
        $region18: #{tpu_custom_call.1} parent=11 // pred_check_branch
          %228 = sbr.rel (%p226) target = $region20
        $region19: #{tpu_custom_call.1} parent=11 // pred_region
          _
        $region20: #{tpu_custom_call.1} parent=11 // pred_fallthru
          _
        // Predicated region
        $region21: #{tpu_custom_call.1} parent=11 // pred_check
          %p229 = pneg %p159
        $region22: #{tpu_custom_call.1} parent=11 // pred_check_branch
          %231 = sbr.rel (%p229) target = $region24
        $region23: #{tpu_custom_call.1} parent=11 // pred_region
          %233 = vsyncadd [#allocation7], 0
          %s234 = sshll.u32 %s4, 4
          %s235 = int_to_ptr.hbm [resolvable:$true] %s234
          %s236 = sshll.u32 [#allocation8], 4
          %s237 = int_to_ptr.vmem [resolvable:$true] %s236
          %242 = dma.hbm_to_vmem [thread:$0]  %s235, 1024, %s237, [#allocation7], 64, 64, 4
        $region24: #{tpu_custom_call.1} parent=11 // pred_fallthru
          _
        // Predicated region
        $region25: #{tpu_custom_call.1} parent=11 // pred_check
          %p243 = pneg %p180
        $region26: #{tpu_custom_call.1} parent=11 // pred_check_branch
          %245 = sbr.rel (%p243) target = $region28
        $region27: #{tpu_custom_call.1} parent=11 // pred_region
          _
        $region28: #{tpu_custom_call.1} parent=11 // pred_fallthru
          _
      $region12: #{tpu_custom_call.1} parent=5 // pred_fallthru
        _
      %p246 = scmp.lt.s32.totalorder %s21, 4
      // Predicated region
      $region29: #{tpu_custom_call.1} parent=5 // pred_check
        %p247 = pneg %p246
      $region30: #{tpu_custom_call.1} parent=5 // pred_check_branch
        %249 = sbr.rel (%p247) target = $region32
      $region31: #{tpu_custom_call.1} parent=5 // pred_region
        // Predicated region
        $region33: #{tpu_custom_call.1} parent=31 // pred_check
          %p250 = pneg %p64
        $region34: #{tpu_custom_call.1} parent=31 // pred_check_branch
          %252 = sbr.rel (%p250) target = $region36
        $region35: #{tpu_custom_call.1} parent=31 // pred_region
          %s253 = sand.u32 %s54, 1
          %s254 = scalar_lea.sflag [#allocation4], %s253
          %s255 = sand.u32 %s54, 1
          %s256 = smul.addr %s255, 216
          %s257 = scalar_lea.vmem [#allocation3], %s256
          %259 = vsyncadd %s254, 0
          %s260 = smul.addr %s29, 108
          %s261 = sadd.s32 %s30, %s260
          %s262 = smul.addr %s28, 108
          %s263 = sadd.s32 %s261, %s262
          %s264 = smul.addr %s263, 4
          %s265 = scalar_lea.hbm %s0, %s264
          %s266 = sshll.u32 %s265, 4
          %s267 = int_to_ptr.hbm [resolvable:$true] %s266
          %s268 = sshll.u32 %s257, 4
          %s269 = int_to_ptr.vmem [resolvable:$true] %s268
          %274 = dma.hbm_to_vmem [thread:$0]  %s267, 3456, %s269, %s254, 128, 64, 4
        $region36: #{tpu_custom_call.1} parent=31 // pred_fallthru
          _
        // Predicated region
        $region37: #{tpu_custom_call.1} parent=31 // pred_check
          %p275 = pneg %p90
        $region38: #{tpu_custom_call.1} parent=31 // pred_check_branch
          %277 = sbr.rel (%p275) target = $region40
        $region39: #{tpu_custom_call.1} parent=31 // pred_region
          #allocation11 [shape = 'u32[6]{0}', space=smem, size = 0x18, scoped, tag = 'DMA stride descriptor']
          %s278 = sand.u32 %s21, 1
          %s279 = scalar_lea.sflag [#allocation7], %s278
          %s280 = sand.u32 %s80, 1
          %s281 = smul.addr %s280, 576
          %s282 = scalar_lea.vmem [#allocation6], %s281
          %s283 = smul.u32 16, %s30
          %285 = vsyncadd %s279, 0
          %s286 = smul.addr %s283, 4
          %s287 = scalar_lea.hbm %s1, %s286
          %s289 = sshll.u32 1, 14
          %s290 = sxor.u32 4294967295, %s289
          %s292 = sld [smem:[#allocation0]]
          %s293 = sadd.s32 2, %s292
          %s295 = sshll.u32 7, 26
          %s296 = sxor.u32 4294967295, %s295
          %s297 = sand.u32 0, %s296
          %s298 = sshll.u32 %s293, 26
          %s299 = sor.u32 %s297, %s298
          %s300 = sshll.u32 %s287, 4
          %s301 = int_to_ptr.hbm [resolvable:$true] %s300
          %s302 = sshll.u32 %s282, 4
          %s303 = int_to_ptr.vmem [resolvable:$true] %s302
          %309 = sst [smem:[#allocation11]] 2048
          %s310 = scalar_lea.smem [#allocation11], 1
          %311 = sst [smem:[%s310]] 1024
          %s312 = scalar_lea.smem [#allocation11], 2
          %313 = sst [smem:[%s312]] 16
          %s314 = scalar_lea.smem [#allocation11], 3
          %315 = sst [smem:[%s314]] 64
          %s316 = scalar_lea.smem [#allocation11], 4
          %317 = sst [smem:[%s316]] 64
          %s318 = scalar_lea.smem [#allocation11], 5
          %319 = sst [smem:[%s318]] 4
          %321 = dma.general %s301, 9216, %s303, %s279, [#allocation10], [#allocation11], %s299, 0
        $region40: #{tpu_custom_call.1} parent=31 // pred_fallthru
          _
      $region32: #{tpu_custom_call.1} parent=5 // pred_fallthru
        _
      %p322 = scmp.le.s32.totalorder 1, %s21
      %p323 = scmp.lt.s32.totalorder %s21, 5
      %p324 = pnand %p322, %p323
      %p325 = pneg %p324
      // Predicated region
      $region41: #{tpu_custom_call.1} parent=5 // pred_check
        _
      $region42: #{tpu_custom_call.1} parent=5 // pred_check_branch
        %327 = sbr.rel (%p324) target = $region44
      $region43: #{tpu_custom_call.1} parent=5 // pred_region
        %s328 = ssub.s32 %s21, 1
        %s329 = sand.u32 %s57, 1
        %s330 = scalar_lea.sflag [#allocation4], %s329
        %s331 = sand.u32 %s57, 1
        %s332 = smul.addr %s331, 216
        %s333 = scalar_lea.vmem [#allocation3], %s332
        // Predicated region
        $region45: #{tpu_custom_call.1} parent=43 // pred_check
          %p334 = pneg %p70
        $region46: #{tpu_custom_call.1} parent=43 // pred_check_branch
          %336 = sbr.rel (%p334) target = $region48
        $region47: #{tpu_custom_call.1} parent=43 // pred_region
          %338 = dma.done %s330, 3456
        $region48: #{tpu_custom_call.1} parent=43 // pred_fallthru
          _
        %s339 = sand.u32 %s26, 1
        %s340 = scalar_lea.sflag [#allocation7], %s339
        %s341 = sand.u32 %s83, 1
        %s342 = smul.addr %s341, 576
        %s343 = scalar_lea.vmem [#allocation6], %s342
        // Predicated region
        $region49: #{tpu_custom_call.1} parent=43 // pred_check
          %p344 = pneg %p96
        $region50: #{tpu_custom_call.1} parent=43 // pred_check_branch
          %346 = sbr.rel (%p344) target = $region52
        $region51: #{tpu_custom_call.1} parent=43 // pred_region
          %348 = dma.done %s340, 9216
        $region52: #{tpu_custom_call.1} parent=43 // pred_fallthru
          _
        // Predicated region
        $region53: #{tpu_custom_call.1} parent=43 // pred_check
          %p349 = pneg %p159
        $region54: #{tpu_custom_call.1} parent=43 // pred_check_branch
          %351 = sbr.rel (%p349) target = $region56
        $region55: #{tpu_custom_call.1} parent=43 // pred_region
          %353 = dma.done [#allocation7], 1024
        $region56: #{tpu_custom_call.1} parent=43 // pred_fallthru
          _
        %s354 = sand.u32 %s57, 1
        %s355 = scalar_lea.sflag [#allocation4], %s354
        %s356 = sand.u32 %s57, 1
        %s357 = smul.addr %s356, 216
        %s358 = scalar_lea.vmem [#allocation3], %s357
        %p359 = pneg %p70
        %p360 = pneg %p67
        %s361 = sand.u32 %s26, 1
        %s362 = scalar_lea.sflag [#allocation7], %s361
        %s363 = sand.u32 %s83, 1
        %s364 = smul.addr %s363, 576
        %s365 = scalar_lea.vmem [#allocation6], %s364
        %p366 = pneg %p96
        %p367 = pneg %p93
        %p368 = pneg %p117
        %p369 = pneg %p114
        %p370 = pneg %p138
        %p371 = pneg %p135
        %p372 = pneg %p159
        %p373 = pneg %p156
        %p374 = pneg %p180
        %p375 = pneg %p177
        %p376 = pneg %p208
        %p377 = pneg %p205
        %s378 = sand.u32 %s195, 1
        %s379 = scalar_lea.sflag [#allocation5], %s378
        %s380 = sand.u32 %s195, 1
        %s381 = smul.addr %s380, 128
        %s382 = scalar_lea.vmem [#allocation9], %s381
        %s383 = smul.u32 16, %s33
        %p384 = scmp.eq.s32.totalorder %s33, 0
        // Predicated region
        $region57: #{tpu_custom_call.1} parent=43 // pred_check
          %p385 = pneg %p384
        $region58: #{tpu_custom_call.1} parent=43 // pred_check_branch
          %387 = sbr.rel (%p385) target = $region60
        $region59: #{tpu_custom_call.1} parent=43 // pred_region
          %388 = vst [vmem:[#allocation2] sm:$0xff] 0.0
          %389 = vst [vmem:[#allocation2 + $0x8] sm:$0xff] 0.0
          %390 = vst [vmem:[#allocation2 + $0x10] sm:$0xff] 0.0
          %391 = vst [vmem:[#allocation2 + $0x18] sm:$0xff] 0.0
          %392 = vst [vmem:[#allocation2 + $0x20] sm:$0xff] 0.0
          %393 = vst [vmem:[#allocation2 + $0x28] sm:$0xff] 0.0
          %394 = vst [vmem:[#allocation2 + $0x30] sm:$0xff] 0.0
          %395 = vst [vmem:[#allocation2 + $0x38] sm:$0xff] 0.0
          %396 = vst [vmem:[#allocation2 + $0x40] sm:$0xff] 0.0
          %397 = vst [vmem:[#allocation2 + $0x48] sm:$0xff] 0.0
          %398 = vst [vmem:[#allocation2 + $0x50] sm:$0xff] 0.0
          %399 = vst [vmem:[#allocation2 + $0x58] sm:$0xff] 0.0
          %400 = vst [vmem:[#allocation2 + $0x60] sm:$0xff] 0.0
          %401 = vst [vmem:[#allocation2 + $0x68] sm:$0xff] 0.0
          %402 = vst [vmem:[#allocation2 + $0x70] sm:$0xff] 0.0
          %403 = vst [vmem:[#allocation2 + $0x78] sm:$0xff] 0.0
          %404 = vst [vmem:[#allocation2 + $0x80] sm:$0xff] 0.0
          %405 = vst [vmem:[#allocation2 + $0x88] sm:$0xff] 0.0
          %406 = vst [vmem:[#allocation2 + $0x90] sm:$0xff] 0.0
          %407 = vst [vmem:[#allocation2 + $0x98] sm:$0xff] 0.0
          %408 = vst [vmem:[#allocation2 + $0xa0] sm:$0xff] 0.0
          %409 = vst [vmem:[#allocation2 + $0xa8] sm:$0xff] 0.0
          %410 = vst [vmem:[#allocation2 + $0xb0] sm:$0xff] 0.0
          %411 = vst [vmem:[#allocation2 + $0xb8] sm:$0xff] 0.0
          %412 = vst [vmem:[#allocation2 + $0xc0] sm:$0xff] 0.0
          %413 = vst [vmem:[#allocation2 + $0xc8] sm:$0xff] 0.0
          %414 = vst [vmem:[#allocation2 + $0xd0] sm:$0xff] 0.0
          %415 = vst [vmem:[#allocation2 + $0xd8] sm:$0xff] 0.0
          %416 = vst [vmem:[#allocation2 + $0xe0] sm:$0xff] 0.0
          %417 = vst [vmem:[#allocation2 + $0xe8] sm:$0xff] 0.0
          %418 = vst [vmem:[#allocation2 + $0xf0] sm:$0xff] 0.0
          %419 = vst [vmem:[#allocation2 + $0xf8] sm:$0xff] 0.0
        $region60: #{tpu_custom_call.1} parent=43 // pred_fallthru
          _
        %v420 = vld [vmem:[%s333] sm:$0xf]
        %v421 = vld [vmem:[%s333 + $0x4] sm:$0xf]
        %v422 = vld [vmem:[%s333 + $0x8] sm:$0xf]
        %v423 = vld [vmem:[%s333 + $0xc] sm:$0xf]
        %v424 = vld [vmem:[%s333 + $0x10] sm:$0xf]
        %v425 = vld [vmem:[%s333 + $0x14] sm:$0xf]
        %v426 = vld [vmem:[%s333 + $0x18] sm:$0xf]
        %v427 = vld [vmem:[%s333 + $0x1c] sm:$0xf]
        %v428 = vld [vmem:[%s333 + $0x20] sm:$0xf]
        %v429 = vld [vmem:[%s333 + $0x24] sm:$0xf]
        %v430 = vld [vmem:[%s333 + $0x28] sm:$0xf]
        %v431 = vld [vmem:[%s333 + $0x2c] sm:$0xf]
        %v432 = vld [vmem:[%s333 + $0x30] sm:$0xf]
        %v433 = vld [vmem:[%s333 + $0x34] sm:$0xf]
        %v434 = vld [vmem:[%s333 + $0x38] sm:$0xf]
        %v435 = vld [vmem:[%s333 + $0x3c] sm:$0xf]
        %v436 = vld [vmem:[%s333 + $0x40] sm:$0xf]
        %v437 = vld [vmem:[%s333 + $0x44] sm:$0xf]
        %v438 = vld [vmem:[%s333 + $0x48] sm:$0xf]
        %v439 = vld [vmem:[%s333 + $0x4c] sm:$0xf]
        %v440 = vld [vmem:[%s333 + $0x50] sm:$0xf]
        %v441 = vld [vmem:[%s333 + $0x54] sm:$0xf]
        %v442 = vld [vmem:[%s333 + $0x58] sm:$0xf]
        %v443 = vld [vmem:[%s333 + $0x5c] sm:$0xf]
        %v444 = vld [vmem:[%s333 + $0x60] sm:$0xf]
        %v445 = vld [vmem:[%s333 + $0x64] sm:$0xf]
        %v446 = vld [vmem:[%s333 + $0x68] sm:$0xf]
        %v447 = vld [vmem:[%s333 + $0x6c] sm:$0xf]
        %v448 = vld [vmem:[%s333 + $0x70] sm:$0xf]
        %v449 = vld [vmem:[%s333 + $0x74] sm:$0xf]
        %v450 = vld [vmem:[%s333 + $0x78] sm:$0xf]
        %v451 = vld [vmem:[%s333 + $0x7c] sm:$0xf]
        %v452 = vld [vmem:[%s333 + $0x80] sm:$0xf]
        %v453 = vld [vmem:[%s333 + $0x84] sm:$0xf]
        %v454 = vld [vmem:[%s333 + $0x88] sm:$0xf]
        %v455 = vld [vmem:[%s333 + $0x8c] sm:$0xf]
        %v456 = vld [vmem:[%s333 + $0x90] sm:$0xf]
        %v457 = vld [vmem:[%s333 + $0x94] sm:$0xf]
        %v458 = vld [vmem:[%s333 + $0x98] sm:$0xf]
        %v459 = vld [vmem:[%s333 + $0x9c] sm:$0xf]
        %v460 = vld [vmem:[%s333 + $0xa0] sm:$0xf]
        %v461 = vld [vmem:[%s333 + $0xa4] sm:$0xf]
        %v462 = vld [vmem:[%s333 + $0xa8] sm:$0xf]
        %v463 = vld [vmem:[%s333 + $0xac] sm:$0xf]
        %v464 = vld [vmem:[%s333 + $0xb0] sm:$0xf]
        %v465 = vld [vmem:[%s333 + $0xb4] sm:$0xf]
        %v466 = vld [vmem:[%s333 + $0xb8] sm:$0xf]
        %v467 = vld [vmem:[%s333 + $0xbc] sm:$0xf]
        %s468 = scalar_lea.vmem %s333, 12 [#allocation3]
        %v469 = vld [vmem:[%s468] sm:$0xf]
        %v470 = vld [vmem:[%s468 + $0x4] sm:$0xf]
        %v471 = vld [vmem:[%s468 + $0x8] sm:$0xf]
        %v472 = vld [vmem:[%s468 + $0xc] sm:$0xf]
        %v473 = vld [vmem:[%s468 + $0x10] sm:$0xf]
        %v474 = vld [vmem:[%s468 + $0x14] sm:$0xf]
        %v475 = vld [vmem:[%s468 + $0x18] sm:$0xf]
        %v476 = vld [vmem:[%s468 + $0x1c] sm:$0xf]
        %v477 = vld [vmem:[%s468 + $0x20] sm:$0xf]
        %v478 = vld [vmem:[%s468 + $0x24] sm:$0xf]
        %v479 = vld [vmem:[%s468 + $0x28] sm:$0xf]
        %v480 = vld [vmem:[%s468 + $0x2c] sm:$0xf]
        %v481 = vld [vmem:[%s468 + $0x30] sm:$0xf]
        %v482 = vld [vmem:[%s468 + $0x34] sm:$0xf]
        %v483 = vld [vmem:[%s468 + $0x38] sm:$0xf]
        %v484 = vld [vmem:[%s468 + $0x3c] sm:$0xf]
        %v485 = vld [vmem:[%s468 + $0x40] sm:$0xf]
        %v486 = vld [vmem:[%s468 + $0x44] sm:$0xf]
        %v487 = vld [vmem:[%s468 + $0x48] sm:$0xf]
        %v488 = vld [vmem:[%s468 + $0x4c] sm:$0xf]
        %v489 = vld [vmem:[%s468 + $0x50] sm:$0xf]
        %v490 = vld [vmem:[%s468 + $0x54] sm:$0xf]
        %v491 = vld [vmem:[%s468 + $0x58] sm:$0xf]
        %v492 = vld [vmem:[%s468 + $0x5c] sm:$0xf]
        %v493 = vld [vmem:[%s468 + $0x60] sm:$0xf]
        %v494 = vld [vmem:[%s468 + $0x64] sm:$0xf]
        %v495 = vld [vmem:[%s468 + $0x68] sm:$0xf]
        %v496 = vld [vmem:[%s468 + $0x6c] sm:$0xf]
        %v497 = vld [vmem:[%s468 + $0x70] sm:$0xf]
        %v498 = vld [vmem:[%s468 + $0x74] sm:$0xf]
        %v499 = vld [vmem:[%s468 + $0x78] sm:$0xf]
        %v500 = vld [vmem:[%s468 + $0x7c] sm:$0xf]
        %v501 = vld [vmem:[%s468 + $0x80] sm:$0xf]
        %v502 = vld [vmem:[%s468 + $0x84] sm:$0xf]
        %v503 = vld [vmem:[%s468 + $0x88] sm:$0xf]
        %v504 = vld [vmem:[%s468 + $0x8c] sm:$0xf]
        %v505 = vld [vmem:[%s468 + $0x90] sm:$0xf]
        %v506 = vld [vmem:[%s468 + $0x94] sm:$0xf]
        %v507 = vld [vmem:[%s468 + $0x98] sm:$0xf]
        %v508 = vld [vmem:[%s468 + $0x9c] sm:$0xf]
        %v509 = vld [vmem:[%s468 + $0xa0] sm:$0xf]
        %v510 = vld [vmem:[%s468 + $0xa4] sm:$0xf]
        %v511 = vld [vmem:[%s468 + $0xa8] sm:$0xf]
        %v512 = vld [vmem:[%s468 + $0xac] sm:$0xf]
        %v513 = vld [vmem:[%s468 + $0xb0] sm:$0xf]
        %v514 = vld [vmem:[%s468 + $0xb4] sm:$0xf]
        %v515 = vld [vmem:[%s468 + $0xb8] sm:$0xf]
        %v516 = vld [vmem:[%s468 + $0xbc] sm:$0xf]
        %s517 = scalar_lea.vmem %s333, 24 [#allocation3]
        %v518 = vld [vmem:[%s517] sm:$0xf]
        %v519 = vld [vmem:[%s517 + $0x4] sm:$0xf]
        %v520 = vld [vmem:[%s517 + $0x8] sm:$0xf]
        %v521 = vld [vmem:[%s517 + $0xc] sm:$0xf]
        %v522 = vld [vmem:[%s517 + $0x10] sm:$0xf]
        %v523 = vld [vmem:[%s517 + $0x14] sm:$0xf]
        %v524 = vld [vmem:[%s517 + $0x18] sm:$0xf]
        %v525 = vld [vmem:[%s517 + $0x1c] sm:$0xf]
        %v526 = vld [vmem:[%s517 + $0x20] sm:$0xf]
        %v527 = vld [vmem:[%s517 + $0x24] sm:$0xf]
        %v528 = vld [vmem:[%s517 + $0x28] sm:$0xf]
        %v529 = vld [vmem:[%s517 + $0x2c] sm:$0xf]
        %v530 = vld [vmem:[%s517 + $0x30] sm:$0xf]
        %v531 = vld [vmem:[%s517 + $0x34] sm:$0xf]
        %v532 = vld [vmem:[%s517 + $0x38] sm:$0xf]
        %v533 = vld [vmem:[%s517 + $0x3c] sm:$0xf]
        %v534 = vld [vmem:[%s517 + $0x40] sm:$0xf]
        %v535 = vld [vmem:[%s517 + $0x44] sm:$0xf]
        %v536 = vld [vmem:[%s517 + $0x48] sm:$0xf]
        %v537 = vld [vmem:[%s517 + $0x4c] sm:$0xf]
        %v538 = vld [vmem:[%s517 + $0x50] sm:$0xf]
        %v539 = vld [vmem:[%s517 + $0x54] sm:$0xf]
        %v540 = vld [vmem:[%s517 + $0x58] sm:$0xf]
        %v541 = vld [vmem:[%s517 + $0x5c] sm:$0xf]
        %v542 = vld [vmem:[%s517 + $0x60] sm:$0xf]
        %v543 = vld [vmem:[%s517 + $0x64] sm:$0xf]
        %v544 = vld [vmem:[%s517 + $0x68] sm:$0xf]
        %v545 = vld [vmem:[%s517 + $0x6c] sm:$0xf]
        %v546 = vld [vmem:[%s517 + $0x70] sm:$0xf]
        %v547 = vld [vmem:[%s517 + $0x74] sm:$0xf]
        %v548 = vld [vmem:[%s517 + $0x78] sm:$0xf]
        %v549 = vld [vmem:[%s517 + $0x7c] sm:$0xf]
        %v550 = vld [vmem:[%s517 + $0x80] sm:$0xf]
        %v551 = vld [vmem:[%s517 + $0x84] sm:$0xf]
        %v552 = vld [vmem:[%s517 + $0x88] sm:$0xf]
        %v553 = vld [vmem:[%s517 + $0x8c] sm:$0xf]
        %v554 = vld [vmem:[%s517 + $0x90] sm:$0xf]
        %v555 = vld [vmem:[%s517 + $0x94] sm:$0xf]
        %v556 = vld [vmem:[%s517 + $0x98] sm:$0xf]
        %v557 = vld [vmem:[%s517 + $0x9c] sm:$0xf]
        %v558 = vld [vmem:[%s517 + $0xa0] sm:$0xf]
        %v559 = vld [vmem:[%s517 + $0xa4] sm:$0xf]
        %v560 = vld [vmem:[%s517 + $0xa8] sm:$0xf]
        %v561 = vld [vmem:[%s517 + $0xac] sm:$0xf]
        %v562 = vld [vmem:[%s517 + $0xb0] sm:$0xf]
        %v563 = vld [vmem:[%s517 + $0xb4] sm:$0xf]
        %v564 = vld [vmem:[%s517 + $0xb8] sm:$0xf]
        %v565 = vld [vmem:[%s517 + $0xbc] sm:$0xf]
        %v566 = vld [vmem:[%s343] sm:$0xf]
        %v567 = vld [vmem:[%s343 + $0x4] sm:$0xf]
        %v568 = vld [vmem:[%s343 + $0x8] sm:$0xf]
        %v569 = vld [vmem:[%s343 + $0xc] sm:$0xf]
        %v570 = vld [vmem:[%s343 + $0x10] sm:$0xf]
        %v571 = vld [vmem:[%s343 + $0x14] sm:$0xf]
        %v572 = vld [vmem:[%s343 + $0x18] sm:$0xf]
        %v573 = vld [vmem:[%s343 + $0x1c] sm:$0xf]
        %v574 = vld [vmem:[%s343 + $0x20] sm:$0xf]
        %v575 = vld [vmem:[%s343 + $0x24] sm:$0xf]
        %v576 = vld [vmem:[%s343 + $0x28] sm:$0xf]
        %v577 = vld [vmem:[%s343 + $0x2c] sm:$0xf]
        %v578 = vld [vmem:[%s343 + $0x30] sm:$0xf]
        %v579 = vld [vmem:[%s343 + $0x34] sm:$0xf]
        %v580 = vld [vmem:[%s343 + $0x38] sm:$0xf]
        %v581 = vld [vmem:[%s343 + $0x3c] sm:$0xf]
        %s582 = scalar_lea.vmem %s343, 192 [#allocation6]
        %v583 = vld [vmem:[%s582] sm:$0xf]
        %v584 = vld [vmem:[%s582 + $0x4] sm:$0xf]
        %v585 = vld [vmem:[%s582 + $0x8] sm:$0xf]
        %v586 = vld [vmem:[%s582 + $0xc] sm:$0xf]
        %v587 = vld [vmem:[%s582 + $0x10] sm:$0xf]
        %v588 = vld [vmem:[%s582 + $0x14] sm:$0xf]
        %v589 = vld [vmem:[%s582 + $0x18] sm:$0xf]
        %v590 = vld [vmem:[%s582 + $0x1c] sm:$0xf]
        %v591 = vld [vmem:[%s582 + $0x20] sm:$0xf]
        %v592 = vld [vmem:[%s582 + $0x24] sm:$0xf]
        %v593 = vld [vmem:[%s582 + $0x28] sm:$0xf]
        %v594 = vld [vmem:[%s582 + $0x2c] sm:$0xf]
        %v595 = vld [vmem:[%s582 + $0x30] sm:$0xf]
        %v596 = vld [vmem:[%s582 + $0x34] sm:$0xf]
        %v597 = vld [vmem:[%s582 + $0x38] sm:$0xf]
        %v598 = vld [vmem:[%s582 + $0x3c] sm:$0xf]
        %v647 = vunpack.c.l.b16 %v469
        %v648 = vunpack.c.l.b16 %v470
        %v649 = vunpack.c.l.b16 %v471
        %v650 = vunpack.c.l.b16 %v472
        %v651 = vunpack.c.l.b16 %v473
        %v652 = vunpack.c.l.b16 %v474
        %v653 = vunpack.c.l.b16 %v475
        %v654 = vunpack.c.l.b16 %v476
        %v655 = vunpack.c.l.b16 %v477
        %v656 = vunpack.c.l.b16 %v478
        %v657 = vunpack.c.l.b16 %v479
        %v658 = vunpack.c.l.b16 %v480
        %v659 = vunpack.c.l.b16 %v481
        %v660 = vunpack.c.l.b16 %v482
        %v661 = vunpack.c.l.b16 %v483
        %v662 = vunpack.c.l.b16 %v484
        %v663 = vunpack.c.l.b16 %v485
        %v664 = vunpack.c.l.b16 %v486
        %v665 = vunpack.c.l.b16 %v487
        %v666 = vunpack.c.l.b16 %v488
        %v667 = vunpack.c.l.b16 %v489
        %v668 = vunpack.c.l.b16 %v490
        %v669 = vunpack.c.l.b16 %v491
        %v670 = vunpack.c.l.b16 %v492
        %v671 = vunpack.c.l.b16 %v493
        %v672 = vunpack.c.l.b16 %v494
        %v673 = vunpack.c.l.b16 %v495
        %v674 = vunpack.c.l.b16 %v496
        %v675 = vunpack.c.l.b16 %v497
        %v676 = vunpack.c.l.b16 %v498
        %v677 = vunpack.c.l.b16 %v499
        %v678 = vunpack.c.l.b16 %v500
        %v679 = vunpack.c.l.b16 %v501
        %v680 = vunpack.c.l.b16 %v502
        %v681 = vunpack.c.l.b16 %v503
        %v682 = vunpack.c.l.b16 %v504
        %v683 = vunpack.c.l.b16 %v505
        %v684 = vunpack.c.l.b16 %v506
        %v685 = vunpack.c.l.b16 %v507
        %v686 = vunpack.c.l.b16 %v508
        %v687 = vunpack.c.l.b16 %v509
        %v688 = vunpack.c.l.b16 %v510
        %v689 = vunpack.c.l.b16 %v511
        %v690 = vunpack.c.l.b16 %v512
        %v691 = vunpack.c.l.b16 %v513
        %v692 = vunpack.c.l.b16 %v514
        %v693 = vunpack.c.l.b16 %v515
        %v694 = vunpack.c.l.b16 %v516
        %v695 = vpack.c.b16 %v648, %v647
        %v696 = vpack.c.b16 %v650, %v649
        %v697 = vpack.c.b16 %v652, %v651
        %v698 = vpack.c.b16 %v654, %v653
        %v699 = vpack.c.b16 %v656, %v655
        %v700 = vpack.c.b16 %v658, %v657
        %v701 = vpack.c.b16 %v660, %v659
        %v702 = vpack.c.b16 %v662, %v661
        %v703 = vpack.c.b16 %v664, %v663
        %v704 = vpack.c.b16 %v666, %v665
        %v705 = vpack.c.b16 %v668, %v667
        %v706 = vpack.c.b16 %v670, %v669
        %v707 = vpack.c.b16 %v672, %v671
        %v708 = vpack.c.b16 %v674, %v673
        %v709 = vpack.c.b16 %v676, %v675
        %v710 = vpack.c.b16 %v678, %v677
        %v711 = vpack.c.b16 %v680, %v679
        %v712 = vpack.c.b16 %v682, %v681
        %v713 = vpack.c.b16 %v684, %v683
        %v714 = vpack.c.b16 %v686, %v685
        %v715 = vpack.c.b16 %v688, %v687
        %v716 = vpack.c.b16 %v690, %v689
        %v717 = vpack.c.b16 %v692, %v691
        %v718 = vpack.c.b16 %v694, %v693
        %v759 = vunpack.c.l.b16 %v583
        %v760 = vunpack.c.l.b16 %v584
        %v761 = vunpack.c.l.b16 %v585
        %v762 = vunpack.c.l.b16 %v586
        %v763 = vunpack.c.l.b16 %v587
        %v764 = vunpack.c.l.b16 %v588
        %v765 = vunpack.c.l.b16 %v589
        %v766 = vunpack.c.l.b16 %v590
        %v767 = vunpack.c.l.b16 %v591
        %v768 = vunpack.c.l.b16 %v592
        %v769 = vunpack.c.l.b16 %v593
        %v770 = vunpack.c.l.b16 %v594
        %v771 = vunpack.c.l.b16 %v595
        %v772 = vunpack.c.l.b16 %v596
        %v773 = vunpack.c.l.b16 %v597
        %v774 = vunpack.c.l.b16 %v598
        %v775 = vpack.c.b16 %v760, %v759
        %v776 = vpack.c.b16 %v762, %v761
        %v777 = vpack.c.b16 %v764, %v763
        %v778 = vpack.c.b16 %v766, %v765
        %v779 = vpack.c.b16 %v768, %v767
        %v780 = vpack.c.b16 %v770, %v769
        %v781 = vpack.c.b16 %v772, %v771
        %v782 = vpack.c.b16 %v774, %v773
        %791 = vmatpush.bf16.msra.mxu0 %v782
        %792 = vmatpush.bf16.msra.mxu0 %v781
        %793 = vmatpush.bf16.msra.mxu0 %v780
        %794 = vmatpush.bf16.msra.mxu0 %v779
        %795 = vmatpush.bf16.msra.mxu0 %v778
        %796 = vmatpush.bf16.msra.mxu0 %v777
        %797 = vmatpush.bf16.msra.mxu0 %v776
        %798 = vmatpush.bf16.msra.mxu0 %v775
        %799 = vmatmul.bf16.gmra.mxu0 %v695
        %v800 = vpop.f32.mrf.mxu0
        %v801 = vadd.f32 0.0, %v800
        %v802 = vpop.f32.mrf.mxu0
        %v803 = vadd.f32 0.0, %v802
        %804 = vmatmul.bf16.gmra.mxu0 %v696
        %v805 = vpop.f32.mrf.mxu0
        %v806 = vpop.f32.mrf.mxu0
        %v807 = vadd.f32 0.0, %v806
        %808 = vmatmul.bf16.gmra.mxu0 %v697
        %v809 = vpop.f32.mrf.mxu0
        %v810 = vadd.f32 0.0, %v809
        %v811 = vpop.f32.mrf.mxu0
        %812 = vmatmul.bf16.gmra.mxu0 %v698
        %v813 = vpop.f32.mrf.mxu0
        %v814 = vadd.f32 0.0, %v813
        %v815 = vpop.f32.mrf.mxu0
        %v816 = vadd.f32 0.0, %v815
        %817 = vmatmul.bf16.gmra.mxu0 %v699
        %v818 = vpop.f32.mrf.mxu0
        %v819 = vpop.f32.mrf.mxu0
        %v820 = vadd.f32 0.0, %v819
        %821 = vmatmul.bf16.gmra.mxu0 %v700
        %v822 = vpop.f32.mrf.mxu0
        %v823 = vadd.f32 0.0, %v822
        %v824 = vpop.f32.mrf.mxu0
        %825 = vmatmul.bf16.gmra.mxu0 %v701
        %v826 = vpop.f32.mrf.mxu0
        %v827 = vadd.f32 0.0, %v826
        %v828 = vpop.f32.mrf.mxu0
        %v829 = vadd.f32 0.0, %v828
        %830 = vmatmul.bf16.gmra.mxu0 %v702
        %v831 = vpop.f32.mrf.mxu0
        %v832 = vpop.f32.mrf.mxu0
        %v833 = vadd.f32 0.0, %v832
        %834 = vmatmul.bf16.gmra.mxu0 %v703
        %v835 = vpop.f32.mrf.mxu0
        %v836 = vadd.f32 0.0, %v835
        %v837 = vpop.f32.mrf.mxu0
        %838 = vmatmul.bf16.gmra.mxu0 %v704
        %v839 = vpop.f32.mrf.mxu0
        %v840 = vadd.f32 0.0, %v839
        %v841 = vpop.f32.mrf.mxu0
        %v842 = vadd.f32 0.0, %v841
        %843 = vmatmul.bf16.gmra.mxu0 %v705
        %v844 = vpop.f32.mrf.mxu0
        %v845 = vpop.f32.mrf.mxu0
        %v846 = vadd.f32 0.0, %v845
        %847 = vmatmul.bf16.gmra.mxu0 %v706
        %v848 = vpop.f32.mrf.mxu0
        %v849 = vadd.f32 0.0, %v848
        %v850 = vpop.f32.mrf.mxu0
        %851 = vmatmul.bf16.gmra.mxu0 %v707
        %v852 = vpop.f32.mrf.mxu0
        %v853 = vadd.f32 0.0, %v852
        %v854 = vpop.f32.mrf.mxu0
        %v855 = vadd.f32 0.0, %v854
        %856 = vmatmul.bf16.gmra.mxu0 %v708
        %v857 = vpop.f32.mrf.mxu0
        %v858 = vpop.f32.mrf.mxu0
        %v859 = vadd.f32 0.0, %v858
        %860 = vmatmul.bf16.gmra.mxu0 %v709
        %v861 = vpop.f32.mrf.mxu0
        %v862 = vadd.f32 0.0, %v861
        %v863 = vpop.f32.mrf.mxu0
        %864 = vmatmul.bf16.gmra.mxu0 %v710
        %v865 = vpop.f32.mrf.mxu0
        %v866 = vadd.f32 0.0, %v865
        %v867 = vpop.f32.mrf.mxu0
        %v868 = vadd.f32 0.0, %v867
        %869 = vmatmul.bf16.gmra.mxu0 %v711
        %v870 = vpop.f32.mrf.mxu0
        %v871 = vpop.f32.mrf.mxu0
        %v872 = vadd.f32 0.0, %v871
        %873 = vmatmul.bf16.gmra.mxu0 %v712
        %v874 = vpop.f32.mrf.mxu0
        %v875 = vadd.f32 0.0, %v874
        %v876 = vpop.f32.mrf.mxu0
        %877 = vmatmul.bf16.gmra.mxu0 %v713
        %v878 = vpop.f32.mrf.mxu0
        %v879 = vadd.f32 0.0, %v878
        %v880 = vpop.f32.mrf.mxu0
        %v881 = vadd.f32 0.0, %v880
        %882 = vmatmul.bf16.gmra.mxu0 %v714
        %v883 = vpop.f32.mrf.mxu0
        %v884 = vpop.f32.mrf.mxu0
        %v885 = vadd.f32 0.0, %v884
        %886 = vmatmul.bf16.gmra.mxu0 %v715
        %v887 = vpop.f32.mrf.mxu0
        %v888 = vadd.f32 0.0, %v887
        %v889 = vpop.f32.mrf.mxu0
        %890 = vmatmul.bf16.gmra.mxu0 %v716
        %v891 = vpop.f32.mrf.mxu0
        %v892 = vadd.f32 0.0, %v891
        %v893 = vpop.f32.mrf.mxu0
        %v894 = vadd.f32 0.0, %v893
        %895 = vmatmul.bf16.gmra.mxu0 %v717
        %v896 = vpop.f32.mrf.mxu0
        %v897 = vpop.f32.mrf.mxu0
        %v898 = vadd.f32 0.0, %v897
        %899 = vmatmul.bf16.gmra.mxu0 %v718
        %v900 = vpop.f32.mrf.mxu0
        %v901 = vadd.f32 0.0, %v900
        %v902 = vpop.f32.mrf.mxu0
        %903 = vdwg.mxu0
        %v952 = vunpack.c.l.b16 %v420
        %v953 = vunpack.c.l.b16 %v421
        %v954 = vunpack.c.l.b16 %v422
        %v955 = vunpack.c.l.b16 %v423
        %v956 = vunpack.c.l.b16 %v424
        %v957 = vunpack.c.l.b16 %v425
        %v958 = vunpack.c.l.b16 %v426
        %v959 = vunpack.c.l.b16 %v427
        %v960 = vunpack.c.l.b16 %v428
        %v961 = vunpack.c.l.b16 %v429
        %v962 = vunpack.c.l.b16 %v430
        %v963 = vunpack.c.l.b16 %v431
        %v964 = vunpack.c.l.b16 %v432
        %v965 = vunpack.c.l.b16 %v433
        %v966 = vunpack.c.l.b16 %v434
        %v967 = vunpack.c.l.b16 %v435
        %v968 = vunpack.c.l.b16 %v436
        %v969 = vunpack.c.l.b16 %v437
        %v970 = vunpack.c.l.b16 %v438
        %v971 = vunpack.c.l.b16 %v439
        %v972 = vunpack.c.l.b16 %v440
        %v973 = vunpack.c.l.b16 %v441
        %v974 = vunpack.c.l.b16 %v442
        %v975 = vunpack.c.l.b16 %v443
        %v976 = vunpack.c.l.b16 %v444
        %v977 = vunpack.c.l.b16 %v445
        %v978 = vunpack.c.l.b16 %v446
        %v979 = vunpack.c.l.b16 %v447
        %v980 = vunpack.c.l.b16 %v448
        %v981 = vunpack.c.l.b16 %v449
        %v982 = vunpack.c.l.b16 %v450
        %v983 = vunpack.c.l.b16 %v451
        %v984 = vunpack.c.l.b16 %v452
        %v985 = vunpack.c.l.b16 %v453
        %v986 = vunpack.c.l.b16 %v454
        %v987 = vunpack.c.l.b16 %v455
        %v988 = vunpack.c.l.b16 %v456
        %v989 = vunpack.c.l.b16 %v457
        %v990 = vunpack.c.l.b16 %v458
        %v991 = vunpack.c.l.b16 %v459
        %v992 = vunpack.c.l.b16 %v460
        %v993 = vunpack.c.l.b16 %v461
        %v994 = vunpack.c.l.b16 %v462
        %v995 = vunpack.c.l.b16 %v463
        %v996 = vunpack.c.l.b16 %v464
        %v997 = vunpack.c.l.b16 %v465
        %v998 = vunpack.c.l.b16 %v466
        %v999 = vunpack.c.l.b16 %v467
        %v1000 = vpack.c.b16 %v953, %v952
        %v1001 = vpack.c.b16 %v955, %v954
        %v1002 = vpack.c.b16 %v957, %v956
        %v1003 = vpack.c.b16 %v959, %v958
        %v1004 = vpack.c.b16 %v961, %v960
        %v1005 = vpack.c.b16 %v963, %v962
        %v1006 = vpack.c.b16 %v965, %v964
        %v1007 = vpack.c.b16 %v967, %v966
        %v1008 = vpack.c.b16 %v969, %v968
        %v1009 = vpack.c.b16 %v971, %v970
        %v1010 = vpack.c.b16 %v973, %v972
        %v1011 = vpack.c.b16 %v975, %v974
        %v1012 = vpack.c.b16 %v977, %v976
        %v1013 = vpack.c.b16 %v979, %v978
        %v1014 = vpack.c.b16 %v981, %v980
        %v1015 = vpack.c.b16 %v983, %v982
        %v1016 = vpack.c.b16 %v985, %v984
        %v1017 = vpack.c.b16 %v987, %v986
        %v1018 = vpack.c.b16 %v989, %v988
        %v1019 = vpack.c.b16 %v991, %v990
        %v1020 = vpack.c.b16 %v993, %v992
        %v1021 = vpack.c.b16 %v995, %v994
        %v1022 = vpack.c.b16 %v997, %v996
        %v1023 = vpack.c.b16 %v999, %v998
        %v1064 = vunpack.c.l.b16 %v566
        %v1065 = vunpack.c.l.b16 %v567
        %v1066 = vunpack.c.l.b16 %v568
        %v1067 = vunpack.c.l.b16 %v569
        %v1068 = vunpack.c.l.b16 %v570
        %v1069 = vunpack.c.l.b16 %v571
        %v1070 = vunpack.c.l.b16 %v572
        %v1071 = vunpack.c.l.b16 %v573
        %v1072 = vunpack.c.l.b16 %v574
        %v1073 = vunpack.c.l.b16 %v575
        %v1074 = vunpack.c.l.b16 %v576
        %v1075 = vunpack.c.l.b16 %v577
        %v1076 = vunpack.c.l.b16 %v578
        %v1077 = vunpack.c.l.b16 %v579
        %v1078 = vunpack.c.l.b16 %v580
        %v1079 = vunpack.c.l.b16 %v581
        %v1080 = vpack.c.b16 %v1065, %v1064
        %v1081 = vpack.c.b16 %v1067, %v1066
        %v1082 = vpack.c.b16 %v1069, %v1068
        %v1083 = vpack.c.b16 %v1071, %v1070
        %v1084 = vpack.c.b16 %v1073, %v1072
        %v1085 = vpack.c.b16 %v1075, %v1074
        %v1086 = vpack.c.b16 %v1077, %v1076
        %v1087 = vpack.c.b16 %v1079, %v1078
        %1096 = vmatpush.bf16.msra.mxu0 %v1087
        %1097 = vmatpush.bf16.msra.mxu0 %v1086
        %1098 = vmatpush.bf16.msra.mxu0 %v1085
        %1099 = vmatpush.bf16.msra.mxu0 %v1084
        %1100 = vmatpush.bf16.msra.mxu0 %v1083
        %1101 = vmatpush.bf16.msra.mxu0 %v1082
        %1102 = vmatpush.bf16.msra.mxu0 %v1081
        %1103 = vmatpush.bf16.msra.mxu0 %v1080
        %1104 = vmatmul.bf16.gmra.mxu0 %v1000
        %v1105 = vpop.f32.mrf.mxu0
        %v1106 = vadd.f32 %v801, %v1105
        %v1107 = vpop.f32.mrf.mxu0
        %v1108 = vadd.f32 %v803, %v1107
        %1109 = vmatmul.bf16.gmra.mxu0 %v1001
        %v1110 = vpop.f32.mrf.mxu0
        %v1111 = vpop.f32.mrf.mxu0
        %v1112 = vadd.f32 %v807, %v1111
        %1113 = vmatmul.bf16.gmra.mxu0 %v1002
        %v1114 = vpop.f32.mrf.mxu0
        %v1115 = vadd.f32 %v810, %v1114
        %v1116 = vpop.f32.mrf.mxu0
        %1117 = vmatmul.bf16.gmra.mxu0 %v1003
        %v1118 = vpop.f32.mrf.mxu0
        %v1119 = vadd.f32 %v814, %v1118
        %v1120 = vpop.f32.mrf.mxu0
        %v1121 = vadd.f32 %v816, %v1120
        %1122 = vmatmul.bf16.gmra.mxu0 %v1004
        %v1123 = vpop.f32.mrf.mxu0
        %v1124 = vpop.f32.mrf.mxu0
        %v1125 = vadd.f32 %v820, %v1124
        %1126 = vmatmul.bf16.gmra.mxu0 %v1005
        %v1127 = vpop.f32.mrf.mxu0
        %v1128 = vadd.f32 %v823, %v1127
        %v1129 = vpop.f32.mrf.mxu0
        %1130 = vmatmul.bf16.gmra.mxu0 %v1006
        %v1131 = vpop.f32.mrf.mxu0
        %v1132 = vadd.f32 %v827, %v1131
        %v1133 = vpop.f32.mrf.mxu0
        %v1134 = vadd.f32 %v829, %v1133
        %1135 = vmatmul.bf16.gmra.mxu0 %v1007
        %v1136 = vpop.f32.mrf.mxu0
        %v1137 = vpop.f32.mrf.mxu0
        %v1138 = vadd.f32 %v833, %v1137
        %1139 = vmatmul.bf16.gmra.mxu0 %v1008
        %v1140 = vpop.f32.mrf.mxu0
        %v1141 = vadd.f32 %v836, %v1140
        %v1142 = vpop.f32.mrf.mxu0
        %1143 = vmatmul.bf16.gmra.mxu0 %v1009
        %v1144 = vpop.f32.mrf.mxu0
        %v1145 = vadd.f32 %v840, %v1144
        %v1146 = vpop.f32.mrf.mxu0
        %v1147 = vadd.f32 %v842, %v1146
        %1148 = vmatmul.bf16.gmra.mxu0 %v1010
        %v1149 = vpop.f32.mrf.mxu0
        %v1150 = vpop.f32.mrf.mxu0
        %v1151 = vadd.f32 %v846, %v1150
        %1152 = vmatmul.bf16.gmra.mxu0 %v1011
        %v1153 = vpop.f32.mrf.mxu0
        %v1154 = vadd.f32 %v849, %v1153
        %v1155 = vpop.f32.mrf.mxu0
        %1156 = vmatmul.bf16.gmra.mxu0 %v1012
        %v1157 = vpop.f32.mrf.mxu0
        %v1158 = vadd.f32 %v853, %v1157
        %v1159 = vpop.f32.mrf.mxu0
        %v1160 = vadd.f32 %v855, %v1159
        %1161 = vmatmul.bf16.gmra.mxu0 %v1013
        %v1162 = vpop.f32.mrf.mxu0
        %v1163 = vpop.f32.mrf.mxu0
        %v1164 = vadd.f32 %v859, %v1163
        %1165 = vmatmul.bf16.gmra.mxu0 %v1014
        %v1166 = vpop.f32.mrf.mxu0
        %v1167 = vadd.f32 %v862, %v1166
        %v1168 = vpop.f32.mrf.mxu0
        %1169 = vmatmul.bf16.gmra.mxu0 %v1015
        %v1170 = vpop.f32.mrf.mxu0
        %v1171 = vadd.f32 %v866, %v1170
        %v1172 = vpop.f32.mrf.mxu0
        %v1173 = vadd.f32 %v868, %v1172
        %1174 = vmatmul.bf16.gmra.mxu0 %v1016
        %v1175 = vpop.f32.mrf.mxu0
        %v1176 = vpop.f32.mrf.mxu0
        %v1177 = vadd.f32 %v872, %v1176
        %1178 = vmatmul.bf16.gmra.mxu0 %v1017
        %v1179 = vpop.f32.mrf.mxu0
        %v1180 = vadd.f32 %v875, %v1179
        %v1181 = vpop.f32.mrf.mxu0
        %1182 = vmatmul.bf16.gmra.mxu0 %v1018
        %v1183 = vpop.f32.mrf.mxu0
        %v1184 = vadd.f32 %v879, %v1183
        %v1185 = vpop.f32.mrf.mxu0
        %v1186 = vadd.f32 %v881, %v1185
        %1187 = vmatmul.bf16.gmra.mxu0 %v1019
        %v1188 = vpop.f32.mrf.mxu0
        %v1189 = vpop.f32.mrf.mxu0
        %v1190 = vadd.f32 %v885, %v1189
        %1191 = vmatmul.bf16.gmra.mxu0 %v1020
        %v1192 = vpop.f32.mrf.mxu0
        %v1193 = vadd.f32 %v888, %v1192
        %v1194 = vpop.f32.mrf.mxu0
        %1195 = vmatmul.bf16.gmra.mxu0 %v1021
        %v1196 = vpop.f32.mrf.mxu0
        %v1197 = vadd.f32 %v892, %v1196
        %v1198 = vpop.f32.mrf.mxu0
        %v1199 = vadd.f32 %v894, %v1198
        %1200 = vmatmul.bf16.gmra.mxu0 %v1022
        %v1201 = vpop.f32.mrf.mxu0
        %v1202 = vpop.f32.mrf.mxu0
        %v1203 = vadd.f32 %v898, %v1202
        %1204 = vmatmul.bf16.gmra.mxu0 %v1023
        %v1205 = vpop.f32.mrf.mxu0
        %v1206 = vadd.f32 %v901, %v1205
        %v1207 = vpop.f32.mrf.mxu0
        %1208 = vdwg.mxu0
        %s1209 = scalar_lea.vmem %s343, 384 [#allocation6]
        %v1210 = vld [vmem:[%s1209] sm:$0xf]
        %v1211 = vld [vmem:[%s1209 + $0x4] sm:$0xf]
        %v1212 = vld [vmem:[%s1209 + $0x8] sm:$0xf]
        %v1213 = vld [vmem:[%s1209 + $0xc] sm:$0xf]
        %v1214 = vld [vmem:[%s1209 + $0x10] sm:$0xf]
        %v1215 = vld [vmem:[%s1209 + $0x14] sm:$0xf]
        %v1216 = vld [vmem:[%s1209 + $0x18] sm:$0xf]
        %v1217 = vld [vmem:[%s1209 + $0x1c] sm:$0xf]
        %v1218 = vld [vmem:[%s1209 + $0x20] sm:$0xf]
        %v1219 = vld [vmem:[%s1209 + $0x24] sm:$0xf]
        %v1220 = vld [vmem:[%s1209 + $0x28] sm:$0xf]
        %v1221 = vld [vmem:[%s1209 + $0x2c] sm:$0xf]
        %v1222 = vld [vmem:[%s1209 + $0x30] sm:$0xf]
        %v1223 = vld [vmem:[%s1209 + $0x34] sm:$0xf]
        %v1224 = vld [vmem:[%s1209 + $0x38] sm:$0xf]
        %v1225 = vld [vmem:[%s1209 + $0x3c] sm:$0xf]
        %v1274 = vunpack.c.l.b16 %v518
        %v1275 = vunpack.c.l.b16 %v519
        %v1276 = vunpack.c.l.b16 %v520
        %v1277 = vunpack.c.l.b16 %v521
        %v1278 = vunpack.c.l.b16 %v522
        %v1279 = vunpack.c.l.b16 %v523
        %v1280 = vunpack.c.l.b16 %v524
        %v1281 = vunpack.c.l.b16 %v525
        %v1282 = vunpack.c.l.b16 %v526
        %v1283 = vunpack.c.l.b16 %v527
        %v1284 = vunpack.c.l.b16 %v528
        %v1285 = vunpack.c.l.b16 %v529
        %v1286 = vunpack.c.l.b16 %v530
        %v1287 = vunpack.c.l.b16 %v531
        %v1288 = vunpack.c.l.b16 %v532
        %v1289 = vunpack.c.l.b16 %v533
        %v1290 = vunpack.c.l.b16 %v534
        %v1291 = vunpack.c.l.b16 %v535
        %v1292 = vunpack.c.l.b16 %v536
        %v1293 = vunpack.c.l.b16 %v537
        %v1294 = vunpack.c.l.b16 %v538
        %v1295 = vunpack.c.l.b16 %v539
        %v1296 = vunpack.c.l.b16 %v540
        %v1297 = vunpack.c.l.b16 %v541
        %v1298 = vunpack.c.l.b16 %v542
        %v1299 = vunpack.c.l.b16 %v543
        %v1300 = vunpack.c.l.b16 %v544
        %v1301 = vunpack.c.l.b16 %v545
        %v1302 = vunpack.c.l.b16 %v546
        %v1303 = vunpack.c.l.b16 %v547
        %v1304 = vunpack.c.l.b16 %v548
        %v1305 = vunpack.c.l.b16 %v549
        %v1306 = vunpack.c.l.b16 %v550
        %v1307 = vunpack.c.l.b16 %v551
        %v1308 = vunpack.c.l.b16 %v552
        %v1309 = vunpack.c.l.b16 %v553
        %v1310 = vunpack.c.l.b16 %v554
        %v1311 = vunpack.c.l.b16 %v555
        %v1312 = vunpack.c.l.b16 %v556
        %v1313 = vunpack.c.l.b16 %v557
        %v1314 = vunpack.c.l.b16 %v558
        %v1315 = vunpack.c.l.b16 %v559
        %v1316 = vunpack.c.l.b16 %v560
        %v1317 = vunpack.c.l.b16 %v561
        %v1318 = vunpack.c.l.b16 %v562
        %v1319 = vunpack.c.l.b16 %v563
        %v1320 = vunpack.c.l.b16 %v564
        %v1321 = vunpack.c.l.b16 %v565
        %v1322 = vpack.c.b16 %v1275, %v1274
        %v1323 = vpack.c.b16 %v1277, %v1276
        %v1324 = vpack.c.b16 %v1279, %v1278
        %v1325 = vpack.c.b16 %v1281, %v1280
        %v1326 = vpack.c.b16 %v1283, %v1282
        %v1327 = vpack.c.b16 %v1285, %v1284
        %v1328 = vpack.c.b16 %v1287, %v1286
        %v1329 = vpack.c.b16 %v1289, %v1288
        %v1330 = vpack.c.b16 %v1291, %v1290
        %v1331 = vpack.c.b16 %v1293, %v1292
        %v1332 = vpack.c.b16 %v1295, %v1294
        %v1333 = vpack.c.b16 %v1297, %v1296
        %v1334 = vpack.c.b16 %v1299, %v1298
        %v1335 = vpack.c.b16 %v1301, %v1300
        %v1336 = vpack.c.b16 %v1303, %v1302
        %v1337 = vpack.c.b16 %v1305, %v1304
        %v1338 = vpack.c.b16 %v1307, %v1306
        %v1339 = vpack.c.b16 %v1309, %v1308
        %v1340 = vpack.c.b16 %v1311, %v1310
        %v1341 = vpack.c.b16 %v1313, %v1312
        %v1342 = vpack.c.b16 %v1315, %v1314
        %v1343 = vpack.c.b16 %v1317, %v1316
        %v1344 = vpack.c.b16 %v1319, %v1318
        %v1345 = vpack.c.b16 %v1321, %v1320
        %v1386 = vunpack.c.l.b16 %v1210
        %v1387 = vunpack.c.l.b16 %v1211
        %v1388 = vunpack.c.l.b16 %v1212
        %v1389 = vunpack.c.l.b16 %v1213
        %v1390 = vunpack.c.l.b16 %v1214
        %v1391 = vunpack.c.l.b16 %v1215
        %v1392 = vunpack.c.l.b16 %v1216
        %v1393 = vunpack.c.l.b16 %v1217
        %v1394 = vunpack.c.l.b16 %v1218
        %v1395 = vunpack.c.l.b16 %v1219
        %v1396 = vunpack.c.l.b16 %v1220
        %v1397 = vunpack.c.l.b16 %v1221
        %v1398 = vunpack.c.l.b16 %v1222
        %v1399 = vunpack.c.l.b16 %v1223
        %v1400 = vunpack.c.l.b16 %v1224
        %v1401 = vunpack.c.l.b16 %v1225
        %v1402 = vpack.c.b16 %v1387, %v1386
        %v1403 = vpack.c.b16 %v1389, %v1388
        %v1404 = vpack.c.b16 %v1391, %v1390
        %v1405 = vpack.c.b16 %v1393, %v1392
        %v1406 = vpack.c.b16 %v1395, %v1394
        %v1407 = vpack.c.b16 %v1397, %v1396
        %v1408 = vpack.c.b16 %v1399, %v1398
        %v1409 = vpack.c.b16 %v1401, %v1400
        %1418 = vmatpush.bf16.msra.mxu0 %v1409
        %1419 = vmatpush.bf16.msra.mxu0 %v1408
        %1420 = vmatpush.bf16.msra.mxu0 %v1407
        %1421 = vmatpush.bf16.msra.mxu0 %v1406
        %1422 = vmatpush.bf16.msra.mxu0 %v1405
        %1423 = vmatpush.bf16.msra.mxu0 %v1404
        %1424 = vmatpush.bf16.msra.mxu0 %v1403
        %1425 = vmatpush.bf16.msra.mxu0 %v1402
        %1426 = vmatmul.bf16.gmra.mxu0 %v1322
        %v1427 = vpop.f32.mrf.mxu0
        %v1428 = vadd.f32 0.0, %v1427
        %v1429 = vpop.f32.mrf.mxu0
        %v1430 = vadd.f32 0.0, %v1429
        %1431 = vmatmul.bf16.gmra.mxu0 %v1323
        %v1432 = vpop.f32.mrf.mxu0
        %v1433 = vpop.f32.mrf.mxu0
        %v1434 = vadd.f32 0.0, %v1433
        %1435 = vmatmul.bf16.gmra.mxu0 %v1324
        %v1436 = vpop.f32.mrf.mxu0
        %v1437 = vadd.f32 0.0, %v1436
        %v1438 = vpop.f32.mrf.mxu0
        %1439 = vmatmul.bf16.gmra.mxu0 %v1325
        %v1440 = vpop.f32.mrf.mxu0
        %v1441 = vadd.f32 0.0, %v1440
        %v1442 = vpop.f32.mrf.mxu0
        %v1443 = vadd.f32 0.0, %v1442
        %1444 = vmatmul.bf16.gmra.mxu0 %v1326
        %v1445 = vpop.f32.mrf.mxu0
        %v1446 = vpop.f32.mrf.mxu0
        %v1447 = vadd.f32 0.0, %v1446
        %1448 = vmatmul.bf16.gmra.mxu0 %v1327
        %v1449 = vpop.f32.mrf.mxu0
        %v1450 = vadd.f32 0.0, %v1449
        %v1451 = vpop.f32.mrf.mxu0
        %1452 = vmatmul.bf16.gmra.mxu0 %v1328
        %v1453 = vpop.f32.mrf.mxu0
        %v1454 = vadd.f32 0.0, %v1453
        %v1455 = vpop.f32.mrf.mxu0
        %v1456 = vadd.f32 0.0, %v1455
        %1457 = vmatmul.bf16.gmra.mxu0 %v1329
        %v1458 = vpop.f32.mrf.mxu0
        %v1459 = vpop.f32.mrf.mxu0
        %v1460 = vadd.f32 0.0, %v1459
        %1461 = vmatmul.bf16.gmra.mxu0 %v1330
        %v1462 = vpop.f32.mrf.mxu0
        %v1463 = vadd.f32 0.0, %v1462
        %v1464 = vpop.f32.mrf.mxu0
        %1465 = vmatmul.bf16.gmra.mxu0 %v1331
        %v1466 = vpop.f32.mrf.mxu0
        %v1467 = vadd.f32 0.0, %v1466
        %v1468 = vpop.f32.mrf.mxu0
        %v1469 = vadd.f32 0.0, %v1468
        %1470 = vmatmul.bf16.gmra.mxu0 %v1332
        %v1471 = vpop.f32.mrf.mxu0
        %v1472 = vpop.f32.mrf.mxu0
        %v1473 = vadd.f32 0.0, %v1472
        %1474 = vmatmul.bf16.gmra.mxu0 %v1333
        %v1475 = vpop.f32.mrf.mxu0
        %v1476 = vadd.f32 0.0, %v1475
        %v1477 = vpop.f32.mrf.mxu0
        %1478 = vmatmul.bf16.gmra.mxu0 %v1334
        %v1479 = vpop.f32.mrf.mxu0
        %v1480 = vadd.f32 0.0, %v1479
        %v1481 = vpop.f32.mrf.mxu0
        %v1482 = vadd.f32 0.0, %v1481
        %1483 = vmatmul.bf16.gmra.mxu0 %v1335
        %v1484 = vpop.f32.mrf.mxu0
        %v1485 = vpop.f32.mrf.mxu0
        %v1486 = vadd.f32 0.0, %v1485
        %1487 = vmatmul.bf16.gmra.mxu0 %v1336
        %v1488 = vpop.f32.mrf.mxu0
        %v1489 = vadd.f32 0.0, %v1488
        %v1490 = vpop.f32.mrf.mxu0
        %1491 = vmatmul.bf16.gmra.mxu0 %v1337
        %v1492 = vpop.f32.mrf.mxu0
        %v1493 = vadd.f32 0.0, %v1492
        %v1494 = vpop.f32.mrf.mxu0
        %v1495 = vadd.f32 0.0, %v1494
        %1496 = vmatmul.bf16.gmra.mxu0 %v1338
        %v1497 = vpop.f32.mrf.mxu0
        %v1498 = vpop.f32.mrf.mxu0
        %v1499 = vadd.f32 0.0, %v1498
        %1500 = vmatmul.bf16.gmra.mxu0 %v1339
        %v1501 = vpop.f32.mrf.mxu0
        %v1502 = vadd.f32 0.0, %v1501
        %v1503 = vpop.f32.mrf.mxu0
        %1504 = vmatmul.bf16.gmra.mxu0 %v1340
        %v1505 = vpop.f32.mrf.mxu0
        %v1506 = vadd.f32 0.0, %v1505
        %v1507 = vpop.f32.mrf.mxu0
        %v1508 = vadd.f32 0.0, %v1507
        %1509 = vmatmul.bf16.gmra.mxu0 %v1341
        %v1510 = vpop.f32.mrf.mxu0
        %v1511 = vpop.f32.mrf.mxu0
        %v1512 = vadd.f32 0.0, %v1511
        %1513 = vmatmul.bf16.gmra.mxu0 %v1342
        %v1514 = vpop.f32.mrf.mxu0
        %v1515 = vadd.f32 0.0, %v1514
        %v1516 = vpop.f32.mrf.mxu0
        %1517 = vmatmul.bf16.gmra.mxu0 %v1343
        %v1518 = vpop.f32.mrf.mxu0
        %v1519 = vadd.f32 0.0, %v1518
        %v1520 = vpop.f32.mrf.mxu0
        %v1521 = vadd.f32 0.0, %v1520
        %1522 = vmatmul.bf16.gmra.mxu0 %v1344
        %v1523 = vpop.f32.mrf.mxu0
        %v1524 = vpop.f32.mrf.mxu0
        %v1525 = vadd.f32 0.0, %v1524
        %1526 = vmatmul.bf16.gmra.mxu0 %v1345
        %v1527 = vpop.f32.mrf.mxu0
        %v1528 = vadd.f32 0.0, %v1527
        %v1529 = vpop.f32.mrf.mxu0
        %1530 = vdwg.mxu0
        %v1531 = vadd.f32 %v1106, %v1428
        %v1532 = vadd.f32 %v1108, %v1430
        %v1533 = vadd.f32 %v1112, %v1434
        %v1534 = vadd.f32 %v1115, %v1437
        %v1535 = vadd.f32 %v1119, %v1441
        %v1536 = vadd.f32 %v1121, %v1443
        %v1537 = vadd.f32 %v1125, %v1447
        %v1538 = vadd.f32 %v1128, %v1450
        %v1539 = vadd.f32 %v1132, %v1454
        %v1540 = vadd.f32 %v1134, %v1456
        %v1541 = vadd.f32 %v1138, %v1460
        %v1542 = vadd.f32 %v1141, %v1463
        %v1543 = vadd.f32 %v1145, %v1467
        %v1544 = vadd.f32 %v1147, %v1469
        %v1545 = vadd.f32 %v1151, %v1473
        %v1546 = vadd.f32 %v1154, %v1476
        %v1547 = vadd.f32 %v1158, %v1480
        %v1548 = vadd.f32 %v1160, %v1482
        %v1549 = vadd.f32 %v1164, %v1486
        %v1550 = vadd.f32 %v1167, %v1489
        %v1551 = vadd.f32 %v1171, %v1493
        %v1552 = vadd.f32 %v1173, %v1495
        %v1553 = vadd.f32 %v1177, %v1499
        %v1554 = vadd.f32 %v1180, %v1502
        %v1555 = vadd.f32 %v1184, %v1506
        %v1556 = vadd.f32 %v1186, %v1508
        %v1557 = vadd.f32 %v1190, %v1512
        %v1558 = vadd.f32 %v1193, %v1515
        %v1559 = vadd.f32 %v1197, %v1519
        %v1560 = vadd.f32 %v1199, %v1521
        %v1561 = vadd.f32 %v1203, %v1525
        %v1562 = vadd.f32 %v1206, %v1528
        %v1563 = vld [vmem:[#allocation2] sm:$0xff]
        %v1564 = vld [vmem:[#allocation2 + $0x8] sm:$0xff]
        %v1565 = vld [vmem:[#allocation2 + $0x10] sm:$0xff]
        %v1566 = vld [vmem:[#allocation2 + $0x18] sm:$0xff]
        %v1567 = vld [vmem:[#allocation2 + $0x20] sm:$0xff]
        %v1568 = vld [vmem:[#allocation2 + $0x28] sm:$0xff]
        %v1569 = vld [vmem:[#allocation2 + $0x30] sm:$0xff]
        %v1570 = vld [vmem:[#allocation2 + $0x38] sm:$0xff]
        %v1571 = vld [vmem:[#allocation2 + $0x40] sm:$0xff]
        %v1572 = vld [vmem:[#allocation2 + $0x48] sm:$0xff]
        %v1573 = vld [vmem:[#allocation2 + $0x50] sm:$0xff]
        %v1574 = vld [vmem:[#allocation2 + $0x58] sm:$0xff]
        %v1575 = vld [vmem:[#allocation2 + $0x60] sm:$0xff]
        %v1576 = vld [vmem:[#allocation2 + $0x68] sm:$0xff]
        %v1577 = vld [vmem:[#allocation2 + $0x70] sm:$0xff]
        %v1578 = vld [vmem:[#allocation2 + $0x78] sm:$0xff]
        %v1579 = vld [vmem:[#allocation2 + $0x80] sm:$0xff]
        %v1580 = vld [vmem:[#allocation2 + $0x88] sm:$0xff]
        %v1581 = vld [vmem:[#allocation2 + $0x90] sm:$0xff]
        %v1582 = vld [vmem:[#allocation2 + $0x98] sm:$0xff]
        %v1583 = vld [vmem:[#allocation2 + $0xa0] sm:$0xff]
        %v1584 = vld [vmem:[#allocation2 + $0xa8] sm:$0xff]
        %v1585 = vld [vmem:[#allocation2 + $0xb0] sm:$0xff]
        %v1586 = vld [vmem:[#allocation2 + $0xb8] sm:$0xff]
        %v1587 = vld [vmem:[#allocation2 + $0xc0] sm:$0xff]
        %v1588 = vld [vmem:[#allocation2 + $0xc8] sm:$0xff]
        %v1589 = vld [vmem:[#allocation2 + $0xd0] sm:$0xff]
        %v1590 = vld [vmem:[#allocation2 + $0xd8] sm:$0xff]
        %v1591 = vld [vmem:[#allocation2 + $0xe0] sm:$0xff]
        %v1592 = vld [vmem:[#allocation2 + $0xe8] sm:$0xff]
        %v1593 = vld [vmem:[#allocation2 + $0xf0] sm:$0xff]
        %v1594 = vld [vmem:[#allocation2 + $0xf8] sm:$0xff]
        %v1595 = vadd.f32 %v1563, %v1531
        %v1596 = vadd.f32 %v1564, %v1532
        %v1597 = vadd.f32 %v1565, %v1533
        %v1598 = vadd.f32 %v1566, %v1534
        %v1599 = vadd.f32 %v1567, %v1535
        %v1600 = vadd.f32 %v1568, %v1536
        %v1601 = vadd.f32 %v1569, %v1537
        %v1602 = vadd.f32 %v1570, %v1538
        %v1603 = vadd.f32 %v1571, %v1539
        %v1604 = vadd.f32 %v1572, %v1540
        %v1605 = vadd.f32 %v1573, %v1541
        %v1606 = vadd.f32 %v1574, %v1542
        %v1607 = vadd.f32 %v1575, %v1543
        %v1608 = vadd.f32 %v1576, %v1544
        %v1609 = vadd.f32 %v1577, %v1545
        %v1610 = vadd.f32 %v1578, %v1546
        %v1611 = vadd.f32 %v1579, %v1547
        %v1612 = vadd.f32 %v1580, %v1548
        %v1613 = vadd.f32 %v1581, %v1549
        %v1614 = vadd.f32 %v1582, %v1550
        %v1615 = vadd.f32 %v1583, %v1551
        %v1616 = vadd.f32 %v1584, %v1552
        %v1617 = vadd.f32 %v1585, %v1553
        %v1618 = vadd.f32 %v1586, %v1554
        %v1619 = vadd.f32 %v1587, %v1555
        %v1620 = vadd.f32 %v1588, %v1556
        %v1621 = vadd.f32 %v1589, %v1557
        %v1622 = vadd.f32 %v1590, %v1558
        %v1623 = vadd.f32 %v1591, %v1559
        %v1624 = vadd.f32 %v1592, %v1560
        %v1625 = vadd.f32 %v1593, %v1561
        %v1626 = vadd.f32 %v1594, %v1562
        %1627 = vst [vmem:[#allocation2] sm:$0xff] %v1595
        %1628 = vst [vmem:[#allocation2 + $0x8] sm:$0xff] %v1596
        %1629 = vst [vmem:[#allocation2 + $0x10] sm:$0xff] %v1597
        %1630 = vst [vmem:[#allocation2 + $0x18] sm:$0xff] %v1598
        %1631 = vst [vmem:[#allocation2 + $0x20] sm:$0xff] %v1599
        %1632 = vst [vmem:[#allocation2 + $0x28] sm:$0xff] %v1600
        %1633 = vst [vmem:[#allocation2 + $0x30] sm:$0xff] %v1601
        %1634 = vst [vmem:[#allocation2 + $0x38] sm:$0xff] %v1602
        %1635 = vst [vmem:[#allocation2 + $0x40] sm:$0xff] %v1603
        %1636 = vst [vmem:[#allocation2 + $0x48] sm:$0xff] %v1604
        %1637 = vst [vmem:[#allocation2 + $0x50] sm:$0xff] %v1605
        %1638 = vst [vmem:[#allocation2 + $0x58] sm:$0xff] %v1606
        %1639 = vst [vmem:[#allocation2 + $0x60] sm:$0xff] %v1607
        %1640 = vst [vmem:[#allocation2 + $0x68] sm:$0xff] %v1608
        %1641 = vst [vmem:[#allocation2 + $0x70] sm:$0xff] %v1609
        %1642 = vst [vmem:[#allocation2 + $0x78] sm:$0xff] %v1610
        %1643 = vst [vmem:[#allocation2 + $0x80] sm:$0xff] %v1611
        %1644 = vst [vmem:[#allocation2 + $0x88] sm:$0xff] %v1612
        %1645 = vst [vmem:[#allocation2 + $0x90] sm:$0xff] %v1613
        %1646 = vst [vmem:[#allocation2 + $0x98] sm:$0xff] %v1614
        %1647 = vst [vmem:[#allocation2 + $0xa0] sm:$0xff] %v1615
        %1648 = vst [vmem:[#allocation2 + $0xa8] sm:$0xff] %v1616
        %1649 = vst [vmem:[#allocation2 + $0xb0] sm:$0xff] %v1617
        %1650 = vst [vmem:[#allocation2 + $0xb8] sm:$0xff] %v1618
        %1651 = vst [vmem:[#allocation2 + $0xc0] sm:$0xff] %v1619
        %1652 = vst [vmem:[#allocation2 + $0xc8] sm:$0xff] %v1620
        %1653 = vst [vmem:[#allocation2 + $0xd0] sm:$0xff] %v1621
        %1654 = vst [vmem:[#allocation2 + $0xd8] sm:$0xff] %v1622
        %1655 = vst [vmem:[#allocation2 + $0xe0] sm:$0xff] %v1623
        %1656 = vst [vmem:[#allocation2 + $0xe8] sm:$0xff] %v1624
        %1657 = vst [vmem:[#allocation2 + $0xf0] sm:$0xff] %v1625
        %1658 = vst [vmem:[#allocation2 + $0xf8] sm:$0xff] %v1626
        %s1659 = scalar_lea.vmem %s343, 64 [#allocation6]
        %v1660 = vld [vmem:[%s1659] sm:$0xf]
        %v1661 = vld [vmem:[%s1659 + $0x4] sm:$0xf]
        %v1662 = vld [vmem:[%s1659 + $0x8] sm:$0xf]
        %v1663 = vld [vmem:[%s1659 + $0xc] sm:$0xf]
        %v1664 = vld [vmem:[%s1659 + $0x10] sm:$0xf]
        %v1665 = vld [vmem:[%s1659 + $0x14] sm:$0xf]
        %v1666 = vld [vmem:[%s1659 + $0x18] sm:$0xf]
        %v1667 = vld [vmem:[%s1659 + $0x1c] sm:$0xf]
        %v1668 = vld [vmem:[%s1659 + $0x20] sm:$0xf]
        %v1669 = vld [vmem:[%s1659 + $0x24] sm:$0xf]
        %v1670 = vld [vmem:[%s1659 + $0x28] sm:$0xf]
        %v1671 = vld [vmem:[%s1659 + $0x2c] sm:$0xf]
        %v1672 = vld [vmem:[%s1659 + $0x30] sm:$0xf]
        %v1673 = vld [vmem:[%s1659 + $0x34] sm:$0xf]
        %v1674 = vld [vmem:[%s1659 + $0x38] sm:$0xf]
        %v1675 = vld [vmem:[%s1659 + $0x3c] sm:$0xf]
        %s1676 = scalar_lea.vmem %s343, 256 [#allocation6]
        %v1677 = vld [vmem:[%s1676] sm:$0xf]
        %v1678 = vld [vmem:[%s1676 + $0x4] sm:$0xf]
        %v1679 = vld [vmem:[%s1676 + $0x8] sm:$0xf]
        %v1680 = vld [vmem:[%s1676 + $0xc] sm:$0xf]
        %v1681 = vld [vmem:[%s1676 + $0x10] sm:$0xf]
        %v1682 = vld [vmem:[%s1676 + $0x14] sm:$0xf]
        %v1683 = vld [vmem:[%s1676 + $0x18] sm:$0xf]
        %v1684 = vld [vmem:[%s1676 + $0x1c] sm:$0xf]
        %v1685 = vld [vmem:[%s1676 + $0x20] sm:$0xf]
        %v1686 = vld [vmem:[%s1676 + $0x24] sm:$0xf]
        %v1687 = vld [vmem:[%s1676 + $0x28] sm:$0xf]
        %v1688 = vld [vmem:[%s1676 + $0x2c] sm:$0xf]
        %v1689 = vld [vmem:[%s1676 + $0x30] sm:$0xf]
        %v1690 = vld [vmem:[%s1676 + $0x34] sm:$0xf]
        %v1691 = vld [vmem:[%s1676 + $0x38] sm:$0xf]
        %v1692 = vld [vmem:[%s1676 + $0x3c] sm:$0xf]
        %v1709 = vunpack.c.l.b16 %v1677
        %v1710 = vunpack.c.l.b16 %v1678
        %v1711 = vunpack.c.l.b16 %v1679
        %v1712 = vunpack.c.l.b16 %v1680
        %v1713 = vunpack.c.l.b16 %v1681
        %v1714 = vunpack.c.l.b16 %v1682
        %v1715 = vunpack.c.l.b16 %v1683
        %v1716 = vunpack.c.l.b16 %v1684
        %v1717 = vunpack.c.l.b16 %v1685
        %v1718 = vunpack.c.l.b16 %v1686
        %v1719 = vunpack.c.l.b16 %v1687
        %v1720 = vunpack.c.l.b16 %v1688
        %v1721 = vunpack.c.l.b16 %v1689
        %v1722 = vunpack.c.l.b16 %v1690
        %v1723 = vunpack.c.l.b16 %v1691
        %v1724 = vunpack.c.l.b16 %v1692
        %v1725 = vpack.c.b16 %v1710, %v1709
        %v1726 = vpack.c.b16 %v1712, %v1711
        %v1727 = vpack.c.b16 %v1714, %v1713
        %v1728 = vpack.c.b16 %v1716, %v1715
        %v1729 = vpack.c.b16 %v1718, %v1717
        %v1730 = vpack.c.b16 %v1720, %v1719
        %v1731 = vpack.c.b16 %v1722, %v1721
        %v1732 = vpack.c.b16 %v1724, %v1723
        %1741 = vmatpush.bf16.msra.mxu0 %v1732
        %1742 = vmatpush.bf16.msra.mxu0 %v1731
        %1743 = vmatpush.bf16.msra.mxu0 %v1730
        %1744 = vmatpush.bf16.msra.mxu0 %v1729
        %1745 = vmatpush.bf16.msra.mxu0 %v1728
        %1746 = vmatpush.bf16.msra.mxu0 %v1727
        %1747 = vmatpush.bf16.msra.mxu0 %v1726
        %1748 = vmatpush.bf16.msra.mxu0 %v1725
        %1749 = vmatmul.bf16.gmra.mxu0 %v695
        %v1750 = vpop.f32.mrf.mxu0
        %v1751 = vadd.f32 0.0, %v1750
        %v1752 = vpop.f32.mrf.mxu0
        %v1753 = vadd.f32 0.0, %v1752
        %1754 = vmatmul.bf16.gmra.mxu0 %v696
        %v1755 = vpop.f32.mrf.mxu0
        %v1756 = vadd.f32 0.0, %v1755
        %v1757 = vpop.f32.mrf.mxu0
        %v1758 = vadd.f32 0.0, %v1757
        %1759 = vmatmul.bf16.gmra.mxu0 %v697
        %v1760 = vpop.f32.mrf.mxu0
        %v1761 = vadd.f32 0.0, %v1760
        %v1762 = vpop.f32.mrf.mxu0
        %v1763 = vadd.f32 0.0, %v1762
        %1764 = vmatmul.bf16.gmra.mxu0 %v698
        %v1765 = vpop.f32.mrf.mxu0
        %v1766 = vadd.f32 0.0, %v1765
        %v1767 = vpop.f32.mrf.mxu0
        %v1768 = vadd.f32 0.0, %v1767
        %1769 = vmatmul.bf16.gmra.mxu0 %v699
        %v1770 = vpop.f32.mrf.mxu0
        %v1771 = vadd.f32 0.0, %v1770
        %v1772 = vpop.f32.mrf.mxu0
        %v1773 = vadd.f32 0.0, %v1772
        %1774 = vmatmul.bf16.gmra.mxu0 %v700
        %v1775 = vpop.f32.mrf.mxu0
        %v1776 = vadd.f32 0.0, %v1775
        %v1777 = vpop.f32.mrf.mxu0
        %v1778 = vadd.f32 0.0, %v1777
        %1779 = vmatmul.bf16.gmra.mxu0 %v701
        %v1780 = vpop.f32.mrf.mxu0
        %v1781 = vadd.f32 0.0, %v1780
        %v1782 = vpop.f32.mrf.mxu0
        %v1783 = vadd.f32 0.0, %v1782
        %1784 = vmatmul.bf16.gmra.mxu0 %v702
        %v1785 = vpop.f32.mrf.mxu0
        %v1786 = vadd.f32 0.0, %v1785
        %v1787 = vpop.f32.mrf.mxu0
        %v1788 = vadd.f32 0.0, %v1787
        %1789 = vmatmul.bf16.gmra.mxu0 %v703
        %v1790 = vpop.f32.mrf.mxu0
        %v1791 = vadd.f32 0.0, %v1790
        %v1792 = vpop.f32.mrf.mxu0
        %v1793 = vadd.f32 0.0, %v1792
        %1794 = vmatmul.bf16.gmra.mxu0 %v704
        %v1795 = vpop.f32.mrf.mxu0
        %v1796 = vadd.f32 0.0, %v1795
        %v1797 = vpop.f32.mrf.mxu0
        %v1798 = vadd.f32 0.0, %v1797
        %1799 = vmatmul.bf16.gmra.mxu0 %v705
        %v1800 = vpop.f32.mrf.mxu0
        %v1801 = vadd.f32 0.0, %v1800
        %v1802 = vpop.f32.mrf.mxu0
        %v1803 = vadd.f32 0.0, %v1802
        %1804 = vmatmul.bf16.gmra.mxu0 %v706
        %v1805 = vpop.f32.mrf.mxu0
        %v1806 = vadd.f32 0.0, %v1805
        %v1807 = vpop.f32.mrf.mxu0
        %v1808 = vadd.f32 0.0, %v1807
        %1809 = vmatmul.bf16.gmra.mxu0 %v707
        %v1810 = vpop.f32.mrf.mxu0
        %v1811 = vadd.f32 0.0, %v1810
        %v1812 = vpop.f32.mrf.mxu0
        %v1813 = vadd.f32 0.0, %v1812
        %1814 = vmatmul.bf16.gmra.mxu0 %v708
        %v1815 = vpop.f32.mrf.mxu0
        %v1816 = vadd.f32 0.0, %v1815
        %v1817 = vpop.f32.mrf.mxu0
        %v1818 = vadd.f32 0.0, %v1817
        %1819 = vmatmul.bf16.gmra.mxu0 %v709
        %v1820 = vpop.f32.mrf.mxu0
        %v1821 = vadd.f32 0.0, %v1820
        %v1822 = vpop.f32.mrf.mxu0
        %v1823 = vadd.f32 0.0, %v1822
        %1824 = vmatmul.bf16.gmra.mxu0 %v710
        %v1825 = vpop.f32.mrf.mxu0
        %v1826 = vadd.f32 0.0, %v1825
        %v1827 = vpop.f32.mrf.mxu0
        %v1828 = vadd.f32 0.0, %v1827
        %1829 = vmatmul.bf16.gmra.mxu0 %v711
        %v1830 = vpop.f32.mrf.mxu0
        %v1831 = vadd.f32 0.0, %v1830
        %v1832 = vpop.f32.mrf.mxu0
        %v1833 = vadd.f32 0.0, %v1832
        %1834 = vmatmul.bf16.gmra.mxu0 %v712
        %v1835 = vpop.f32.mrf.mxu0
        %v1836 = vadd.f32 0.0, %v1835
        %v1837 = vpop.f32.mrf.mxu0
        %v1838 = vadd.f32 0.0, %v1837
        %1839 = vmatmul.bf16.gmra.mxu0 %v713
        %v1840 = vpop.f32.mrf.mxu0
        %v1841 = vadd.f32 0.0, %v1840
        %v1842 = vpop.f32.mrf.mxu0
        %v1843 = vadd.f32 0.0, %v1842
        %1844 = vmatmul.bf16.gmra.mxu0 %v714
        %v1845 = vpop.f32.mrf.mxu0
        %v1846 = vadd.f32 0.0, %v1845
        %v1847 = vpop.f32.mrf.mxu0
        %v1848 = vadd.f32 0.0, %v1847
        %1849 = vmatmul.bf16.gmra.mxu0 %v715
        %v1850 = vpop.f32.mrf.mxu0
        %v1851 = vadd.f32 0.0, %v1850
        %v1852 = vpop.f32.mrf.mxu0
        %v1853 = vadd.f32 0.0, %v1852
        %1854 = vmatmul.bf16.gmra.mxu0 %v716
        %v1855 = vpop.f32.mrf.mxu0
        %v1856 = vadd.f32 0.0, %v1855
        %v1857 = vpop.f32.mrf.mxu0
        %v1858 = vadd.f32 0.0, %v1857
        %1859 = vmatmul.bf16.gmra.mxu0 %v717
        %v1860 = vpop.f32.mrf.mxu0
        %v1861 = vadd.f32 0.0, %v1860
        %v1862 = vpop.f32.mrf.mxu0
        %v1863 = vadd.f32 0.0, %v1862
        %1864 = vmatmul.bf16.gmra.mxu0 %v718
        %v1865 = vpop.f32.mrf.mxu0
        %v1866 = vadd.f32 0.0, %v1865
        %v1867 = vpop.f32.mrf.mxu0
        %v1868 = vadd.f32 0.0, %v1867
        %1869 = vdwg.mxu0
        %v1886 = vunpack.c.l.b16 %v1660
        %v1887 = vunpack.c.l.b16 %v1661
        %v1888 = vunpack.c.l.b16 %v1662
        %v1889 = vunpack.c.l.b16 %v1663
        %v1890 = vunpack.c.l.b16 %v1664
        %v1891 = vunpack.c.l.b16 %v1665
        %v1892 = vunpack.c.l.b16 %v1666
        %v1893 = vunpack.c.l.b16 %v1667
        %v1894 = vunpack.c.l.b16 %v1668
        %v1895 = vunpack.c.l.b16 %v1669
        %v1896 = vunpack.c.l.b16 %v1670
        %v1897 = vunpack.c.l.b16 %v1671
        %v1898 = vunpack.c.l.b16 %v1672
        %v1899 = vunpack.c.l.b16 %v1673
        %v1900 = vunpack.c.l.b16 %v1674
        %v1901 = vunpack.c.l.b16 %v1675
        %v1902 = vpack.c.b16 %v1887, %v1886
        %v1903 = vpack.c.b16 %v1889, %v1888
        %v1904 = vpack.c.b16 %v1891, %v1890
        %v1905 = vpack.c.b16 %v1893, %v1892
        %v1906 = vpack.c.b16 %v1895, %v1894
        %v1907 = vpack.c.b16 %v1897, %v1896
        %v1908 = vpack.c.b16 %v1899, %v1898
        %v1909 = vpack.c.b16 %v1901, %v1900
        %1918 = vmatpush.bf16.msra.mxu0 %v1909
        %1919 = vmatpush.bf16.msra.mxu0 %v1908
        %1920 = vmatpush.bf16.msra.mxu0 %v1907
        %1921 = vmatpush.bf16.msra.mxu0 %v1906
        %1922 = vmatpush.bf16.msra.mxu0 %v1905
        %1923 = vmatpush.bf16.msra.mxu0 %v1904
        %1924 = vmatpush.bf16.msra.mxu0 %v1903
        %1925 = vmatpush.bf16.msra.mxu0 %v1902
        %1926 = vmatmul.bf16.gmra.mxu0 %v1000
        %v1927 = vpop.f32.mrf.mxu0
        %v1928 = vadd.f32 %v1751, %v1927
        %v1929 = vpop.f32.mrf.mxu0
        %v1930 = vadd.f32 %v1753, %v1929
        %1931 = vmatmul.bf16.gmra.mxu0 %v1001
        %v1932 = vpop.f32.mrf.mxu0
        %v1933 = vadd.f32 %v1756, %v1932
        %v1934 = vpop.f32.mrf.mxu0
        %v1935 = vadd.f32 %v1758, %v1934
        %1936 = vmatmul.bf16.gmra.mxu0 %v1002
        %v1937 = vpop.f32.mrf.mxu0
        %v1938 = vadd.f32 %v1761, %v1937
        %v1939 = vpop.f32.mrf.mxu0
        %v1940 = vadd.f32 %v1763, %v1939
        %1941 = vmatmul.bf16.gmra.mxu0 %v1003
        %v1942 = vpop.f32.mrf.mxu0
        %v1943 = vadd.f32 %v1766, %v1942
        %v1944 = vpop.f32.mrf.mxu0
        %v1945 = vadd.f32 %v1768, %v1944
        %1946 = vmatmul.bf16.gmra.mxu0 %v1004
        %v1947 = vpop.f32.mrf.mxu0
        %v1948 = vadd.f32 %v1771, %v1947
        %v1949 = vpop.f32.mrf.mxu0
        %v1950 = vadd.f32 %v1773, %v1949
        %1951 = vmatmul.bf16.gmra.mxu0 %v1005
        %v1952 = vpop.f32.mrf.mxu0
        %v1953 = vadd.f32 %v1776, %v1952
        %v1954 = vpop.f32.mrf.mxu0
        %v1955 = vadd.f32 %v1778, %v1954
        %1956 = vmatmul.bf16.gmra.mxu0 %v1006
        %v1957 = vpop.f32.mrf.mxu0
        %v1958 = vadd.f32 %v1781, %v1957
        %v1959 = vpop.f32.mrf.mxu0
        %v1960 = vadd.f32 %v1783, %v1959
        %1961 = vmatmul.bf16.gmra.mxu0 %v1007
        %v1962 = vpop.f32.mrf.mxu0
        %v1963 = vadd.f32 %v1786, %v1962
        %v1964 = vpop.f32.mrf.mxu0
        %v1965 = vadd.f32 %v1788, %v1964
        %1966 = vmatmul.bf16.gmra.mxu0 %v1008
        %v1967 = vpop.f32.mrf.mxu0
        %v1968 = vadd.f32 %v1791, %v1967
        %v1969 = vpop.f32.mrf.mxu0
        %v1970 = vadd.f32 %v1793, %v1969
        %1971 = vmatmul.bf16.gmra.mxu0 %v1009
        %v1972 = vpop.f32.mrf.mxu0
        %v1973 = vadd.f32 %v1796, %v1972
        %v1974 = vpop.f32.mrf.mxu0
        %v1975 = vadd.f32 %v1798, %v1974
        %1976 = vmatmul.bf16.gmra.mxu0 %v1010
        %v1977 = vpop.f32.mrf.mxu0
        %v1978 = vadd.f32 %v1801, %v1977
        %v1979 = vpop.f32.mrf.mxu0
        %v1980 = vadd.f32 %v1803, %v1979
        %1981 = vmatmul.bf16.gmra.mxu0 %v1011
        %v1982 = vpop.f32.mrf.mxu0
        %v1983 = vadd.f32 %v1806, %v1982
        %v1984 = vpop.f32.mrf.mxu0
        %v1985 = vadd.f32 %v1808, %v1984
        %1986 = vmatmul.bf16.gmra.mxu0 %v1012
        %v1987 = vpop.f32.mrf.mxu0
        %v1988 = vadd.f32 %v1811, %v1987
        %v1989 = vpop.f32.mrf.mxu0
        %v1990 = vadd.f32 %v1813, %v1989
        %1991 = vmatmul.bf16.gmra.mxu0 %v1013
        %v1992 = vpop.f32.mrf.mxu0
        %v1993 = vadd.f32 %v1816, %v1992
        %v1994 = vpop.f32.mrf.mxu0
        %v1995 = vadd.f32 %v1818, %v1994
        %1996 = vmatmul.bf16.gmra.mxu0 %v1014
        %v1997 = vpop.f32.mrf.mxu0
        %v1998 = vadd.f32 %v1821, %v1997
        %v1999 = vpop.f32.mrf.mxu0
        %v2000 = vadd.f32 %v1823, %v1999
        %2001 = vmatmul.bf16.gmra.mxu0 %v1015
        %v2002 = vpop.f32.mrf.mxu0
        %v2003 = vadd.f32 %v1826, %v2002
        %v2004 = vpop.f32.mrf.mxu0
        %v2005 = vadd.f32 %v1828, %v2004
        %2006 = vmatmul.bf16.gmra.mxu0 %v1016
        %v2007 = vpop.f32.mrf.mxu0
        %v2008 = vadd.f32 %v1831, %v2007
        %v2009 = vpop.f32.mrf.mxu0
        %v2010 = vadd.f32 %v1833, %v2009
        %2011 = vmatmul.bf16.gmra.mxu0 %v1017
        %v2012 = vpop.f32.mrf.mxu0
        %v2013 = vadd.f32 %v1836, %v2012
        %v2014 = vpop.f32.mrf.mxu0
        %v2015 = vadd.f32 %v1838, %v2014
        %2016 = vmatmul.bf16.gmra.mxu0 %v1018
        %v2017 = vpop.f32.mrf.mxu0
        %v2018 = vadd.f32 %v1841, %v2017
        %v2019 = vpop.f32.mrf.mxu0
        %v2020 = vadd.f32 %v1843, %v2019
        %2021 = vmatmul.bf16.gmra.mxu0 %v1019
        %v2022 = vpop.f32.mrf.mxu0
        %v2023 = vadd.f32 %v1846, %v2022
        %v2024 = vpop.f32.mrf.mxu0
        %v2025 = vadd.f32 %v1848, %v2024
        %2026 = vmatmul.bf16.gmra.mxu0 %v1020
        %v2027 = vpop.f32.mrf.mxu0
        %v2028 = vadd.f32 %v1851, %v2027
        %v2029 = vpop.f32.mrf.mxu0
        %v2030 = vadd.f32 %v1853, %v2029
        %2031 = vmatmul.bf16.gmra.mxu0 %v1021
        %v2032 = vpop.f32.mrf.mxu0
        %v2033 = vadd.f32 %v1856, %v2032
        %v2034 = vpop.f32.mrf.mxu0
        %v2035 = vadd.f32 %v1858, %v2034
        %2036 = vmatmul.bf16.gmra.mxu0 %v1022
        %v2037 = vpop.f32.mrf.mxu0
        %v2038 = vadd.f32 %v1861, %v2037
        %v2039 = vpop.f32.mrf.mxu0
        %v2040 = vadd.f32 %v1863, %v2039
        %2041 = vmatmul.bf16.gmra.mxu0 %v1023
        %v2042 = vpop.f32.mrf.mxu0
        %v2043 = vadd.f32 %v1866, %v2042
        %v2044 = vpop.f32.mrf.mxu0
        %v2045 = vadd.f32 %v1868, %v2044
        %2046 = vdwg.mxu0
        %s2047 = scalar_lea.vmem %s343, 448 [#allocation6]
        %v2048 = vld [vmem:[%s2047] sm:$0xf]
        %v2049 = vld [vmem:[%s2047 + $0x4] sm:$0xf]
        %v2050 = vld [vmem:[%s2047 + $0x8] sm:$0xf]
        %v2051 = vld [vmem:[%s2047 + $0xc] sm:$0xf]
        %v2052 = vld [vmem:[%s2047 + $0x10] sm:$0xf]
        %v2053 = vld [vmem:[%s2047 + $0x14] sm:$0xf]
        %v2054 = vld [vmem:[%s2047 + $0x18] sm:$0xf]
        %v2055 = vld [vmem:[%s2047 + $0x1c] sm:$0xf]
        %v2056 = vld [vmem:[%s2047 + $0x20] sm:$0xf]
        %v2057 = vld [vmem:[%s2047 + $0x24] sm:$0xf]
        %v2058 = vld [vmem:[%s2047 + $0x28] sm:$0xf]
        %v2059 = vld [vmem:[%s2047 + $0x2c] sm:$0xf]
        %v2060 = vld [vmem:[%s2047 + $0x30] sm:$0xf]
        %v2061 = vld [vmem:[%s2047 + $0x34] sm:$0xf]
        %v2062 = vld [vmem:[%s2047 + $0x38] sm:$0xf]
        %v2063 = vld [vmem:[%s2047 + $0x3c] sm:$0xf]
        %v2080 = vunpack.c.l.b16 %v2048
        %v2081 = vunpack.c.l.b16 %v2049
        %v2082 = vunpack.c.l.b16 %v2050
        %v2083 = vunpack.c.l.b16 %v2051
        %v2084 = vunpack.c.l.b16 %v2052
        %v2085 = vunpack.c.l.b16 %v2053
        %v2086 = vunpack.c.l.b16 %v2054
        %v2087 = vunpack.c.l.b16 %v2055
        %v2088 = vunpack.c.l.b16 %v2056
        %v2089 = vunpack.c.l.b16 %v2057
        %v2090 = vunpack.c.l.b16 %v2058
        %v2091 = vunpack.c.l.b16 %v2059
        %v2092 = vunpack.c.l.b16 %v2060
        %v2093 = vunpack.c.l.b16 %v2061
        %v2094 = vunpack.c.l.b16 %v2062
        %v2095 = vunpack.c.l.b16 %v2063
        %v2096 = vpack.c.b16 %v2081, %v2080
        %v2097 = vpack.c.b16 %v2083, %v2082
        %v2098 = vpack.c.b16 %v2085, %v2084
        %v2099 = vpack.c.b16 %v2087, %v2086
        %v2100 = vpack.c.b16 %v2089, %v2088
        %v2101 = vpack.c.b16 %v2091, %v2090
        %v2102 = vpack.c.b16 %v2093, %v2092
        %v2103 = vpack.c.b16 %v2095, %v2094
        %2112 = vmatpush.bf16.msra.mxu0 %v2103
        %2113 = vmatpush.bf16.msra.mxu0 %v2102
        %2114 = vmatpush.bf16.msra.mxu0 %v2101
        %2115 = vmatpush.bf16.msra.mxu0 %v2100
        %2116 = vmatpush.bf16.msra.mxu0 %v2099
        %2117 = vmatpush.bf16.msra.mxu0 %v2098
        %2118 = vmatpush.bf16.msra.mxu0 %v2097
        %2119 = vmatpush.bf16.msra.mxu0 %v2096
        %2120 = vmatmul.bf16.gmra.mxu0 %v1322
        %v2121 = vpop.f32.mrf.mxu0
        %v2122 = vadd.f32 0.0, %v2121
        %v2123 = vpop.f32.mrf.mxu0
        %v2124 = vadd.f32 0.0, %v2123
        %2125 = vmatmul.bf16.gmra.mxu0 %v1323
        %v2126 = vpop.f32.mrf.mxu0
        %v2127 = vadd.f32 0.0, %v2126
        %v2128 = vpop.f32.mrf.mxu0
        %v2129 = vadd.f32 0.0, %v2128
        %2130 = vmatmul.bf16.gmra.mxu0 %v1324
        %v2131 = vpop.f32.mrf.mxu0
        %v2132 = vadd.f32 0.0, %v2131
        %v2133 = vpop.f32.mrf.mxu0
        %v2134 = vadd.f32 0.0, %v2133
        %2135 = vmatmul.bf16.gmra.mxu0 %v1325
        %v2136 = vpop.f32.mrf.mxu0
        %v2137 = vadd.f32 0.0, %v2136
        %v2138 = vpop.f32.mrf.mxu0
        %v2139 = vadd.f32 0.0, %v2138
        %2140 = vmatmul.bf16.gmra.mxu0 %v1326
        %v2141 = vpop.f32.mrf.mxu0
        %v2142 = vadd.f32 0.0, %v2141
        %v2143 = vpop.f32.mrf.mxu0
        %v2144 = vadd.f32 0.0, %v2143
        %2145 = vmatmul.bf16.gmra.mxu0 %v1327
        %v2146 = vpop.f32.mrf.mxu0
        %v2147 = vadd.f32 0.0, %v2146
        %v2148 = vpop.f32.mrf.mxu0
        %v2149 = vadd.f32 0.0, %v2148
        %2150 = vmatmul.bf16.gmra.mxu0 %v1328
        %v2151 = vpop.f32.mrf.mxu0
        %v2152 = vadd.f32 0.0, %v2151
        %v2153 = vpop.f32.mrf.mxu0
        %v2154 = vadd.f32 0.0, %v2153
        %2155 = vmatmul.bf16.gmra.mxu0 %v1329
        %v2156 = vpop.f32.mrf.mxu0
        %v2157 = vadd.f32 0.0, %v2156
        %v2158 = vpop.f32.mrf.mxu0
        %v2159 = vadd.f32 0.0, %v2158
        %2160 = vmatmul.bf16.gmra.mxu0 %v1330
        %v2161 = vpop.f32.mrf.mxu0
        %v2162 = vadd.f32 0.0, %v2161
        %v2163 = vpop.f32.mrf.mxu0
        %v2164 = vadd.f32 0.0, %v2163
        %2165 = vmatmul.bf16.gmra.mxu0 %v1331
        %v2166 = vpop.f32.mrf.mxu0
        %v2167 = vadd.f32 0.0, %v2166
        %v2168 = vpop.f32.mrf.mxu0
        %v2169 = vadd.f32 0.0, %v2168
        %2170 = vmatmul.bf16.gmra.mxu0 %v1332
        %v2171 = vpop.f32.mrf.mxu0
        %v2172 = vadd.f32 0.0, %v2171
        %v2173 = vpop.f32.mrf.mxu0
        %v2174 = vadd.f32 0.0, %v2173
        %2175 = vmatmul.bf16.gmra.mxu0 %v1333
        %v2176 = vpop.f32.mrf.mxu0
        %v2177 = vadd.f32 0.0, %v2176
        %v2178 = vpop.f32.mrf.mxu0
        %v2179 = vadd.f32 0.0, %v2178
        %2180 = vmatmul.bf16.gmra.mxu0 %v1334
        %v2181 = vpop.f32.mrf.mxu0
        %v2182 = vadd.f32 0.0, %v2181
        %v2183 = vpop.f32.mrf.mxu0
        %v2184 = vadd.f32 0.0, %v2183
        %2185 = vmatmul.bf16.gmra.mxu0 %v1335
        %v2186 = vpop.f32.mrf.mxu0
        %v2187 = vadd.f32 0.0, %v2186
        %v2188 = vpop.f32.mrf.mxu0
        %v2189 = vadd.f32 0.0, %v2188
        %2190 = vmatmul.bf16.gmra.mxu0 %v1336
        %v2191 = vpop.f32.mrf.mxu0
        %v2192 = vadd.f32 0.0, %v2191
        %v2193 = vpop.f32.mrf.mxu0
        %v2194 = vadd.f32 0.0, %v2193
        %2195 = vmatmul.bf16.gmra.mxu0 %v1337
        %v2196 = vpop.f32.mrf.mxu0
        %v2197 = vadd.f32 0.0, %v2196
        %v2198 = vpop.f32.mrf.mxu0
        %v2199 = vadd.f32 0.0, %v2198
        %2200 = vmatmul.bf16.gmra.mxu0 %v1338
        %v2201 = vpop.f32.mrf.mxu0
        %v2202 = vadd.f32 0.0, %v2201
        %v2203 = vpop.f32.mrf.mxu0
        %v2204 = vadd.f32 0.0, %v2203
        %2205 = vmatmul.bf16.gmra.mxu0 %v1339
        %v2206 = vpop.f32.mrf.mxu0
        %v2207 = vadd.f32 0.0, %v2206
        %v2208 = vpop.f32.mrf.mxu0
        %v2209 = vadd.f32 0.0, %v2208
        %2210 = vmatmul.bf16.gmra.mxu0 %v1340
        %v2211 = vpop.f32.mrf.mxu0
        %v2212 = vadd.f32 0.0, %v2211
        %v2213 = vpop.f32.mrf.mxu0
        %v2214 = vadd.f32 0.0, %v2213
        %2215 = vmatmul.bf16.gmra.mxu0 %v1341
        %v2216 = vpop.f32.mrf.mxu0
        %v2217 = vadd.f32 0.0, %v2216
        %v2218 = vpop.f32.mrf.mxu0
        %v2219 = vadd.f32 0.0, %v2218
        %2220 = vmatmul.bf16.gmra.mxu0 %v1342
        %v2221 = vpop.f32.mrf.mxu0
        %v2222 = vadd.f32 0.0, %v2221
        %v2223 = vpop.f32.mrf.mxu0
        %v2224 = vadd.f32 0.0, %v2223
        %2225 = vmatmul.bf16.gmra.mxu0 %v1343
        %v2226 = vpop.f32.mrf.mxu0
        %v2227 = vadd.f32 0.0, %v2226
        %v2228 = vpop.f32.mrf.mxu0
        %v2229 = vadd.f32 0.0, %v2228
        %2230 = vmatmul.bf16.gmra.mxu0 %v1344
        %v2231 = vpop.f32.mrf.mxu0
        %v2232 = vadd.f32 0.0, %v2231
        %v2233 = vpop.f32.mrf.mxu0
        %v2234 = vadd.f32 0.0, %v2233
        %2235 = vmatmul.bf16.gmra.mxu0 %v1345
        %v2236 = vpop.f32.mrf.mxu0
        %v2237 = vadd.f32 0.0, %v2236
        %v2238 = vpop.f32.mrf.mxu0
        %v2239 = vadd.f32 0.0, %v2238
        %2240 = vdwg.mxu0
        %v2241 = vadd.f32 %v1928, %v2122
        %v2242 = vadd.f32 %v1930, %v2124
        %v2243 = vadd.f32 %v1933, %v2127
        %v2244 = vadd.f32 %v1935, %v2129
        %v2245 = vadd.f32 %v1938, %v2132
        %v2246 = vadd.f32 %v1940, %v2134
        %v2247 = vadd.f32 %v1943, %v2137
        %v2248 = vadd.f32 %v1945, %v2139
        %v2249 = vadd.f32 %v1948, %v2142
        %v2250 = vadd.f32 %v1950, %v2144
        %v2251 = vadd.f32 %v1953, %v2147
        %v2252 = vadd.f32 %v1955, %v2149
        %v2253 = vadd.f32 %v1958, %v2152
        %v2254 = vadd.f32 %v1960, %v2154
        %v2255 = vadd.f32 %v1963, %v2157
        %v2256 = vadd.f32 %v1965, %v2159
        %v2257 = vadd.f32 %v1968, %v2162
        %v2258 = vadd.f32 %v1970, %v2164
        %v2259 = vadd.f32 %v1973, %v2167
        %v2260 = vadd.f32 %v1975, %v2169
        %v2261 = vadd.f32 %v1978, %v2172
        %v2262 = vadd.f32 %v1980, %v2174
        %v2263 = vadd.f32 %v1983, %v2177
        %v2264 = vadd.f32 %v1985, %v2179
        %v2265 = vadd.f32 %v1988, %v2182
        %v2266 = vadd.f32 %v1990, %v2184
        %v2267 = vadd.f32 %v1993, %v2187
        %v2268 = vadd.f32 %v1995, %v2189
        %v2269 = vadd.f32 %v1998, %v2192
        %v2270 = vadd.f32 %v2000, %v2194
        %v2271 = vadd.f32 %v2003, %v2197
        %v2272 = vadd.f32 %v2005, %v2199
        %v2273 = vadd.f32 %v2008, %v2202
        %v2274 = vadd.f32 %v2010, %v2204
        %v2275 = vadd.f32 %v2013, %v2207
        %v2276 = vadd.f32 %v2015, %v2209
        %v2277 = vadd.f32 %v2018, %v2212
        %v2278 = vadd.f32 %v2020, %v2214
        %v2279 = vadd.f32 %v2023, %v2217
        %v2280 = vadd.f32 %v2025, %v2219
        %v2281 = vadd.f32 %v2028, %v2222
        %v2282 = vadd.f32 %v2030, %v2224
        %v2283 = vadd.f32 %v2033, %v2227
        %v2284 = vadd.f32 %v2035, %v2229
        %v2285 = vadd.f32 %v2038, %v2232
        %v2286 = vadd.f32 %v2040, %v2234
        %v2287 = vadd.f32 %v2043, %v2237
        %v2288 = vadd.f32 %v2045, %v2239
        %v2289 = vld [vmem:[#allocation2] sm:$0xff]
        %v2290 = vld [vmem:[#allocation2 + $0x8] sm:$0xff]
        %v2291 = vld [vmem:[#allocation2 + $0x10] sm:$0xff]
        %v2292 = vld [vmem:[#allocation2 + $0x18] sm:$0xff]
        %v2293 = vld [vmem:[#allocation2 + $0x20] sm:$0xff]
        %v2294 = vld [vmem:[#allocation2 + $0x28] sm:$0xff]
        %v2295 = vld [vmem:[#allocation2 + $0x30] sm:$0xff]
        %v2296 = vld [vmem:[#allocation2 + $0x38] sm:$0xff]
        %v2297 = vld [vmem:[#allocation2 + $0x40] sm:$0xff]
        %v2298 = vld [vmem:[#allocation2 + $0x48] sm:$0xff]
        %v2299 = vld [vmem:[#allocation2 + $0x50] sm:$0xff]
        %v2300 = vld [vmem:[#allocation2 + $0x58] sm:$0xff]
        %v2301 = vld [vmem:[#allocation2 + $0x60] sm:$0xff]
        %v2302 = vld [vmem:[#allocation2 + $0x68] sm:$0xff]
        %v2303 = vld [vmem:[#allocation2 + $0x70] sm:$0xff]
        %v2304 = vld [vmem:[#allocation2 + $0x78] sm:$0xff]
        %v2305 = vld [vmem:[#allocation2 + $0x80] sm:$0xff]
        %v2306 = vld [vmem:[#allocation2 + $0x88] sm:$0xff]
        %v2307 = vld [vmem:[#allocation2 + $0x90] sm:$0xff]
        %v2308 = vld [vmem:[#allocation2 + $0x98] sm:$0xff]
        %v2309 = vld [vmem:[#allocation2 + $0xa0] sm:$0xff]
        %v2310 = vld [vmem:[#allocation2 + $0xa8] sm:$0xff]
        %v2311 = vld [vmem:[#allocation2 + $0xb0] sm:$0xff]
        %v2312 = vld [vmem:[#allocation2 + $0xb8] sm:$0xff]
        %v2313 = vld [vmem:[#allocation2 + $0xc0] sm:$0xff]
        %v2314 = vld [vmem:[#allocation2 + $0xc8] sm:$0xff]
        %v2315 = vld [vmem:[#allocation2 + $0xd0] sm:$0xff]
        %v2316 = vld [vmem:[#allocation2 + $0xd8] sm:$0xff]
        %v2317 = vld [vmem:[#allocation2 + $0xe0] sm:$0xff]
        %v2318 = vld [vmem:[#allocation2 + $0xe8] sm:$0xff]
        %v2319 = vld [vmem:[#allocation2 + $0xf0] sm:$0xff]
        %v2320 = vld [vmem:[#allocation2 + $0xf8] sm:$0xff]
        %vm2369 = vcmask 1046528
        %v2370 = vrot.slane %v2241, 1
        %v2371 = vrot.slane %v2242, 1
        %v2372 = vsel %vm2369, %v2370, %v2371
        %v2373 = vrot.slane %v2243, 1
        %v2374 = vsel %vm2369, %v2371, %v2373
        %v2375 = vrot.slane %v2244, 1
        %v2376 = vrot.slane %v2245, 1
        %v2377 = vsel %vm2369, %v2375, %v2376
        %v2378 = vrot.slane %v2246, 1
        %v2379 = vsel %vm2369, %v2376, %v2378
        %v2380 = vrot.slane %v2247, 1
        %v2381 = vrot.slane %v2248, 1
        %v2382 = vsel %vm2369, %v2380, %v2381
        %v2383 = vrot.slane %v2249, 1
        %v2384 = vsel %vm2369, %v2381, %v2383
        %v2385 = vrot.slane %v2250, 1
        %v2386 = vrot.slane %v2251, 1
        %v2387 = vsel %vm2369, %v2385, %v2386
        %v2388 = vrot.slane %v2252, 1
        %v2389 = vsel %vm2369, %v2386, %v2388
        %v2390 = vrot.slane %v2253, 1
        %v2391 = vrot.slane %v2254, 1
        %v2392 = vsel %vm2369, %v2390, %v2391
        %v2393 = vrot.slane %v2255, 1
        %v2394 = vsel %vm2369, %v2391, %v2393
        %v2395 = vrot.slane %v2256, 1
        %v2396 = vrot.slane %v2257, 1
        %v2397 = vsel %vm2369, %v2395, %v2396
        %v2398 = vrot.slane %v2258, 1
        %v2399 = vsel %vm2369, %v2396, %v2398
        %v2400 = vrot.slane %v2259, 1
        %v2401 = vrot.slane %v2260, 1
        %v2402 = vsel %vm2369, %v2400, %v2401
        %v2403 = vrot.slane %v2261, 1
        %v2404 = vsel %vm2369, %v2401, %v2403
        %v2405 = vrot.slane %v2262, 1
        %v2406 = vrot.slane %v2263, 1
        %v2407 = vsel %vm2369, %v2405, %v2406
        %v2408 = vrot.slane %v2264, 1
        %v2409 = vsel %vm2369, %v2406, %v2408
        %v2410 = vrot.slane %v2265, 1
        %v2411 = vrot.slane %v2266, 1
        %v2412 = vsel %vm2369, %v2410, %v2411
        %v2413 = vrot.slane %v2267, 1
        %v2414 = vsel %vm2369, %v2411, %v2413
        %v2415 = vrot.slane %v2268, 1
        %v2416 = vrot.slane %v2269, 1
        %v2417 = vsel %vm2369, %v2415, %v2416
        %v2418 = vrot.slane %v2270, 1
        %v2419 = vsel %vm2369, %v2416, %v2418
        %v2420 = vrot.slane %v2271, 1
        %v2421 = vrot.slane %v2272, 1
        %v2422 = vsel %vm2369, %v2420, %v2421
        %v2423 = vrot.slane %v2273, 1
        %v2424 = vsel %vm2369, %v2421, %v2423
        %v2425 = vrot.slane %v2274, 1
        %v2426 = vrot.slane %v2275, 1
        %v2427 = vsel %vm2369, %v2425, %v2426
        %v2428 = vrot.slane %v2276, 1
        %v2429 = vsel %vm2369, %v2426, %v2428
        %v2430 = vrot.slane %v2277, 1
        %v2431 = vrot.slane %v2278, 1
        %v2432 = vsel %vm2369, %v2430, %v2431
        %v2433 = vrot.slane %v2279, 1
        %v2434 = vsel %vm2369, %v2431, %v2433
        %v2435 = vrot.slane %v2280, 1
        %v2436 = vrot.slane %v2281, 1
        %v2437 = vsel %vm2369, %v2435, %v2436
        %v2438 = vrot.slane %v2282, 1
        %v2439 = vsel %vm2369, %v2436, %v2438
        %v2440 = vrot.slane %v2283, 1
        %v2441 = vrot.slane %v2284, 1
        %v2442 = vsel %vm2369, %v2440, %v2441
        %v2443 = vrot.slane %v2285, 1
        %v2444 = vsel %vm2369, %v2441, %v2443
        %v2445 = vrot.slane %v2286, 1
        %v2446 = vrot.slane %v2287, 1
        %v2447 = vsel %vm2369, %v2445, %v2446
        %v2448 = vrot.slane %v2288, 1
        %v2449 = vsel %vm2369, %v2446, %v2448
        %v2482 = vadd.f32 %v2289, %v2372
        %v2483 = vadd.f32 %v2290, %v2374
        %v2484 = vadd.f32 %v2291, %v2377
        %v2485 = vadd.f32 %v2292, %v2379
        %v2486 = vadd.f32 %v2293, %v2382
        %v2487 = vadd.f32 %v2294, %v2384
        %v2488 = vadd.f32 %v2295, %v2387
        %v2489 = vadd.f32 %v2296, %v2389
        %v2490 = vadd.f32 %v2297, %v2392
        %v2491 = vadd.f32 %v2298, %v2394
        %v2492 = vadd.f32 %v2299, %v2397
        %v2493 = vadd.f32 %v2300, %v2399
        %v2494 = vadd.f32 %v2301, %v2402
        %v2495 = vadd.f32 %v2302, %v2404
        %v2496 = vadd.f32 %v2303, %v2407
        %v2497 = vadd.f32 %v2304, %v2409
        %v2498 = vadd.f32 %v2305, %v2412
        %v2499 = vadd.f32 %v2306, %v2414
        %v2500 = vadd.f32 %v2307, %v2417
        %v2501 = vadd.f32 %v2308, %v2419
        %v2502 = vadd.f32 %v2309, %v2422
        %v2503 = vadd.f32 %v2310, %v2424
        %v2504 = vadd.f32 %v2311, %v2427
        %v2505 = vadd.f32 %v2312, %v2429
        %v2506 = vadd.f32 %v2313, %v2432
        %v2507 = vadd.f32 %v2314, %v2434
        %v2508 = vadd.f32 %v2315, %v2437
        %v2509 = vadd.f32 %v2316, %v2439
        %v2510 = vadd.f32 %v2317, %v2442
        %v2511 = vadd.f32 %v2318, %v2444
        %v2512 = vadd.f32 %v2319, %v2447
        %v2513 = vadd.f32 %v2320, %v2449
        %2514 = vst [vmem:[#allocation2] sm:$0xff] %v2482
        %2515 = vst [vmem:[#allocation2 + $0x8] sm:$0xff] %v2483
        %2516 = vst [vmem:[#allocation2 + $0x10] sm:$0xff] %v2484
        %2517 = vst [vmem:[#allocation2 + $0x18] sm:$0xff] %v2485
        %2518 = vst [vmem:[#allocation2 + $0x20] sm:$0xff] %v2486
        %2519 = vst [vmem:[#allocation2 + $0x28] sm:$0xff] %v2487
        %2520 = vst [vmem:[#allocation2 + $0x30] sm:$0xff] %v2488
        %2521 = vst [vmem:[#allocation2 + $0x38] sm:$0xff] %v2489
        %2522 = vst [vmem:[#allocation2 + $0x40] sm:$0xff] %v2490
        %2523 = vst [vmem:[#allocation2 + $0x48] sm:$0xff] %v2491
        %2524 = vst [vmem:[#allocation2 + $0x50] sm:$0xff] %v2492
        %2525 = vst [vmem:[#allocation2 + $0x58] sm:$0xff] %v2493
        %2526 = vst [vmem:[#allocation2 + $0x60] sm:$0xff] %v2494
        %2527 = vst [vmem:[#allocation2 + $0x68] sm:$0xff] %v2495
        %2528 = vst [vmem:[#allocation2 + $0x70] sm:$0xff] %v2496
        %2529 = vst [vmem:[#allocation2 + $0x78] sm:$0xff] %v2497
        %2530 = vst [vmem:[#allocation2 + $0x80] sm:$0xff] %v2498
        %2531 = vst [vmem:[#allocation2 + $0x88] sm:$0xff] %v2499
        %2532 = vst [vmem:[#allocation2 + $0x90] sm:$0xff] %v2500
        %2533 = vst [vmem:[#allocation2 + $0x98] sm:$0xff] %v2501
        %2534 = vst [vmem:[#allocation2 + $0xa0] sm:$0xff] %v2502
        %2535 = vst [vmem:[#allocation2 + $0xa8] sm:$0xff] %v2503
        %2536 = vst [vmem:[#allocation2 + $0xb0] sm:$0xff] %v2504
        %2537 = vst [vmem:[#allocation2 + $0xb8] sm:$0xff] %v2505
        %2538 = vst [vmem:[#allocation2 + $0xc0] sm:$0xff] %v2506
        %2539 = vst [vmem:[#allocation2 + $0xc8] sm:$0xff] %v2507
        %2540 = vst [vmem:[#allocation2 + $0xd0] sm:$0xff] %v2508
        %2541 = vst [vmem:[#allocation2 + $0xd8] sm:$0xff] %v2509
        %2542 = vst [vmem:[#allocation2 + $0xe0] sm:$0xff] %v2510
        %2543 = vst [vmem:[#allocation2 + $0xe8] sm:$0xff] %v2511
        %2544 = vst [vmem:[#allocation2 + $0xf0] sm:$0xff] %v2512
        %2545 = vst [vmem:[#allocation2 + $0xf8] sm:$0xff] %v2513
        %s2546 = scalar_lea.vmem %s343, 128 [#allocation6]
        %v2547 = vld [vmem:[%s2546] sm:$0xf]
        %v2548 = vld [vmem:[%s2546 + $0x4] sm:$0xf]
        %v2549 = vld [vmem:[%s2546 + $0x8] sm:$0xf]
        %v2550 = vld [vmem:[%s2546 + $0xc] sm:$0xf]
        %v2551 = vld [vmem:[%s2546 + $0x10] sm:$0xf]
        %v2552 = vld [vmem:[%s2546 + $0x14] sm:$0xf]
        %v2553 = vld [vmem:[%s2546 + $0x18] sm:$0xf]
        %v2554 = vld [vmem:[%s2546 + $0x1c] sm:$0xf]
        %v2555 = vld [vmem:[%s2546 + $0x20] sm:$0xf]
        %v2556 = vld [vmem:[%s2546 + $0x24] sm:$0xf]
        %v2557 = vld [vmem:[%s2546 + $0x28] sm:$0xf]
        %v2558 = vld [vmem:[%s2546 + $0x2c] sm:$0xf]
        %v2559 = vld [vmem:[%s2546 + $0x30] sm:$0xf]
        %v2560 = vld [vmem:[%s2546 + $0x34] sm:$0xf]
        %v2561 = vld [vmem:[%s2546 + $0x38] sm:$0xf]
        %v2562 = vld [vmem:[%s2546 + $0x3c] sm:$0xf]
        %s2563 = scalar_lea.vmem %s343, 320 [#allocation6]
        %v2564 = vld [vmem:[%s2563] sm:$0xf]
        %v2565 = vld [vmem:[%s2563 + $0x4] sm:$0xf]
        %v2566 = vld [vmem:[%s2563 + $0x8] sm:$0xf]
        %v2567 = vld [vmem:[%s2563 + $0xc] sm:$0xf]
        %v2568 = vld [vmem:[%s2563 + $0x10] sm:$0xf]
        %v2569 = vld [vmem:[%s2563 + $0x14] sm:$0xf]
        %v2570 = vld [vmem:[%s2563 + $0x18] sm:$0xf]
        %v2571 = vld [vmem:[%s2563 + $0x1c] sm:$0xf]
        %v2572 = vld [vmem:[%s2563 + $0x20] sm:$0xf]
        %v2573 = vld [vmem:[%s2563 + $0x24] sm:$0xf]
        %v2574 = vld [vmem:[%s2563 + $0x28] sm:$0xf]
        %v2575 = vld [vmem:[%s2563 + $0x2c] sm:$0xf]
        %v2576 = vld [vmem:[%s2563 + $0x30] sm:$0xf]
        %v2577 = vld [vmem:[%s2563 + $0x34] sm:$0xf]
        %v2578 = vld [vmem:[%s2563 + $0x38] sm:$0xf]
        %v2579 = vld [vmem:[%s2563 + $0x3c] sm:$0xf]
        %v2596 = vunpack.c.l.b16 %v2564
        %v2597 = vunpack.c.l.b16 %v2565
        %v2598 = vunpack.c.l.b16 %v2566
        %v2599 = vunpack.c.l.b16 %v2567
        %v2600 = vunpack.c.l.b16 %v2568
        %v2601 = vunpack.c.l.b16 %v2569
        %v2602 = vunpack.c.l.b16 %v2570
        %v2603 = vunpack.c.l.b16 %v2571
        %v2604 = vunpack.c.l.b16 %v2572
        %v2605 = vunpack.c.l.b16 %v2573
        %v2606 = vunpack.c.l.b16 %v2574
        %v2607 = vunpack.c.l.b16 %v2575
        %v2608 = vunpack.c.l.b16 %v2576
        %v2609 = vunpack.c.l.b16 %v2577
        %v2610 = vunpack.c.l.b16 %v2578
        %v2611 = vunpack.c.l.b16 %v2579
        %v2612 = vpack.c.b16 %v2597, %v2596
        %v2613 = vpack.c.b16 %v2599, %v2598
        %v2614 = vpack.c.b16 %v2601, %v2600
        %v2615 = vpack.c.b16 %v2603, %v2602
        %v2616 = vpack.c.b16 %v2605, %v2604
        %v2617 = vpack.c.b16 %v2607, %v2606
        %v2618 = vpack.c.b16 %v2609, %v2608
        %v2619 = vpack.c.b16 %v2611, %v2610
        %2628 = vmatpush.bf16.msra.mxu0 %v2619
        %2629 = vmatpush.bf16.msra.mxu0 %v2618
        %2630 = vmatpush.bf16.msra.mxu0 %v2617
        %2631 = vmatpush.bf16.msra.mxu0 %v2616
        %2632 = vmatpush.bf16.msra.mxu0 %v2615
        %2633 = vmatpush.bf16.msra.mxu0 %v2614
        %2634 = vmatpush.bf16.msra.mxu0 %v2613
        %2635 = vmatpush.bf16.msra.mxu0 %v2612
        %2636 = vmatmul.bf16.gmra.mxu0 %v695
        %v2637 = vpop.f32.mrf.mxu0
        %v2638 = vadd.f32 0.0, %v2637
        %v2639 = vpop.f32.mrf.mxu0
        %v2640 = vadd.f32 0.0, %v2639
        %2641 = vmatmul.bf16.gmra.mxu0 %v696
        %v2642 = vpop.f32.mrf.mxu0
        %v2643 = vadd.f32 0.0, %v2642
        %v2644 = vpop.f32.mrf.mxu0
        %v2645 = vadd.f32 0.0, %v2644
        %2646 = vmatmul.bf16.gmra.mxu0 %v697
        %v2647 = vpop.f32.mrf.mxu0
        %v2648 = vadd.f32 0.0, %v2647
        %v2649 = vpop.f32.mrf.mxu0
        %v2650 = vadd.f32 0.0, %v2649
        %2651 = vmatmul.bf16.gmra.mxu0 %v698
        %v2652 = vpop.f32.mrf.mxu0
        %v2653 = vadd.f32 0.0, %v2652
        %v2654 = vpop.f32.mrf.mxu0
        %v2655 = vadd.f32 0.0, %v2654
        %2656 = vmatmul.bf16.gmra.mxu0 %v699
        %v2657 = vpop.f32.mrf.mxu0
        %v2658 = vadd.f32 0.0, %v2657
        %v2659 = vpop.f32.mrf.mxu0
        %v2660 = vadd.f32 0.0, %v2659
        %2661 = vmatmul.bf16.gmra.mxu0 %v700
        %v2662 = vpop.f32.mrf.mxu0
        %v2663 = vadd.f32 0.0, %v2662
        %v2664 = vpop.f32.mrf.mxu0
        %v2665 = vadd.f32 0.0, %v2664
        %2666 = vmatmul.bf16.gmra.mxu0 %v701
        %v2667 = vpop.f32.mrf.mxu0
        %v2668 = vadd.f32 0.0, %v2667
        %v2669 = vpop.f32.mrf.mxu0
        %v2670 = vadd.f32 0.0, %v2669
        %2671 = vmatmul.bf16.gmra.mxu0 %v702
        %v2672 = vpop.f32.mrf.mxu0
        %v2673 = vadd.f32 0.0, %v2672
        %v2674 = vpop.f32.mrf.mxu0
        %v2675 = vadd.f32 0.0, %v2674
        %2676 = vmatmul.bf16.gmra.mxu0 %v703
        %v2677 = vpop.f32.mrf.mxu0
        %v2678 = vadd.f32 0.0, %v2677
        %v2679 = vpop.f32.mrf.mxu0
        %v2680 = vadd.f32 0.0, %v2679
        %2681 = vmatmul.bf16.gmra.mxu0 %v704
        %v2682 = vpop.f32.mrf.mxu0
        %v2683 = vadd.f32 0.0, %v2682
        %v2684 = vpop.f32.mrf.mxu0
        %v2685 = vadd.f32 0.0, %v2684
        %2686 = vmatmul.bf16.gmra.mxu0 %v705
        %v2687 = vpop.f32.mrf.mxu0
        %v2688 = vadd.f32 0.0, %v2687
        %v2689 = vpop.f32.mrf.mxu0
        %v2690 = vadd.f32 0.0, %v2689
        %2691 = vmatmul.bf16.gmra.mxu0 %v706
        %v2692 = vpop.f32.mrf.mxu0
        %v2693 = vadd.f32 0.0, %v2692
        %v2694 = vpop.f32.mrf.mxu0
        %v2695 = vadd.f32 0.0, %v2694
        %2696 = vmatmul.bf16.gmra.mxu0 %v707
        %v2697 = vpop.f32.mrf.mxu0
        %v2698 = vadd.f32 0.0, %v2697
        %v2699 = vpop.f32.mrf.mxu0
        %v2700 = vadd.f32 0.0, %v2699
        %2701 = vmatmul.bf16.gmra.mxu0 %v708
        %v2702 = vpop.f32.mrf.mxu0
        %v2703 = vadd.f32 0.0, %v2702
        %v2704 = vpop.f32.mrf.mxu0
        %v2705 = vadd.f32 0.0, %v2704
        %2706 = vmatmul.bf16.gmra.mxu0 %v709
        %v2707 = vpop.f32.mrf.mxu0
        %v2708 = vadd.f32 0.0, %v2707
        %v2709 = vpop.f32.mrf.mxu0
        %v2710 = vadd.f32 0.0, %v2709
        %2711 = vmatmul.bf16.gmra.mxu0 %v710
        %v2712 = vpop.f32.mrf.mxu0
        %v2713 = vadd.f32 0.0, %v2712
        %v2714 = vpop.f32.mrf.mxu0
        %v2715 = vadd.f32 0.0, %v2714
        %2716 = vmatmul.bf16.gmra.mxu0 %v711
        %v2717 = vpop.f32.mrf.mxu0
        %v2718 = vadd.f32 0.0, %v2717
        %v2719 = vpop.f32.mrf.mxu0
        %v2720 = vadd.f32 0.0, %v2719
        %2721 = vmatmul.bf16.gmra.mxu0 %v712
        %v2722 = vpop.f32.mrf.mxu0
        %v2723 = vadd.f32 0.0, %v2722
        %v2724 = vpop.f32.mrf.mxu0
        %v2725 = vadd.f32 0.0, %v2724
        %2726 = vmatmul.bf16.gmra.mxu0 %v713
        %v2727 = vpop.f32.mrf.mxu0
        %v2728 = vadd.f32 0.0, %v2727
        %v2729 = vpop.f32.mrf.mxu0
        %v2730 = vadd.f32 0.0, %v2729
        %2731 = vmatmul.bf16.gmra.mxu0 %v714
        %v2732 = vpop.f32.mrf.mxu0
        %v2733 = vadd.f32 0.0, %v2732
        %v2734 = vpop.f32.mrf.mxu0
        %v2735 = vadd.f32 0.0, %v2734
        %2736 = vmatmul.bf16.gmra.mxu0 %v715
        %v2737 = vpop.f32.mrf.mxu0
        %v2738 = vadd.f32 0.0, %v2737
        %v2739 = vpop.f32.mrf.mxu0
        %v2740 = vadd.f32 0.0, %v2739
        %2741 = vmatmul.bf16.gmra.mxu0 %v716
        %v2742 = vpop.f32.mrf.mxu0
        %v2743 = vadd.f32 0.0, %v2742
        %v2744 = vpop.f32.mrf.mxu0
        %v2745 = vadd.f32 0.0, %v2744
        %2746 = vmatmul.bf16.gmra.mxu0 %v717
        %v2747 = vpop.f32.mrf.mxu0
        %v2748 = vadd.f32 0.0, %v2747
        %v2749 = vpop.f32.mrf.mxu0
        %v2750 = vadd.f32 0.0, %v2749
        %2751 = vmatmul.bf16.gmra.mxu0 %v718
        %v2752 = vpop.f32.mrf.mxu0
        %v2753 = vadd.f32 0.0, %v2752
        %v2754 = vpop.f32.mrf.mxu0
        %v2755 = vadd.f32 0.0, %v2754
        %2756 = vdwg.mxu0
        %v2773 = vunpack.c.l.b16 %v2547
        %v2774 = vunpack.c.l.b16 %v2548
        %v2775 = vunpack.c.l.b16 %v2549
        %v2776 = vunpack.c.l.b16 %v2550
        %v2777 = vunpack.c.l.b16 %v2551
        %v2778 = vunpack.c.l.b16 %v2552
        %v2779 = vunpack.c.l.b16 %v2553
        %v2780 = vunpack.c.l.b16 %v2554
        %v2781 = vunpack.c.l.b16 %v2555
        %v2782 = vunpack.c.l.b16 %v2556
        %v2783 = vunpack.c.l.b16 %v2557
        %v2784 = vunpack.c.l.b16 %v2558
        %v2785 = vunpack.c.l.b16 %v2559
        %v2786 = vunpack.c.l.b16 %v2560
        %v2787 = vunpack.c.l.b16 %v2561
        %v2788 = vunpack.c.l.b16 %v2562
        %v2789 = vpack.c.b16 %v2774, %v2773
        %v2790 = vpack.c.b16 %v2776, %v2775
        %v2791 = vpack.c.b16 %v2778, %v2777
        %v2792 = vpack.c.b16 %v2780, %v2779
        %v2793 = vpack.c.b16 %v2782, %v2781
        %v2794 = vpack.c.b16 %v2784, %v2783
        %v2795 = vpack.c.b16 %v2786, %v2785
        %v2796 = vpack.c.b16 %v2788, %v2787
        %2805 = vmatpush.bf16.msra.mxu0 %v2796
        %2806 = vmatpush.bf16.msra.mxu0 %v2795
        %2807 = vmatpush.bf16.msra.mxu0 %v2794
        %2808 = vmatpush.bf16.msra.mxu0 %v2793
        %2809 = vmatpush.bf16.msra.mxu0 %v2792
        %2810 = vmatpush.bf16.msra.mxu0 %v2791
        %2811 = vmatpush.bf16.msra.mxu0 %v2790
        %2812 = vmatpush.bf16.msra.mxu0 %v2789
        %2813 = vmatmul.bf16.gmra.mxu0 %v1000
        %v2814 = vpop.f32.mrf.mxu0
        %v2815 = vadd.f32 %v2638, %v2814
        %v2816 = vpop.f32.mrf.mxu0
        %v2817 = vadd.f32 %v2640, %v2816
        %2818 = vmatmul.bf16.gmra.mxu0 %v1001
        %v2819 = vpop.f32.mrf.mxu0
        %v2820 = vadd.f32 %v2643, %v2819
        %v2821 = vpop.f32.mrf.mxu0
        %v2822 = vadd.f32 %v2645, %v2821
        %2823 = vmatmul.bf16.gmra.mxu0 %v1002
        %v2824 = vpop.f32.mrf.mxu0
        %v2825 = vadd.f32 %v2648, %v2824
        %v2826 = vpop.f32.mrf.mxu0
        %v2827 = vadd.f32 %v2650, %v2826
        %2828 = vmatmul.bf16.gmra.mxu0 %v1003
        %v2829 = vpop.f32.mrf.mxu0
        %v2830 = vadd.f32 %v2653, %v2829
        %v2831 = vpop.f32.mrf.mxu0
        %v2832 = vadd.f32 %v2655, %v2831
        %2833 = vmatmul.bf16.gmra.mxu0 %v1004
        %v2834 = vpop.f32.mrf.mxu0
        %v2835 = vadd.f32 %v2658, %v2834
        %v2836 = vpop.f32.mrf.mxu0
        %v2837 = vadd.f32 %v2660, %v2836
        %2838 = vmatmul.bf16.gmra.mxu0 %v1005
        %v2839 = vpop.f32.mrf.mxu0
        %v2840 = vadd.f32 %v2663, %v2839
        %v2841 = vpop.f32.mrf.mxu0
        %v2842 = vadd.f32 %v2665, %v2841
        %2843 = vmatmul.bf16.gmra.mxu0 %v1006
        %v2844 = vpop.f32.mrf.mxu0
        %v2845 = vadd.f32 %v2668, %v2844
        %v2846 = vpop.f32.mrf.mxu0
        %v2847 = vadd.f32 %v2670, %v2846
        %2848 = vmatmul.bf16.gmra.mxu0 %v1007
        %v2849 = vpop.f32.mrf.mxu0
        %v2850 = vadd.f32 %v2673, %v2849
        %v2851 = vpop.f32.mrf.mxu0
        %v2852 = vadd.f32 %v2675, %v2851
        %2853 = vmatmul.bf16.gmra.mxu0 %v1008
        %v2854 = vpop.f32.mrf.mxu0
        %v2855 = vadd.f32 %v2678, %v2854
        %v2856 = vpop.f32.mrf.mxu0
        %v2857 = vadd.f32 %v2680, %v2856
        %2858 = vmatmul.bf16.gmra.mxu0 %v1009
        %v2859 = vpop.f32.mrf.mxu0
        %v2860 = vadd.f32 %v2683, %v2859
        %v2861 = vpop.f32.mrf.mxu0
        %v2862 = vadd.f32 %v2685, %v2861
        %2863 = vmatmul.bf16.gmra.mxu0 %v1010
        %v2864 = vpop.f32.mrf.mxu0
        %v2865 = vadd.f32 %v2688, %v2864
        %v2866 = vpop.f32.mrf.mxu0
        %v2867 = vadd.f32 %v2690, %v2866
        %2868 = vmatmul.bf16.gmra.mxu0 %v1011
        %v2869 = vpop.f32.mrf.mxu0
        %v2870 = vadd.f32 %v2693, %v2869
        %v2871 = vpop.f32.mrf.mxu0
        %v2872 = vadd.f32 %v2695, %v2871
        %2873 = vmatmul.bf16.gmra.mxu0 %v1012
        %v2874 = vpop.f32.mrf.mxu0
        %v2875 = vadd.f32 %v2698, %v2874
        %v2876 = vpop.f32.mrf.mxu0
        %v2877 = vadd.f32 %v2700, %v2876
        %2878 = vmatmul.bf16.gmra.mxu0 %v1013
        %v2879 = vpop.f32.mrf.mxu0
        %v2880 = vadd.f32 %v2703, %v2879
        %v2881 = vpop.f32.mrf.mxu0
        %v2882 = vadd.f32 %v2705, %v2881
        %2883 = vmatmul.bf16.gmra.mxu0 %v1014
        %v2884 = vpop.f32.mrf.mxu0
        %v2885 = vadd.f32 %v2708, %v2884
        %v2886 = vpop.f32.mrf.mxu0
        %v2887 = vadd.f32 %v2710, %v2886
        %2888 = vmatmul.bf16.gmra.mxu0 %v1015
        %v2889 = vpop.f32.mrf.mxu0
        %v2890 = vadd.f32 %v2713, %v2889
        %v2891 = vpop.f32.mrf.mxu0
        %v2892 = vadd.f32 %v2715, %v2891
        %2893 = vmatmul.bf16.gmra.mxu0 %v1016
        %v2894 = vpop.f32.mrf.mxu0
        %v2895 = vadd.f32 %v2718, %v2894
        %v2896 = vpop.f32.mrf.mxu0
        %v2897 = vadd.f32 %v2720, %v2896
        %2898 = vmatmul.bf16.gmra.mxu0 %v1017
        %v2899 = vpop.f32.mrf.mxu0
        %v2900 = vadd.f32 %v2723, %v2899
        %v2901 = vpop.f32.mrf.mxu0
        %v2902 = vadd.f32 %v2725, %v2901
        %2903 = vmatmul.bf16.gmra.mxu0 %v1018
        %v2904 = vpop.f32.mrf.mxu0
        %v2905 = vadd.f32 %v2728, %v2904
        %v2906 = vpop.f32.mrf.mxu0
        %v2907 = vadd.f32 %v2730, %v2906
        %2908 = vmatmul.bf16.gmra.mxu0 %v1019
        %v2909 = vpop.f32.mrf.mxu0
        %v2910 = vadd.f32 %v2733, %v2909
        %v2911 = vpop.f32.mrf.mxu0
        %v2912 = vadd.f32 %v2735, %v2911
        %2913 = vmatmul.bf16.gmra.mxu0 %v1020
        %v2914 = vpop.f32.mrf.mxu0
        %v2915 = vadd.f32 %v2738, %v2914
        %v2916 = vpop.f32.mrf.mxu0
        %v2917 = vadd.f32 %v2740, %v2916
        %2918 = vmatmul.bf16.gmra.mxu0 %v1021
        %v2919 = vpop.f32.mrf.mxu0
        %v2920 = vadd.f32 %v2743, %v2919
        %v2921 = vpop.f32.mrf.mxu0
        %v2922 = vadd.f32 %v2745, %v2921
        %2923 = vmatmul.bf16.gmra.mxu0 %v1022
        %v2924 = vpop.f32.mrf.mxu0
        %v2925 = vadd.f32 %v2748, %v2924
        %v2926 = vpop.f32.mrf.mxu0
        %v2927 = vadd.f32 %v2750, %v2926
        %2928 = vmatmul.bf16.gmra.mxu0 %v1023
        %v2929 = vpop.f32.mrf.mxu0
        %v2930 = vadd.f32 %v2753, %v2929
        %v2931 = vpop.f32.mrf.mxu0
        %v2932 = vadd.f32 %v2755, %v2931
        %2933 = vdwg.mxu0
        %s2934 = scalar_lea.vmem %s343, 512 [#allocation6]
        %v2935 = vld [vmem:[%s2934] sm:$0xf]
        %v2936 = vld [vmem:[%s2934 + $0x4] sm:$0xf]
        %v2937 = vld [vmem:[%s2934 + $0x8] sm:$0xf]
        %v2938 = vld [vmem:[%s2934 + $0xc] sm:$0xf]
        %v2939 = vld [vmem:[%s2934 + $0x10] sm:$0xf]
        %v2940 = vld [vmem:[%s2934 + $0x14] sm:$0xf]
        %v2941 = vld [vmem:[%s2934 + $0x18] sm:$0xf]
        %v2942 = vld [vmem:[%s2934 + $0x1c] sm:$0xf]
        %v2943 = vld [vmem:[%s2934 + $0x20] sm:$0xf]
        %v2944 = vld [vmem:[%s2934 + $0x24] sm:$0xf]
        %v2945 = vld [vmem:[%s2934 + $0x28] sm:$0xf]
        %v2946 = vld [vmem:[%s2934 + $0x2c] sm:$0xf]
        %v2947 = vld [vmem:[%s2934 + $0x30] sm:$0xf]
        %v2948 = vld [vmem:[%s2934 + $0x34] sm:$0xf]
        %v2949 = vld [vmem:[%s2934 + $0x38] sm:$0xf]
        %v2950 = vld [vmem:[%s2934 + $0x3c] sm:$0xf]
        %v2967 = vunpack.c.l.b16 %v2935
        %v2968 = vunpack.c.l.b16 %v2936
        %v2969 = vunpack.c.l.b16 %v2937
        %v2970 = vunpack.c.l.b16 %v2938
        %v2971 = vunpack.c.l.b16 %v2939
        %v2972 = vunpack.c.l.b16 %v2940
        %v2973 = vunpack.c.l.b16 %v2941
        %v2974 = vunpack.c.l.b16 %v2942
        %v2975 = vunpack.c.l.b16 %v2943
        %v2976 = vunpack.c.l.b16 %v2944
        %v2977 = vunpack.c.l.b16 %v2945
        %v2978 = vunpack.c.l.b16 %v2946
        %v2979 = vunpack.c.l.b16 %v2947
        %v2980 = vunpack.c.l.b16 %v2948
        %v2981 = vunpack.c.l.b16 %v2949
        %v2982 = vunpack.c.l.b16 %v2950
        %v2983 = vpack.c.b16 %v2968, %v2967
        %v2984 = vpack.c.b16 %v2970, %v2969
        %v2985 = vpack.c.b16 %v2972, %v2971
        %v2986 = vpack.c.b16 %v2974, %v2973
        %v2987 = vpack.c.b16 %v2976, %v2975
        %v2988 = vpack.c.b16 %v2978, %v2977
        %v2989 = vpack.c.b16 %v2980, %v2979
        %v2990 = vpack.c.b16 %v2982, %v2981
        %2999 = vmatpush.bf16.msra.mxu0 %v2990
        %3000 = vmatpush.bf16.msra.mxu0 %v2989
        %3001 = vmatpush.bf16.msra.mxu0 %v2988
        %3002 = vmatpush.bf16.msra.mxu0 %v2987
        %3003 = vmatpush.bf16.msra.mxu0 %v2986
        %3004 = vmatpush.bf16.msra.mxu0 %v2985
        %3005 = vmatpush.bf16.msra.mxu0 %v2984
        %3006 = vmatpush.bf16.msra.mxu0 %v2983
        %3007 = vmatmul.bf16.gmra.mxu0 %v1322
        %v3008 = vpop.f32.mrf.mxu0
        %v3009 = vadd.f32 0.0, %v3008
        %v3010 = vpop.f32.mrf.mxu0
        %v3011 = vadd.f32 0.0, %v3010
        %3012 = vmatmul.bf16.gmra.mxu0 %v1323
        %v3013 = vpop.f32.mrf.mxu0
        %v3014 = vadd.f32 0.0, %v3013
        %v3015 = vpop.f32.mrf.mxu0
        %v3016 = vadd.f32 0.0, %v3015
        %3017 = vmatmul.bf16.gmra.mxu0 %v1324
        %v3018 = vpop.f32.mrf.mxu0
        %v3019 = vadd.f32 0.0, %v3018
        %v3020 = vpop.f32.mrf.mxu0
        %v3021 = vadd.f32 0.0, %v3020
        %3022 = vmatmul.bf16.gmra.mxu0 %v1325
        %v3023 = vpop.f32.mrf.mxu0
        %v3024 = vadd.f32 0.0, %v3023
        %v3025 = vpop.f32.mrf.mxu0
        %v3026 = vadd.f32 0.0, %v3025
        %3027 = vmatmul.bf16.gmra.mxu0 %v1326
        %v3028 = vpop.f32.mrf.mxu0
        %v3029 = vadd.f32 0.0, %v3028
        %v3030 = vpop.f32.mrf.mxu0
        %v3031 = vadd.f32 0.0, %v3030
        %3032 = vmatmul.bf16.gmra.mxu0 %v1327
        %v3033 = vpop.f32.mrf.mxu0
        %v3034 = vadd.f32 0.0, %v3033
        %v3035 = vpop.f32.mrf.mxu0
        %v3036 = vadd.f32 0.0, %v3035
        %3037 = vmatmul.bf16.gmra.mxu0 %v1328
        %v3038 = vpop.f32.mrf.mxu0
        %v3039 = vadd.f32 0.0, %v3038
        %v3040 = vpop.f32.mrf.mxu0
        %v3041 = vadd.f32 0.0, %v3040
        %3042 = vmatmul.bf16.gmra.mxu0 %v1329
        %v3043 = vpop.f32.mrf.mxu0
        %v3044 = vadd.f32 0.0, %v3043
        %v3045 = vpop.f32.mrf.mxu0
        %v3046 = vadd.f32 0.0, %v3045
        %3047 = vmatmul.bf16.gmra.mxu0 %v1330
        %v3048 = vpop.f32.mrf.mxu0
        %v3049 = vadd.f32 0.0, %v3048
        %v3050 = vpop.f32.mrf.mxu0
        %v3051 = vadd.f32 0.0, %v3050
        %3052 = vmatmul.bf16.gmra.mxu0 %v1331
        %v3053 = vpop.f32.mrf.mxu0
        %v3054 = vadd.f32 0.0, %v3053
        %v3055 = vpop.f32.mrf.mxu0
        %v3056 = vadd.f32 0.0, %v3055
        %3057 = vmatmul.bf16.gmra.mxu0 %v1332
        %v3058 = vpop.f32.mrf.mxu0
        %v3059 = vadd.f32 0.0, %v3058
        %v3060 = vpop.f32.mrf.mxu0
        %v3061 = vadd.f32 0.0, %v3060
        %3062 = vmatmul.bf16.gmra.mxu0 %v1333
        %v3063 = vpop.f32.mrf.mxu0
        %v3064 = vadd.f32 0.0, %v3063
        %v3065 = vpop.f32.mrf.mxu0
        %v3066 = vadd.f32 0.0, %v3065
        %3067 = vmatmul.bf16.gmra.mxu0 %v1334
        %v3068 = vpop.f32.mrf.mxu0
        %v3069 = vadd.f32 0.0, %v3068
        %v3070 = vpop.f32.mrf.mxu0
        %v3071 = vadd.f32 0.0, %v3070
        %3072 = vmatmul.bf16.gmra.mxu0 %v1335
        %v3073 = vpop.f32.mrf.mxu0
        %v3074 = vadd.f32 0.0, %v3073
        %v3075 = vpop.f32.mrf.mxu0
        %v3076 = vadd.f32 0.0, %v3075
        %3077 = vmatmul.bf16.gmra.mxu0 %v1336
        %v3078 = vpop.f32.mrf.mxu0
        %v3079 = vadd.f32 0.0, %v3078
        %v3080 = vpop.f32.mrf.mxu0
        %v3081 = vadd.f32 0.0, %v3080
        %3082 = vmatmul.bf16.gmra.mxu0 %v1337
        %v3083 = vpop.f32.mrf.mxu0
        %v3084 = vadd.f32 0.0, %v3083
        %v3085 = vpop.f32.mrf.mxu0
        %v3086 = vadd.f32 0.0, %v3085
        %3087 = vmatmul.bf16.gmra.mxu0 %v1338
        %v3088 = vpop.f32.mrf.mxu0
        %v3089 = vadd.f32 0.0, %v3088
        %v3090 = vpop.f32.mrf.mxu0
        %v3091 = vadd.f32 0.0, %v3090
        %3092 = vmatmul.bf16.gmra.mxu0 %v1339
        %v3093 = vpop.f32.mrf.mxu0
        %v3094 = vadd.f32 0.0, %v3093
        %v3095 = vpop.f32.mrf.mxu0
        %v3096 = vadd.f32 0.0, %v3095
        %3097 = vmatmul.bf16.gmra.mxu0 %v1340
        %v3098 = vpop.f32.mrf.mxu0
        %v3099 = vadd.f32 0.0, %v3098
        %v3100 = vpop.f32.mrf.mxu0
        %v3101 = vadd.f32 0.0, %v3100
        %3102 = vmatmul.bf16.gmra.mxu0 %v1341
        %v3103 = vpop.f32.mrf.mxu0
        %v3104 = vadd.f32 0.0, %v3103
        %v3105 = vpop.f32.mrf.mxu0
        %v3106 = vadd.f32 0.0, %v3105
        %3107 = vmatmul.bf16.gmra.mxu0 %v1342
        %v3108 = vpop.f32.mrf.mxu0
        %v3109 = vadd.f32 0.0, %v3108
        %v3110 = vpop.f32.mrf.mxu0
        %v3111 = vadd.f32 0.0, %v3110
        %3112 = vmatmul.bf16.gmra.mxu0 %v1343
        %v3113 = vpop.f32.mrf.mxu0
        %v3114 = vadd.f32 0.0, %v3113
        %v3115 = vpop.f32.mrf.mxu0
        %v3116 = vadd.f32 0.0, %v3115
        %3117 = vmatmul.bf16.gmra.mxu0 %v1344
        %v3118 = vpop.f32.mrf.mxu0
        %v3119 = vadd.f32 0.0, %v3118
        %v3120 = vpop.f32.mrf.mxu0
        %v3121 = vadd.f32 0.0, %v3120
        %3122 = vmatmul.bf16.gmra.mxu0 %v1345
        %v3123 = vpop.f32.mrf.mxu0
        %v3124 = vadd.f32 0.0, %v3123
        %v3125 = vpop.f32.mrf.mxu0
        %v3126 = vadd.f32 0.0, %v3125
        %3127 = vdwg.mxu0
        %v3128 = vadd.f32 %v2815, %v3009
        %v3129 = vadd.f32 %v2817, %v3011
        %v3130 = vadd.f32 %v2820, %v3014
        %v3131 = vadd.f32 %v2822, %v3016
        %v3132 = vadd.f32 %v2825, %v3019
        %v3133 = vadd.f32 %v2827, %v3021
        %v3134 = vadd.f32 %v2830, %v3024
        %v3135 = vadd.f32 %v2832, %v3026
        %v3136 = vadd.f32 %v2835, %v3029
        %v3137 = vadd.f32 %v2837, %v3031
        %v3138 = vadd.f32 %v2840, %v3034
        %v3139 = vadd.f32 %v2842, %v3036
        %v3140 = vadd.f32 %v2845, %v3039
        %v3141 = vadd.f32 %v2847, %v3041
        %v3142 = vadd.f32 %v2850, %v3044
        %v3143 = vadd.f32 %v2852, %v3046
        %v3144 = vadd.f32 %v2855, %v3049
        %v3145 = vadd.f32 %v2857, %v3051
        %v3146 = vadd.f32 %v2860, %v3054
        %v3147 = vadd.f32 %v2862, %v3056
        %v3148 = vadd.f32 %v2865, %v3059
        %v3149 = vadd.f32 %v2867, %v3061
        %v3150 = vadd.f32 %v2870, %v3064
        %v3151 = vadd.f32 %v2872, %v3066
        %v3152 = vadd.f32 %v2875, %v3069
        %v3153 = vadd.f32 %v2877, %v3071
        %v3154 = vadd.f32 %v2880, %v3074
        %v3155 = vadd.f32 %v2882, %v3076
        %v3156 = vadd.f32 %v2885, %v3079
        %v3157 = vadd.f32 %v2887, %v3081
        %v3158 = vadd.f32 %v2890, %v3084
        %v3159 = vadd.f32 %v2892, %v3086
        %v3160 = vadd.f32 %v2895, %v3089
        %v3161 = vadd.f32 %v2897, %v3091
        %v3162 = vadd.f32 %v2900, %v3094
        %v3163 = vadd.f32 %v2902, %v3096
        %v3164 = vadd.f32 %v2905, %v3099
        %v3165 = vadd.f32 %v2907, %v3101
        %v3166 = vadd.f32 %v2910, %v3104
        %v3167 = vadd.f32 %v2912, %v3106
        %v3168 = vadd.f32 %v2915, %v3109
        %v3169 = vadd.f32 %v2917, %v3111
        %v3170 = vadd.f32 %v2920, %v3114
        %v3171 = vadd.f32 %v2922, %v3116
        %v3172 = vadd.f32 %v2925, %v3119
        %v3173 = vadd.f32 %v2927, %v3121
        %v3174 = vadd.f32 %v2930, %v3124
        %v3175 = vadd.f32 %v2932, %v3126
        %v3176 = vld [vmem:[#allocation2] sm:$0xff]
        %v3177 = vld [vmem:[#allocation2 + $0x8] sm:$0xff]
        %v3178 = vld [vmem:[#allocation2 + $0x10] sm:$0xff]
        %v3179 = vld [vmem:[#allocation2 + $0x18] sm:$0xff]
        %v3180 = vld [vmem:[#allocation2 + $0x20] sm:$0xff]
        %v3181 = vld [vmem:[#allocation2 + $0x28] sm:$0xff]
        %v3182 = vld [vmem:[#allocation2 + $0x30] sm:$0xff]
        %v3183 = vld [vmem:[#allocation2 + $0x38] sm:$0xff]
        %v3184 = vld [vmem:[#allocation2 + $0x40] sm:$0xff]
        %v3185 = vld [vmem:[#allocation2 + $0x48] sm:$0xff]
        %v3186 = vld [vmem:[#allocation2 + $0x50] sm:$0xff]
        %v3187 = vld [vmem:[#allocation2 + $0x58] sm:$0xff]
        %v3188 = vld [vmem:[#allocation2 + $0x60] sm:$0xff]
        %v3189 = vld [vmem:[#allocation2 + $0x68] sm:$0xff]
        %v3190 = vld [vmem:[#allocation2 + $0x70] sm:$0xff]
        %v3191 = vld [vmem:[#allocation2 + $0x78] sm:$0xff]
        %v3192 = vld [vmem:[#allocation2 + $0x80] sm:$0xff]
        %v3193 = vld [vmem:[#allocation2 + $0x88] sm:$0xff]
        %v3194 = vld [vmem:[#allocation2 + $0x90] sm:$0xff]
        %v3195 = vld [vmem:[#allocation2 + $0x98] sm:$0xff]
        %v3196 = vld [vmem:[#allocation2 + $0xa0] sm:$0xff]
        %v3197 = vld [vmem:[#allocation2 + $0xa8] sm:$0xff]
        %v3198 = vld [vmem:[#allocation2 + $0xb0] sm:$0xff]
        %v3199 = vld [vmem:[#allocation2 + $0xb8] sm:$0xff]
        %v3200 = vld [vmem:[#allocation2 + $0xc0] sm:$0xff]
        %v3201 = vld [vmem:[#allocation2 + $0xc8] sm:$0xff]
        %v3202 = vld [vmem:[#allocation2 + $0xd0] sm:$0xff]
        %v3203 = vld [vmem:[#allocation2 + $0xd8] sm:$0xff]
        %v3204 = vld [vmem:[#allocation2 + $0xe0] sm:$0xff]
        %v3205 = vld [vmem:[#allocation2 + $0xe8] sm:$0xff]
        %v3206 = vld [vmem:[#allocation2 + $0xf0] sm:$0xff]
        %v3207 = vld [vmem:[#allocation2 + $0xf8] sm:$0xff]
        %vm3256 = vcmask 1045504
        %v3257 = vrot.slane %v3128, 2
        %v3258 = vrot.slane %v3129, 2
        %v3259 = vsel %vm3256, %v3257, %v3258
        %v3260 = vrot.slane %v3130, 2
        %v3261 = vsel %vm3256, %v3258, %v3260
        %v3262 = vrot.slane %v3131, 2
        %v3263 = vrot.slane %v3132, 2
        %v3264 = vsel %vm3256, %v3262, %v3263
        %v3265 = vrot.slane %v3133, 2
        %v3266 = vsel %vm3256, %v3263, %v3265
        %v3267 = vrot.slane %v3134, 2
        %v3268 = vrot.slane %v3135, 2
        %v3269 = vsel %vm3256, %v3267, %v3268
        %v3270 = vrot.slane %v3136, 2
        %v3271 = vsel %vm3256, %v3268, %v3270
        %v3272 = vrot.slane %v3137, 2
        %v3273 = vrot.slane %v3138, 2
        %v3274 = vsel %vm3256, %v3272, %v3273
        %v3275 = vrot.slane %v3139, 2
        %v3276 = vsel %vm3256, %v3273, %v3275
        %v3277 = vrot.slane %v3140, 2
        %v3278 = vrot.slane %v3141, 2
        %v3279 = vsel %vm3256, %v3277, %v3278
        %v3280 = vrot.slane %v3142, 2
        %v3281 = vsel %vm3256, %v3278, %v3280
        %v3282 = vrot.slane %v3143, 2
        %v3283 = vrot.slane %v3144, 2
        %v3284 = vsel %vm3256, %v3282, %v3283
        %v3285 = vrot.slane %v3145, 2
        %v3286 = vsel %vm3256, %v3283, %v3285
        %v3287 = vrot.slane %v3146, 2
        %v3288 = vrot.slane %v3147, 2
        %v3289 = vsel %vm3256, %v3287, %v3288
        %v3290 = vrot.slane %v3148, 2
        %v3291 = vsel %vm3256, %v3288, %v3290
        %v3292 = vrot.slane %v3149, 2
        %v3293 = vrot.slane %v3150, 2
        %v3294 = vsel %vm3256, %v3292, %v3293
        %v3295 = vrot.slane %v3151, 2
        %v3296 = vsel %vm3256, %v3293, %v3295
        %v3297 = vrot.slane %v3152, 2
        %v3298 = vrot.slane %v3153, 2
        %v3299 = vsel %vm3256, %v3297, %v3298
        %v3300 = vrot.slane %v3154, 2
        %v3301 = vsel %vm3256, %v3298, %v3300
        %v3302 = vrot.slane %v3155, 2
        %v3303 = vrot.slane %v3156, 2
        %v3304 = vsel %vm3256, %v3302, %v3303
        %v3305 = vrot.slane %v3157, 2
        %v3306 = vsel %vm3256, %v3303, %v3305
        %v3307 = vrot.slane %v3158, 2
        %v3308 = vrot.slane %v3159, 2
        %v3309 = vsel %vm3256, %v3307, %v3308
        %v3310 = vrot.slane %v3160, 2
        %v3311 = vsel %vm3256, %v3308, %v3310
        %v3312 = vrot.slane %v3161, 2
        %v3313 = vrot.slane %v3162, 2
        %v3314 = vsel %vm3256, %v3312, %v3313
        %v3315 = vrot.slane %v3163, 2
        %v3316 = vsel %vm3256, %v3313, %v3315
        %v3317 = vrot.slane %v3164, 2
        %v3318 = vrot.slane %v3165, 2
        %v3319 = vsel %vm3256, %v3317, %v3318
        %v3320 = vrot.slane %v3166, 2
        %v3321 = vsel %vm3256, %v3318, %v3320
        %v3322 = vrot.slane %v3167, 2
        %v3323 = vrot.slane %v3168, 2
        %v3324 = vsel %vm3256, %v3322, %v3323
        %v3325 = vrot.slane %v3169, 2
        %v3326 = vsel %vm3256, %v3323, %v3325
        %v3327 = vrot.slane %v3170, 2
        %v3328 = vrot.slane %v3171, 2
        %v3329 = vsel %vm3256, %v3327, %v3328
        %v3330 = vrot.slane %v3172, 2
        %v3331 = vsel %vm3256, %v3328, %v3330
        %v3332 = vrot.slane %v3173, 2
        %v3333 = vrot.slane %v3174, 2
        %v3334 = vsel %vm3256, %v3332, %v3333
        %v3335 = vrot.slane %v3175, 2
        %v3336 = vsel %vm3256, %v3333, %v3335
        %v3369 = vadd.f32 %v3176, %v3259
        %v3370 = vadd.f32 %v3177, %v3261
        %v3371 = vadd.f32 %v3178, %v3264
        %v3372 = vadd.f32 %v3179, %v3266
        %v3373 = vadd.f32 %v3180, %v3269
        %v3374 = vadd.f32 %v3181, %v3271
        %v3375 = vadd.f32 %v3182, %v3274
        %v3376 = vadd.f32 %v3183, %v3276
        %v3377 = vadd.f32 %v3184, %v3279
        %v3378 = vadd.f32 %v3185, %v3281
        %v3379 = vadd.f32 %v3186, %v3284
        %v3380 = vadd.f32 %v3187, %v3286
        %v3381 = vadd.f32 %v3188, %v3289
        %v3382 = vadd.f32 %v3189, %v3291
        %v3383 = vadd.f32 %v3190, %v3294
        %v3384 = vadd.f32 %v3191, %v3296
        %v3385 = vadd.f32 %v3192, %v3299
        %v3386 = vadd.f32 %v3193, %v3301
        %v3387 = vadd.f32 %v3194, %v3304
        %v3388 = vadd.f32 %v3195, %v3306
        %v3389 = vadd.f32 %v3196, %v3309
        %v3390 = vadd.f32 %v3197, %v3311
        %v3391 = vadd.f32 %v3198, %v3314
        %v3392 = vadd.f32 %v3199, %v3316
        %v3393 = vadd.f32 %v3200, %v3319
        %v3394 = vadd.f32 %v3201, %v3321
        %v3395 = vadd.f32 %v3202, %v3324
        %v3396 = vadd.f32 %v3203, %v3326
        %v3397 = vadd.f32 %v3204, %v3329
        %v3398 = vadd.f32 %v3205, %v3331
        %v3399 = vadd.f32 %v3206, %v3334
        %v3400 = vadd.f32 %v3207, %v3336
        %3401 = vst [vmem:[#allocation2] sm:$0xff] %v3369
        %3402 = vst [vmem:[#allocation2 + $0x8] sm:$0xff] %v3370
        %3403 = vst [vmem:[#allocation2 + $0x10] sm:$0xff] %v3371
        %3404 = vst [vmem:[#allocation2 + $0x18] sm:$0xff] %v3372
        %3405 = vst [vmem:[#allocation2 + $0x20] sm:$0xff] %v3373
        %3406 = vst [vmem:[#allocation2 + $0x28] sm:$0xff] %v3374
        %3407 = vst [vmem:[#allocation2 + $0x30] sm:$0xff] %v3375
        %3408 = vst [vmem:[#allocation2 + $0x38] sm:$0xff] %v3376
        %3409 = vst [vmem:[#allocation2 + $0x40] sm:$0xff] %v3377
        %3410 = vst [vmem:[#allocation2 + $0x48] sm:$0xff] %v3378
        %3411 = vst [vmem:[#allocation2 + $0x50] sm:$0xff] %v3379
        %3412 = vst [vmem:[#allocation2 + $0x58] sm:$0xff] %v3380
        %3413 = vst [vmem:[#allocation2 + $0x60] sm:$0xff] %v3381
        %3414 = vst [vmem:[#allocation2 + $0x68] sm:$0xff] %v3382
        %3415 = vst [vmem:[#allocation2 + $0x70] sm:$0xff] %v3383
        %3416 = vst [vmem:[#allocation2 + $0x78] sm:$0xff] %v3384
        %3417 = vst [vmem:[#allocation2 + $0x80] sm:$0xff] %v3385
        %3418 = vst [vmem:[#allocation2 + $0x88] sm:$0xff] %v3386
        %3419 = vst [vmem:[#allocation2 + $0x90] sm:$0xff] %v3387
        %3420 = vst [vmem:[#allocation2 + $0x98] sm:$0xff] %v3388
        %3421 = vst [vmem:[#allocation2 + $0xa0] sm:$0xff] %v3389
        %3422 = vst [vmem:[#allocation2 + $0xa8] sm:$0xff] %v3390
        %3423 = vst [vmem:[#allocation2 + $0xb0] sm:$0xff] %v3391
        %3424 = vst [vmem:[#allocation2 + $0xb8] sm:$0xff] %v3392
        %3425 = vst [vmem:[#allocation2 + $0xc0] sm:$0xff] %v3393
        %3426 = vst [vmem:[#allocation2 + $0xc8] sm:$0xff] %v3394
        %3427 = vst [vmem:[#allocation2 + $0xd0] sm:$0xff] %v3395
        %3428 = vst [vmem:[#allocation2 + $0xd8] sm:$0xff] %v3396
        %3429 = vst [vmem:[#allocation2 + $0xe0] sm:$0xff] %v3397
        %3430 = vst [vmem:[#allocation2 + $0xe8] sm:$0xff] %v3398
        %3431 = vst [vmem:[#allocation2 + $0xf0] sm:$0xff] %v3399
        %3432 = vst [vmem:[#allocation2 + $0xf8] sm:$0xff] %v3400
        %p3433 = scmp.eq.s32.totalorder %s33, 1
        // Predicated region
        $region61: #{tpu_custom_call.1} parent=43 // pred_check
          %p3434 = pneg %p3433
        $region62: #{tpu_custom_call.1} parent=43 // pred_check_branch
          %3436 = sbr.rel (%p3434) target = $region64
        $region63: #{tpu_custom_call.1} parent=43 // pred_region
          %v3437 = vld [vmem:[#allocation2] sm:$0xff]
          %v3438 = vld [vmem:[#allocation2 + $0x8] sm:$0xff]
          %v3439 = vld [vmem:[#allocation2 + $0x10] sm:$0xff]
          %v3440 = vld [vmem:[#allocation2 + $0x18] sm:$0xff]
          %v3441 = vld [vmem:[#allocation2 + $0x20] sm:$0xff]
          %v3442 = vld [vmem:[#allocation2 + $0x28] sm:$0xff]
          %v3443 = vld [vmem:[#allocation2 + $0x30] sm:$0xff]
          %v3444 = vld [vmem:[#allocation2 + $0x38] sm:$0xff]
          %v3445 = vld [vmem:[#allocation2 + $0x40] sm:$0xff]
          %v3446 = vld [vmem:[#allocation2 + $0x48] sm:$0xff]
          %v3447 = vld [vmem:[#allocation2 + $0x50] sm:$0xff]
          %v3448 = vld [vmem:[#allocation2 + $0x58] sm:$0xff]
          %v3449 = vld [vmem:[#allocation2 + $0x60] sm:$0xff]
          %v3450 = vld [vmem:[#allocation2 + $0x68] sm:$0xff]
          %v3451 = vld [vmem:[#allocation2 + $0x70] sm:$0xff]
          %v3452 = vld [vmem:[#allocation2 + $0x78] sm:$0xff]
          %v3453 = vld [vmem:[#allocation2 + $0x80] sm:$0xff]
          %v3454 = vld [vmem:[#allocation2 + $0x88] sm:$0xff]
          %v3455 = vld [vmem:[#allocation2 + $0x90] sm:$0xff]
          %v3456 = vld [vmem:[#allocation2 + $0x98] sm:$0xff]
          %v3457 = vld [vmem:[#allocation2 + $0xa0] sm:$0xff]
          %v3458 = vld [vmem:[#allocation2 + $0xa8] sm:$0xff]
          %v3459 = vld [vmem:[#allocation2 + $0xb0] sm:$0xff]
          %v3460 = vld [vmem:[#allocation2 + $0xb8] sm:$0xff]
          %v3461 = vld [vmem:[#allocation2 + $0xc0] sm:$0xff]
          %v3462 = vld [vmem:[#allocation2 + $0xc8] sm:$0xff]
          %v3463 = vld [vmem:[#allocation2 + $0xd0] sm:$0xff]
          %v3464 = vld [vmem:[#allocation2 + $0xd8] sm:$0xff]
          %v3465 = vld [vmem:[#allocation2 + $0xe0] sm:$0xff]
          %v3466 = vld [vmem:[#allocation2 + $0xe8] sm:$0xff]
          %v3467 = vld [vmem:[#allocation2 + $0xf0] sm:$0xff]
          %v3468 = vld [vmem:[#allocation2 + $0xf8] sm:$0xff]
          %v3469 = vld [vmem:[%s2] sm:$0x1]
          %v3471 = vperm.slane %v3469, 0
          %v3473 = vmul.f32 %v3437, %v3471
          %v3474 = vmul.f32 %v3438, %v3471
          %v3475 = vmul.f32 %v3439, %v3471
          %v3476 = vmul.f32 %v3440, %v3471
          %v3477 = vmul.f32 %v3441, %v3471
          %v3478 = vmul.f32 %v3442, %v3471
          %v3479 = vmul.f32 %v3443, %v3471
          %v3480 = vmul.f32 %v3444, %v3471
          %v3481 = vmul.f32 %v3445, %v3471
          %v3482 = vmul.f32 %v3446, %v3471
          %v3483 = vmul.f32 %v3447, %v3471
          %v3484 = vmul.f32 %v3448, %v3471
          %v3485 = vmul.f32 %v3449, %v3471
          %v3486 = vmul.f32 %v3450, %v3471
          %v3487 = vmul.f32 %v3451, %v3471
          %v3488 = vmul.f32 %v3452, %v3471
          %v3489 = vmul.f32 %v3453, %v3471
          %v3490 = vmul.f32 %v3454, %v3471
          %v3491 = vmul.f32 %v3455, %v3471
          %v3492 = vmul.f32 %v3456, %v3471
          %v3493 = vmul.f32 %v3457, %v3471
          %v3494 = vmul.f32 %v3458, %v3471
          %v3495 = vmul.f32 %v3459, %v3471
          %v3496 = vmul.f32 %v3460, %v3471
          %v3497 = vmul.f32 %v3461, %v3471
          %v3498 = vmul.f32 %v3462, %v3471
          %v3499 = vmul.f32 %v3463, %v3471
          %v3500 = vmul.f32 %v3464, %v3471
          %v3501 = vmul.f32 %v3465, %v3471
          %v3502 = vmul.f32 %v3466, %v3471
          %v3503 = vmul.f32 %v3467, %v3471
          %v3504 = vmul.f32 %v3468, %v3471
          %v3505 = vld [vmem:[%s3] sm:$0x1]
          %v3507 = vperm.slane %v3505, 0
          %v3509 = vadd.f32 %v3473, %v3507
          %v3510 = vadd.f32 %v3474, %v3507
          %v3511 = vadd.f32 %v3475, %v3507
          %v3512 = vadd.f32 %v3476, %v3507
          %v3513 = vadd.f32 %v3477, %v3507
          %v3514 = vadd.f32 %v3478, %v3507
          %v3515 = vadd.f32 %v3479, %v3507
          %v3516 = vadd.f32 %v3480, %v3507
          %v3517 = vadd.f32 %v3481, %v3507
          %v3518 = vadd.f32 %v3482, %v3507
          %v3519 = vadd.f32 %v3483, %v3507
          %v3520 = vadd.f32 %v3484, %v3507
          %v3521 = vadd.f32 %v3485, %v3507
          %v3522 = vadd.f32 %v3486, %v3507
          %v3523 = vadd.f32 %v3487, %v3507
          %v3524 = vadd.f32 %v3488, %v3507
          %v3525 = vadd.f32 %v3489, %v3507
          %v3526 = vadd.f32 %v3490, %v3507
          %v3527 = vadd.f32 %v3491, %v3507
          %v3528 = vadd.f32 %v3492, %v3507
          %v3529 = vadd.f32 %v3493, %v3507
          %v3530 = vadd.f32 %v3494, %v3507
          %v3531 = vadd.f32 %v3495, %v3507
          %v3532 = vadd.f32 %v3496, %v3507
          %v3533 = vadd.f32 %v3497, %v3507
          %v3534 = vadd.f32 %v3498, %v3507
          %v3535 = vadd.f32 %v3499, %v3507
          %v3536 = vadd.f32 %v3500, %v3507
          %v3537 = vadd.f32 %v3501, %v3507
          %v3538 = vadd.f32 %v3502, %v3507
          %v3539 = vadd.f32 %v3503, %v3507
          %v3540 = vadd.f32 %v3504, %v3507
          %v3541 = vmax.f32 %v3509, 0.0
          %v3542 = vmax.f32 %v3510, 0.0
          %v3543 = vmax.f32 %v3511, 0.0
          %v3544 = vmax.f32 %v3512, 0.0
          %v3545 = vmax.f32 %v3513, 0.0
          %v3546 = vmax.f32 %v3514, 0.0
          %v3547 = vmax.f32 %v3515, 0.0
          %v3548 = vmax.f32 %v3516, 0.0
          %v3549 = vmax.f32 %v3517, 0.0
          %v3550 = vmax.f32 %v3518, 0.0
          %v3551 = vmax.f32 %v3519, 0.0
          %v3552 = vmax.f32 %v3520, 0.0
          %v3553 = vmax.f32 %v3521, 0.0
          %v3554 = vmax.f32 %v3522, 0.0
          %v3555 = vmax.f32 %v3523, 0.0
          %v3556 = vmax.f32 %v3524, 0.0
          %v3557 = vmax.f32 %v3525, 0.0
          %v3558 = vmax.f32 %v3526, 0.0
          %v3559 = vmax.f32 %v3527, 0.0
          %v3560 = vmax.f32 %v3528, 0.0
          %v3561 = vmax.f32 %v3529, 0.0
          %v3562 = vmax.f32 %v3530, 0.0
          %v3563 = vmax.f32 %v3531, 0.0
          %v3564 = vmax.f32 %v3532, 0.0
          %v3565 = vmax.f32 %v3533, 0.0
          %v3566 = vmax.f32 %v3534, 0.0
          %v3567 = vmax.f32 %v3535, 0.0
          %v3568 = vmax.f32 %v3536, 0.0
          %v3569 = vmax.f32 %v3537, 0.0
          %v3570 = vmax.f32 %v3538, 0.0
          %v3571 = vmax.f32 %v3539, 0.0
          %v3572 = vmax.f32 %v3540, 0.0
          %v3573 = vpack.c.bf16 %v3541, %v3541
          %v3574 = vpack.c.bf16 %v3542, %v3542
          %v3575 = vpack.c.bf16 %v3543, %v3543
          %v3576 = vpack.c.bf16 %v3544, %v3544
          %v3577 = vpack.c.bf16 %v3545, %v3545
          %v3578 = vpack.c.bf16 %v3546, %v3546
          %v3579 = vpack.c.bf16 %v3547, %v3547
          %v3580 = vpack.c.bf16 %v3548, %v3548
          %v3581 = vpack.c.bf16 %v3549, %v3549
          %v3582 = vpack.c.bf16 %v3550, %v3550
          %v3583 = vpack.c.bf16 %v3551, %v3551
          %v3584 = vpack.c.bf16 %v3552, %v3552
          %v3585 = vpack.c.bf16 %v3553, %v3553
          %v3586 = vpack.c.bf16 %v3554, %v3554
          %v3587 = vpack.c.bf16 %v3555, %v3555
          %v3588 = vpack.c.bf16 %v3556, %v3556
          %v3589 = vpack.c.bf16 %v3557, %v3557
          %v3590 = vpack.c.bf16 %v3558, %v3558
          %v3591 = vpack.c.bf16 %v3559, %v3559
          %v3592 = vpack.c.bf16 %v3560, %v3560
          %v3593 = vpack.c.bf16 %v3561, %v3561
          %v3594 = vpack.c.bf16 %v3562, %v3562
          %v3595 = vpack.c.bf16 %v3563, %v3563
          %v3596 = vpack.c.bf16 %v3564, %v3564
          %v3597 = vpack.c.bf16 %v3565, %v3565
          %v3598 = vpack.c.bf16 %v3566, %v3566
          %v3599 = vpack.c.bf16 %v3567, %v3567
          %v3600 = vpack.c.bf16 %v3568, %v3568
          %v3601 = vpack.c.bf16 %v3569, %v3569
          %v3602 = vpack.c.bf16 %v3570, %v3570
          %v3603 = vpack.c.bf16 %v3571, %v3571
          %v3604 = vpack.c.bf16 %v3572, %v3572
          %v3605 = vld [vmem:[#allocation8] sm:$0xf]
          %v3606 = vld [vmem:[#allocation8 + $0x4] sm:$0xf]
          %v3607 = vld [vmem:[#allocation8 + $0x8] sm:$0xf]
          %v3608 = vld [vmem:[#allocation8 + $0xc] sm:$0xf]
          %v3609 = vld [vmem:[#allocation8 + $0x10] sm:$0xf]
          %v3610 = vld [vmem:[#allocation8 + $0x14] sm:$0xf]
          %v3611 = vld [vmem:[#allocation8 + $0x18] sm:$0xf]
          %v3612 = vld [vmem:[#allocation8 + $0x1c] sm:$0xf]
          %v3613 = vld [vmem:[#allocation8 + $0x20] sm:$0xf]
          %v3614 = vld [vmem:[#allocation8 + $0x24] sm:$0xf]
          %v3615 = vld [vmem:[#allocation8 + $0x28] sm:$0xf]
          %v3616 = vld [vmem:[#allocation8 + $0x2c] sm:$0xf]
          %v3617 = vld [vmem:[#allocation8 + $0x30] sm:$0xf]
          %v3618 = vld [vmem:[#allocation8 + $0x34] sm:$0xf]
          %v3619 = vld [vmem:[#allocation8 + $0x38] sm:$0xf]
          %v3620 = vld [vmem:[#allocation8 + $0x3c] sm:$0xf]
          %v3621 = vld [vmem:[%s5] sm:$0x1]
          %v3623 = vperm.slane %v3621, 0
          %v3657 = vunpack.c.l.b16 %v3573
          %v3658 = vunpack.c.l.b16 %v3574
          %v3659 = vunpack.c.l.b16 %v3575
          %v3660 = vunpack.c.l.b16 %v3576
          %v3661 = vunpack.c.l.b16 %v3577
          %v3662 = vunpack.c.l.b16 %v3578
          %v3663 = vunpack.c.l.b16 %v3579
          %v3664 = vunpack.c.l.b16 %v3580
          %v3665 = vunpack.c.l.b16 %v3581
          %v3666 = vunpack.c.l.b16 %v3582
          %v3667 = vunpack.c.l.b16 %v3583
          %v3668 = vunpack.c.l.b16 %v3584
          %v3669 = vunpack.c.l.b16 %v3585
          %v3670 = vunpack.c.l.b16 %v3586
          %v3671 = vunpack.c.l.b16 %v3587
          %v3672 = vunpack.c.l.b16 %v3588
          %v3673 = vunpack.c.l.b16 %v3589
          %v3674 = vunpack.c.l.b16 %v3590
          %v3675 = vunpack.c.l.b16 %v3591
          %v3676 = vunpack.c.l.b16 %v3592
          %v3677 = vunpack.c.l.b16 %v3593
          %v3678 = vunpack.c.l.b16 %v3594
          %v3679 = vunpack.c.l.b16 %v3595
          %v3680 = vunpack.c.l.b16 %v3596
          %v3681 = vunpack.c.l.b16 %v3597
          %v3682 = vunpack.c.l.b16 %v3598
          %v3683 = vunpack.c.l.b16 %v3599
          %v3684 = vunpack.c.l.b16 %v3600
          %v3685 = vunpack.c.l.b16 %v3601
          %v3686 = vunpack.c.l.b16 %v3602
          %v3687 = vunpack.c.l.b16 %v3603
          %v3688 = vunpack.c.l.b16 %v3604
          %v3689 = vpack.c.b16 %v3658, %v3657
          %v3690 = vpack.c.b16 %v3660, %v3659
          %v3691 = vpack.c.b16 %v3662, %v3661
          %v3692 = vpack.c.b16 %v3664, %v3663
          %v3693 = vpack.c.b16 %v3666, %v3665
          %v3694 = vpack.c.b16 %v3668, %v3667
          %v3695 = vpack.c.b16 %v3670, %v3669
          %v3696 = vpack.c.b16 %v3672, %v3671
          %v3697 = vpack.c.b16 %v3674, %v3673
          %v3698 = vpack.c.b16 %v3676, %v3675
          %v3699 = vpack.c.b16 %v3678, %v3677
          %v3700 = vpack.c.b16 %v3680, %v3679
          %v3701 = vpack.c.b16 %v3682, %v3681
          %v3702 = vpack.c.b16 %v3684, %v3683
          %v3703 = vpack.c.b16 %v3686, %v3685
          %v3704 = vpack.c.b16 %v3688, %v3687
          %v3737 = vunpack.c.l.b16 %v3605
          %v3738 = vunpack.c.l.b16 %v3606
          %v3739 = vunpack.c.l.b16 %v3607
          %v3740 = vunpack.c.l.b16 %v3608
          %v3741 = vunpack.c.l.b16 %v3609
          %v3742 = vunpack.c.l.b16 %v3610
          %v3743 = vunpack.c.l.b16 %v3611
          %v3744 = vunpack.c.l.b16 %v3612
          %v3745 = vunpack.c.l.b16 %v3613
          %v3746 = vunpack.c.l.b16 %v3614
          %v3747 = vunpack.c.l.b16 %v3615
          %v3748 = vunpack.c.l.b16 %v3616
          %v3749 = vunpack.c.l.b16 %v3617
          %v3750 = vunpack.c.l.b16 %v3618
          %v3751 = vunpack.c.l.b16 %v3619
          %v3752 = vunpack.c.l.b16 %v3620
          %v3753 = vpack.c.b16 %v3738, %v3737
          %v3754 = vpack.c.b16 %v3740, %v3739
          %v3755 = vpack.c.b16 %v3742, %v3741
          %v3756 = vpack.c.b16 %v3744, %v3743
          %v3757 = vpack.c.b16 %v3746, %v3745
          %v3758 = vpack.c.b16 %v3748, %v3747
          %v3759 = vpack.c.b16 %v3750, %v3749
          %v3760 = vpack.c.b16 %v3752, %v3751
          %3769 = vmatpush.bf16.msra.mxu0 %v3760
          %3770 = vmatpush.bf16.msra.mxu0 %v3759
          %3771 = vmatpush.bf16.msra.mxu0 %v3758
          %3772 = vmatpush.bf16.msra.mxu0 %v3757
          %3773 = vmatpush.bf16.msra.mxu0 %v3756
          %3774 = vmatpush.bf16.msra.mxu0 %v3755
          %3775 = vmatpush.bf16.msra.mxu0 %v3754
          %3776 = vmatpush.bf16.msra.mxu0 %v3753
          %3777 = vmatmul.bf16.gmra.mxu0 %v3689
          %v3778 = vpop.f32.mrf.mxu0
          %v3779 = vadd.f32 %v3623, %v3778
          %v3780 = vpop.f32.mrf.mxu0
          %v3781 = vadd.f32 %v3623, %v3780
          %3782 = vmatmul.bf16.gmra.mxu0 %v3690
          %v3783 = vpop.f32.mrf.mxu0
          %v3784 = vadd.f32 %v3623, %v3783
          %v3785 = vpop.f32.mrf.mxu0
          %v3786 = vadd.f32 %v3623, %v3785
          %3787 = vmatmul.bf16.gmra.mxu0 %v3691
          %v3788 = vpop.f32.mrf.mxu0
          %v3789 = vadd.f32 %v3623, %v3788
          %v3790 = vpop.f32.mrf.mxu0
          %v3791 = vadd.f32 %v3623, %v3790
          %3792 = vmatmul.bf16.gmra.mxu0 %v3692
          %v3793 = vpop.f32.mrf.mxu0
          %v3794 = vadd.f32 %v3623, %v3793
          %v3795 = vpop.f32.mrf.mxu0
          %v3796 = vadd.f32 %v3623, %v3795
          %3797 = vmatmul.bf16.gmra.mxu0 %v3693
          %v3798 = vpop.f32.mrf.mxu0
          %v3799 = vadd.f32 %v3623, %v3798
          %v3800 = vpop.f32.mrf.mxu0
          %v3801 = vadd.f32 %v3623, %v3800
          %3802 = vmatmul.bf16.gmra.mxu0 %v3694
          %v3803 = vpop.f32.mrf.mxu0
          %v3804 = vadd.f32 %v3623, %v3803
          %v3805 = vpop.f32.mrf.mxu0
          %v3806 = vadd.f32 %v3623, %v3805
          %3807 = vmatmul.bf16.gmra.mxu0 %v3695
          %v3808 = vpop.f32.mrf.mxu0
          %v3809 = vadd.f32 %v3623, %v3808
          %v3810 = vpop.f32.mrf.mxu0
          %v3811 = vadd.f32 %v3623, %v3810
          %3812 = vmatmul.bf16.gmra.mxu0 %v3696
          %v3813 = vpop.f32.mrf.mxu0
          %v3814 = vadd.f32 %v3623, %v3813
          %v3815 = vpop.f32.mrf.mxu0
          %v3816 = vadd.f32 %v3623, %v3815
          %3817 = vmatmul.bf16.gmra.mxu0 %v3697
          %v3818 = vpop.f32.mrf.mxu0
          %v3819 = vadd.f32 %v3623, %v3818
          %v3820 = vpop.f32.mrf.mxu0
          %v3821 = vadd.f32 %v3623, %v3820
          %3822 = vmatmul.bf16.gmra.mxu0 %v3698
          %v3823 = vpop.f32.mrf.mxu0
          %v3824 = vadd.f32 %v3623, %v3823
          %v3825 = vpop.f32.mrf.mxu0
          %v3826 = vadd.f32 %v3623, %v3825
          %3827 = vmatmul.bf16.gmra.mxu0 %v3699
          %v3828 = vpop.f32.mrf.mxu0
          %v3829 = vadd.f32 %v3623, %v3828
          %v3830 = vpop.f32.mrf.mxu0
          %v3831 = vadd.f32 %v3623, %v3830
          %3832 = vmatmul.bf16.gmra.mxu0 %v3700
          %v3833 = vpop.f32.mrf.mxu0
          %v3834 = vadd.f32 %v3623, %v3833
          %v3835 = vpop.f32.mrf.mxu0
          %v3836 = vadd.f32 %v3623, %v3835
          %3837 = vmatmul.bf16.gmra.mxu0 %v3701
          %v3838 = vpop.f32.mrf.mxu0
          %v3839 = vadd.f32 %v3623, %v3838
          %v3840 = vpop.f32.mrf.mxu0
          %v3841 = vadd.f32 %v3623, %v3840
          %3842 = vmatmul.bf16.gmra.mxu0 %v3702
          %v3843 = vpop.f32.mrf.mxu0
          %v3844 = vadd.f32 %v3623, %v3843
          %v3845 = vpop.f32.mrf.mxu0
          %v3846 = vadd.f32 %v3623, %v3845
          %3847 = vmatmul.bf16.gmra.mxu0 %v3703
          %v3848 = vpop.f32.mrf.mxu0
          %v3849 = vadd.f32 %v3623, %v3848
          %v3850 = vpop.f32.mrf.mxu0
          %v3851 = vadd.f32 %v3623, %v3850
          %3852 = vmatmul.bf16.gmra.mxu0 %v3704
          %v3853 = vpop.f32.mrf.mxu0
          %v3854 = vadd.f32 %v3623, %v3853
          %v3855 = vpop.f32.mrf.mxu0
          %v3856 = vadd.f32 %v3623, %v3855
          %3857 = vdwg.mxu0
          %v3858 = vpack.c.bf16 %v3779, %v3779
          %v3859 = vpack.c.bf16 %v3781, %v3781
          %v3860 = vpack.c.bf16 %v3784, %v3784
          %v3861 = vpack.c.bf16 %v3786, %v3786
          %v3862 = vpack.c.bf16 %v3789, %v3789
          %v3863 = vpack.c.bf16 %v3791, %v3791
          %v3864 = vpack.c.bf16 %v3794, %v3794
          %v3865 = vpack.c.bf16 %v3796, %v3796
          %v3866 = vpack.c.bf16 %v3799, %v3799
          %v3867 = vpack.c.bf16 %v3801, %v3801
          %v3868 = vpack.c.bf16 %v3804, %v3804
          %v3869 = vpack.c.bf16 %v3806, %v3806
          %v3870 = vpack.c.bf16 %v3809, %v3809
          %v3871 = vpack.c.bf16 %v3811, %v3811
          %v3872 = vpack.c.bf16 %v3814, %v3814
          %v3873 = vpack.c.bf16 %v3816, %v3816
          %v3874 = vpack.c.bf16 %v3819, %v3819
          %v3875 = vpack.c.bf16 %v3821, %v3821
          %v3876 = vpack.c.bf16 %v3824, %v3824
          %v3877 = vpack.c.bf16 %v3826, %v3826
          %v3878 = vpack.c.bf16 %v3829, %v3829
          %v3879 = vpack.c.bf16 %v3831, %v3831
          %v3880 = vpack.c.bf16 %v3834, %v3834
          %v3881 = vpack.c.bf16 %v3836, %v3836
          %v3882 = vpack.c.bf16 %v3839, %v3839
          %v3883 = vpack.c.bf16 %v3841, %v3841
          %v3884 = vpack.c.bf16 %v3844, %v3844
          %v3885 = vpack.c.bf16 %v3846, %v3846
          %v3886 = vpack.c.bf16 %v3849, %v3849
          %v3887 = vpack.c.bf16 %v3851, %v3851
          %v3888 = vpack.c.bf16 %v3854, %v3854
          %v3889 = vpack.c.bf16 %v3856, %v3856
          %3890 = vst [vmem:[%s382] sm:$0xf] %v3858
          %3891 = vst [vmem:[%s382 + $0x4] sm:$0xf] %v3859
          %3892 = vst [vmem:[%s382 + $0x8] sm:$0xf] %v3860
          %3893 = vst [vmem:[%s382 + $0xc] sm:$0xf] %v3861
          %3894 = vst [vmem:[%s382 + $0x10] sm:$0xf] %v3862
          %3895 = vst [vmem:[%s382 + $0x14] sm:$0xf] %v3863
          %3896 = vst [vmem:[%s382 + $0x18] sm:$0xf] %v3864
          %3897 = vst [vmem:[%s382 + $0x1c] sm:$0xf] %v3865
          %3898 = vst [vmem:[%s382 + $0x20] sm:$0xf] %v3866
          %3899 = vst [vmem:[%s382 + $0x24] sm:$0xf] %v3867
          %3900 = vst [vmem:[%s382 + $0x28] sm:$0xf] %v3868
          %3901 = vst [vmem:[%s382 + $0x2c] sm:$0xf] %v3869
          %3902 = vst [vmem:[%s382 + $0x30] sm:$0xf] %v3870
          %3903 = vst [vmem:[%s382 + $0x34] sm:$0xf] %v3871
          %3904 = vst [vmem:[%s382 + $0x38] sm:$0xf] %v3872
          %3905 = vst [vmem:[%s382 + $0x3c] sm:$0xf] %v3873
          %3906 = vst [vmem:[%s382 + $0x40] sm:$0xf] %v3874
          %3907 = vst [vmem:[%s382 + $0x44] sm:$0xf] %v3875
          %3908 = vst [vmem:[%s382 + $0x48] sm:$0xf] %v3876
          %3909 = vst [vmem:[%s382 + $0x4c] sm:$0xf] %v3877
          %3910 = vst [vmem:[%s382 + $0x50] sm:$0xf] %v3878
          %3911 = vst [vmem:[%s382 + $0x54] sm:$0xf] %v3879
          %3912 = vst [vmem:[%s382 + $0x58] sm:$0xf] %v3880
          %3913 = vst [vmem:[%s382 + $0x5c] sm:$0xf] %v3881
          %3914 = vst [vmem:[%s382 + $0x60] sm:$0xf] %v3882
          %3915 = vst [vmem:[%s382 + $0x64] sm:$0xf] %v3883
          %3916 = vst [vmem:[%s382 + $0x68] sm:$0xf] %v3884
          %3917 = vst [vmem:[%s382 + $0x6c] sm:$0xf] %v3885
          %3918 = vst [vmem:[%s382 + $0x70] sm:$0xf] %v3886
          %3919 = vst [vmem:[%s382 + $0x74] sm:$0xf] %v3887
          %3920 = vst [vmem:[%s382 + $0x78] sm:$0xf] %v3888
          %3921 = vst [vmem:[%s382 + $0x7c] sm:$0xf] %v3889
        $region64: #{tpu_custom_call.1} parent=43 // pred_fallthru
          _
        %s3922 = sand.u32 %s195, 1
        %s3923 = scalar_lea.sflag [#allocation5], %s3922
        %s3924 = sand.u32 %s195, 1
        %s3925 = smul.addr %s3924, 128
        %s3926 = scalar_lea.vmem [#allocation9], %s3925
        // Predicated region
        $region65: #{tpu_custom_call.1} parent=43 // pred_check
          %p3927 = pneg %p205
        $region66: #{tpu_custom_call.1} parent=43 // pred_check_branch
          %3929 = sbr.rel (%p3927) target = $region68
        $region67: #{tpu_custom_call.1} parent=43 // pred_region
          %3931 = vsyncadd %s3923, 0
          %s3932 = smul.addr %s32, 32
          %s3933 = smul.addr %s31, 32
          %s3934 = sadd.s32 %s3932, %s3933
          %s3935 = smul.addr %s3934, 4
          %s3936 = scalar_lea.hbm %s6, %s3935
          %s3937 = sshll.u32 %s3926, 4
          %s3938 = int_to_ptr.vmem [resolvable:$true] %s3937
          %s3939 = sshll.u32 %s3936, 4
          %s3940 = int_to_ptr.hbm [resolvable:$true] %s3939
          %3945 = dma.vmem_to_hbm [thread:$0]  %s3938, 2048, %s3940, %s3923, 64, 64, 4
        $region68: #{tpu_custom_call.1} parent=43 // pred_fallthru
          _
      $region44: #{tpu_custom_call.1} parent=5 // pred_fallthru
        _
      %p3946 = scmp.le.s32.totalorder 2, %s21
      // Predicated region
      $region69: #{tpu_custom_call.1} parent=5 // pred_check
        %p3947 = pneg %p3946
      $region70: #{tpu_custom_call.1} parent=5 // pred_check_branch
        %3949 = sbr.rel (%p3947) target = $region72
      $region71: #{tpu_custom_call.1} parent=5 // pred_region
        %s3950 = ssub.s32 %s21, 2
        // Predicated region
        $region73: #{tpu_custom_call.1} parent=71 // pred_check
          %p3951 = pneg %p211
        $region74: #{tpu_custom_call.1} parent=71 // pred_check_branch
          %3953 = sbr.rel (%p3951) target = $region76
        $region75: #{tpu_custom_call.1} parent=71 // pred_region
          %s3954 = sand.u32 %s196, 1
          %s3955 = scalar_lea.sflag [#allocation5], %s3954
          %s3956 = sand.u32 %s196, 1
          %s3957 = smul.addr %s3956, 128
          %s3958 = scalar_lea.vmem [#allocation9], %s3957
          %3960 = dma.done %s3955, 2048
        $region76: #{tpu_custom_call.1} parent=71 // pred_fallthru
          _
      $region72: #{tpu_custom_call.1} parent=5 // pred_fallthru
        _
    $region6: #{tpu_custom_call.1} parent=1 // loop_footer
      %s25 = sadd.s32 1, %s21
    $region7: #{tpu_custom_call.1} parent=1 // loop_footer_branch
      %20 = sbr.rel target = $region3
    $region8: #{tpu_custom_call.1} parent=1 // loop_exit
      _
    %3961 = vsyncpa [#allocation4], 1
    %s3962 = scalar_lea.sflag [#allocation4], 1
    %3963 = vsyncpa %s3962, 1
    %3964 = vsyncpa [#allocation7], 1
    %s3965 = scalar_lea.sflag [#allocation7], 1
    %3966 = vsyncpa %s3965, 1
    %3967 = vsyncpa [#allocation5], 1
    %s3968 = scalar_lea.sflag [#allocation5], 1
    %3969 = vsyncpa %s3968, 1

</llo_original>
